<compile_context>
chip_gen: v7x
topology: tpu7x:2x2x1
jax: 0.10.0
libtpu: 0.0.40
codegen_flags: <defaults>
</compile_context>

<pallas_src>
import functools
import math

import jax
import jax.numpy as jnp
import numpy as np
from jax.experimental import pallas as pl
from jax.experimental.pallas import tpu as pltpu


# ---------------------------------------------------------------------------
# In-kernel building blocks (operate on already-loaded jnp arrays).
# ---------------------------------------------------------------------------
def _stacked_conv(h, w_stk, tap_rows, dilation, masks):
    """Dilated K=3 'same' conv(s) with the taps stacked on the matmul M dim.

    h:        (C_in, BL) f32 slab, examples contiguous along the lane axis.
    w_stk:    (3*tap_rows, C_in) f32; rows [t*tap_rows, (t+1)*tap_rows) hold
              tap t's output channels, zero-padded to a sublane-aligned group.
    dilation: tap offsets are (-d, 0, +d).
    masks:    dict shift -> (1, BL) bool; True where the shifted read stays
              inside the example (False lanes reproduce the zero 'same' pad).
    Returns (tap_rows, BL) f32 conv output (bias not added).
    """
    BL = h.shape[-1]
    # One MXU matmul for all taps: RHS streamed once, weights latched once.
    p = jnp.dot(w_stk, h, preferred_element_type=jnp.float32)
    acc = None
    for t in range(3):
        s = (t - 1) * dilation
        pt = p[t * tap_rows:(t + 1) * tap_rows]          # sublane-aligned slice
        if s != 0:
            # Lane j of the rolled product depends only on h[:, j + s], so
            # masking the (C_out, BL) product == masking the shifted input.
            pt = jnp.where(masks[s], pltpu.roll(pt, shift=(-s) % BL, axis=1),
                           0.0)
        acc = pt if acc is None else acc + pt
    return acc


def _segment_sum_lanes(y, L):
    """z[:, j] = sum_{t=0}^{L-1} y[:, (j+t) % BL]  (binary roll+add tree).

    For example-major lanes (example n occupies [n*L, (n+1)*L)), lane n*L of
    z holds example n's full within-example sum (no cross-example wrap there).
    """
    BL = y.shape[-1]
    total, win, w, off, rem = None, y, 1, 0, L
    while rem:
        if rem & 1:
            part = win if off == 0 else pltpu.roll(win, shift=(-off) % BL,
                                                   axis=1)
            total = part if total is None else total + part
            off += w
        rem >>= 1
        if rem:
            win = win + pltpu.roll(win, shift=(-w) % BL, axis=1)
            w *= 2
    return total


def tcn_kernel(x_ref, wf1_ref, w1s_ref, w2s_ref, bias_ref, fcw_ref, o_ref, *,
               L):
    x = x_ref[...]                                       # (20, B*L) f32
    BL = x.shape[-1]

    # Hoisted per-lane position and boundary masks for every shift used.
    jpos = jax.lax.broadcasted_iota(jnp.int32, (1, BL), 1) % L
    masks = {}
    for d in (1, 2, 4, 8):
        masks[d] = jpos < (L - d)                        # reads position j + d
        masks[-d] = jpos >= d                            # reads position j - d

    bias = bias_ref[...]                                 # (10, 8, 1)

    def bcol(i, c):                                      # (c, 1) bias column
        return bias[i, :c, :]

    # ---- resblock1 (20 -> 3, d=1): conv1 and conv3 fused in one matmul ----
    acc = _stacked_conv(x, wf1_ref[...], 16, 1, masks)   # (16, BL)
    c1 = jnp.maximum(acc[0:3] + bcol(0, 3), 0.0)         # relu(conv1)
    shortcut = acc[8:11] + bcol(2, 3)                    # conv3 projection
    r = _stacked_conv(c1, w2s_ref[0], 8, 1, masks)[0:1] + bcol(1, 1)   # conv2
    h = jnp.maximum(r + shortcut, 0.0)                   # (3, BL)

    # ---- resblock2/3/4 (3 -> 3, identity shortcut), dilations 2, 4, 8 ----
    for blk, d in enumerate((2, 4, 8)):
        c1 = (_stacked_conv(h, w1s_ref[blk], 8, d, masks)[0:3]
              + bcol(3 + 2 * blk, 3))
        c1 = jnp.maximum(c1, 0.0)
        r = (_stacked_conv(c1, w2s_ref[blk + 1], 8, d, masks)[0:1]
             + bcol(4 + 2 * blk, 1))
        h = jnp.maximum(r + h, 0.0)

    # ---- Linear(3,2) then AdaptiveAvgPool1d(1) (they commute): tiny matmul
    # plus a log2(L) roll+add tree — no (B*L x B) pooling matmul.  Lane n*L of
    # the lane-dense (2, BL) output tile holds example n's answer.
    y = jnp.dot(fcw_ref[...], h, preferred_element_type=jnp.float32)  # (2, BL)
    o_ref[...] = _segment_sum_lanes(y, L) * (1.0 / L) + bcol(9, 2)


# ---------------------------------------------------------------------------
# Wrapper
# ---------------------------------------------------------------------------
def _const_index_map(ndim):
    return lambda i: (0,) * ndim


@functools.partial(jax.jit, static_argnames=("block_b",))
def tcn_forward(x, params, *, block_b=512):
    """x: (N, 20, L) f32, params from pack_params -> (N, 2) f32.

    For v7x, prefer block_b <= N/2 so the grid has >= 2 blocks and the
    "parallel" batch axis can occupy both TensorCores.
    """
    N, C, L = x.shape
    # Each block's lane extent is B*L and must be 128-aligned.
    align = 128 // math.gcd(L, 128)
    B = max(align, (block_b // align) * align)
    n_blocks = -(-N // B)
    Np = n_blocks * B
    if Np != N:                                          # pad batch to block
        x = jnp.concatenate([x, jnp.zeros((Np - N, C, L), x.dtype)], axis=0)
    BL = B * L

    # Lane-dense activation slab: (C, Np*L), example-major along lanes.
    # TODO(synk): accept a channel-major (C, N, L) producer layout so this
    # host-side relayout pass over x can be skipped.
    xf = jnp.transpose(x, (1, 0, 2)).reshape(C, Np * L).astype(jnp.float32)

    weights = (params["wf1"], params["w1s"], params["w2s"], params["bias"],
               params["fcw"])
    in_specs = [pl.BlockSpec((C, BL), lambda i: (0, i))]
    in_specs += [pl.BlockSpec(w.shape, _const_index_map(w.ndim))
                 for w in weights]

    out = pl.pallas_call(
        functools.partial(tcn_kernel, L=L),
        out_shape=jax.ShapeDtypeStruct((2, Np * L), jnp.float32),
        grid=(n_blocks,),
        in_specs=in_specs,
        out_specs=pl.BlockSpec((2, BL), lambda i: (0, i)),
        compiler_params=pltpu.CompilerParams(
            dimension_semantics=("parallel",),
            vmem_limit_bytes=32 * 1024 * 1024),
    )(xf, *weights)
    # Example n's pooled/fc result sits at column n*L of the (2, Np*L) output.
    return out[:, ::L][:, :N].T                          # (N, 2)


# ---------------------------------------------------------------------------
# Deterministic parameter init (PyTorch Conv1d/Linear shapes) + packing.
# ---------------------------------------------------------------------------
def _conv_init(key, c_in, c_out, k):
    kw, kb = jax.random.split(key)
    bound = 1.0 / np.sqrt(c_in * k)
    w = jax.random.uniform(kw, (c_out, c_in, k), jnp.float32, -bound, bound)
    b = jax.random.uniform(kb, (c_out,), jnp.float32, -bound, bound)
    return w, b


def init_params(key):
    ks = jax.random.split(key, 12)
    raw = {}
    raw["w11"], raw["b11"] = _conv_init(ks[0], 20, 3, 3)   # rb1.conv1
    raw["w12"], raw["b12"] = _conv_init(ks[1], 3, 1, 3)    # rb1.conv2
    raw["w13"], raw["b13"] = _conv_init(ks[2], 20, 3, 3)   # rb1.conv3 (proj)
    raw["w21"], raw["b21"] = _conv_init(ks[3], 3, 3, 3)    # rb2.conv1
    raw["w22"], raw["b22"] = _conv_init(ks[4], 3, 1, 3)    # rb2.conv2
    raw["w31"], raw["b31"] = _conv_init(ks[5], 3, 3, 3)    # rb3.conv1
    raw["w32"], raw["b32"] = _conv_init(ks[6], 3, 1, 3)    # rb3.conv2
    raw["w41"], raw["b41"] = _conv_init(ks[7], 3, 3, 3)    # rb4.conv1
    raw["w42"], raw["b42"] = _conv_init(ks[8], 3, 1, 3)    # rb4.conv2
    bound = 1.0 / np.sqrt(3)
    raw["fcw"] = jax.random.uniform(ks[9], (2, 3), jnp.float32, -bound, bound)
    raw["fcb"] = jax.random.uniform(ks[10], (2,), jnp.float32, -bound, bound)
    # NOTE: rb2/3/4.conv3 exist in the PyTorch module but are never used in
    # forward (in_channels == out_channels), so they are not materialised.
    return raw


def _stack_taps(w, tap_rows, row_off=0, base=None):
    """w: (C_out, C_in, K) -> (K*tap_rows, C_in); tap t's channels at rows
    [t*tap_rows + row_off, t*tap_rows + row_off + C_out)."""
    c_out, c_in, k = w.shape
    out = base if base is not None else jnp.zeros((k * tap_rows, c_in),
                                                  jnp.float32)
    for t in range(k):
        r0 = t * tap_rows + row_off
        out = out.at[r0:r0 + c_out, :].set(w[:, :, t])
    return out


def pack_params(raw):
    """Consolidate the 20 tiny tensors into 5 packed, tap-stacked inputs."""
    # rb1 conv1 + conv3 fused: tap t -> rows 16t..16t+2 (conv1), 16t+8..16t+10
    # (conv3) of a (48, 20) stacked weight.
    wf1 = _stack_taps(raw["w11"], 16, 0)
    wf1 = _stack_taps(raw["w13"], 16, 8, base=wf1)                  # (48, 20)
    # rb2/3/4 conv1: (3, 24, 3); conv2 of rb1..4: (4, 24, 3).
    w1s = jnp.stack([_stack_taps(raw[n], 8) for n in ("w21", "w31", "w41")])
    w2s = jnp.stack([_stack_taps(raw[n], 8)
                     for n in ("w12", "w22", "w32", "w42")])
    bias = jnp.zeros((10, 8, 1), jnp.float32)
    for i, name in enumerate(["b11", "b12", "b13", "b21", "b22",
                              "b31", "b32", "b41", "b42", "fcb"]):
        v = raw[name]
        bias = bias.at[i, :v.shape[0], 0].set(v)
    return dict(wf1=wf1, w1s=w1s, w2s=w2s, bias=bias, fcw=raw["fcw"])


# ---------------------------------------------------------------------------
# Pure-JAX reference (lax.conv_general_dilated) for correctness check.
# ---------------------------------------------------------------------------
def _conv1d_ref(x, w, b, d):
    k = w.shape[-1]
    pad = d * (k - 1) // 2
    y = jax.lax.conv_general_dilated(
        x, w, window_strides=(1,), padding=[(pad, pad)], rhs_dilation=(d,),
        dimension_numbers=("NCH", "OIH", "NCH"))
    return y + b[None, :, None]


def _resblock_ref(x, w1, b1, w2, b2, d, w3=None, b3=None, out_c=3):
    r = jax.nn.relu(_conv1d_ref(x, w1, b1, d))
    r = _conv1d_ref(r, w2, b2, d)
    shortcut = x if x.shape[1] == out_c else _conv1d_ref(x, w3, b3, 1)
    return jax.nn.relu(r + shortcut)


def tcn_ref(x, p):
    h = _resblock_ref(x, p["w11"], p["b11"], p["w12"], p["b12"], 1,
                      p["w13"], p["b13"])
    h = _resblock_ref(h, p["w21"], p["b21"], p["w22"], p["b22"], 2)
    h = _resblock_ref(h, p["w31"], p["b31"], p["w32"], p["b32"], 4)
    h = _resblock_ref(h, p["w41"], p["b41"], p["w42"], p["b42"], 8)
    pooled = jnp.mean(h, axis=-1)                        # (N, 3)
    return pooled @ p["fcw"].T + p["fcb"]                # (N, 2)


if __name__ == "__main__":
    key = jax.random.PRNGKey(0)
    kx, kp = jax.random.split(key)

    # Small shapes; N is deliberately not a multiple of the batch block so the
    # padding path is exercised, and block_b=64 gives a 4-block "parallel"
    # grid (keeps both v7x TensorCores busy).
    N, C, L = 200, 20, 16
    x = jax.random.normal(kx, (N, C, L), dtype=jnp.float32)

    raw = init_params(kp)
    params = pack_params(raw)

    out = jax.block_until_ready(tcn_forward(x, params, block_b=64))
    ref = jax.block_until_ready(tcn_ref(x, raw))

    np.testing.assert_allclose(np.asarray(out), np.asarray(ref),
                               rtol=1e-3, atol=1e-4)
    assert out.shape == (N, 2)
    print("KERNEL_OK")
</pallas_src>

<mosaic_0001>
module attributes {stable_mosaic.version = 11 : i64} {
  func.func @tcn_kernel(%arg0: i32, %arg1: memref<20x1024xf32, #tpu.memory_space<vmem>>, %arg2: memref<48x20xf32, #tpu.memory_space<vmem>>, %arg3: memref<3x24x3xf32, #tpu.memory_space<vmem>>, %arg4: memref<4x24x3xf32, #tpu.memory_space<vmem>>, %arg5: memref<10x8x1xf32, #tpu.memory_space<vmem>>, %arg6: memref<2x3xf32, #tpu.memory_space<vmem>>, %arg7: memref<2x1024xf32, #tpu.memory_space<vmem>>) attributes {dimension_semantics = [#tpu.dimension_semantics<parallel>], iteration_bounds = array<i64: 4>, scalar_prefetch = 0 : i64, scratch_operands = 0 : i64, tpu.core_type = #tpu.core_type<tc>, window_params = [{transform_indices = @transform_0, window_bounds = array<i64: 20, 1024>}, {pipeline_mode = #tpu.pipeline_mode<synchronous>, transform_indices = @transform_1, window_bounds = array<i64: 48, 20>}, {pipeline_mode = #tpu.pipeline_mode<synchronous>, transform_indices = @transform_2, window_bounds = array<i64: 3, 24, 3>}, {pipeline_mode = #tpu.pipeline_mode<synchronous>, transform_indices = @transform_3, window_bounds = array<i64: 4, 24, 3>}, {pipeline_mode = #tpu.pipeline_mode<synchronous>, transform_indices = @transform_4, window_bounds = array<i64: 10, 8, 1>}, {pipeline_mode = #tpu.pipeline_mode<synchronous>, transform_indices = @transform_5, window_bounds = array<i64: 2, 3>}, {transform_indices = @transform_6, window_bounds = array<i64: 2, 1024>}]} {
    %c0 = arith.constant 0 : index
    %c0_0 = arith.constant 0 : index
    %0 = vector.load %arg1[%c0, %c0_0] : memref<20x1024xf32, #tpu.memory_space<vmem>>, vector<20x1024xf32>
    %1 = tpu.iota {dimensions = array<i32: 1>} : vector<1x1024xi32>
    %c16_i32 = arith.constant 16 : i32
    %c0_i32 = arith.constant 0 : i32
    %2 = arith.cmpi eq, %c16_i32, %c0_i32 : i32
    %c1_i32 = arith.constant 1 : i32
    %3 = arith.select %2, %c1_i32, %c16_i32 : i32
    %4 = vector.broadcast %3 : i32 to vector<1x1024xi32>
    %5 = arith.remsi %1, %4 : vector<1x1024xi32>
    %c0_i32_1 = arith.constant 0 : i32
    %6 = vector.broadcast %c0_i32_1 : i32 to vector<1x1024xi32>
    %7 = arith.cmpi ne, %5, %6 : vector<1x1024xi32>
    %c0_i32_2 = arith.constant 0 : i32
    %8 = vector.broadcast %c0_i32_2 : i32 to vector<1x1024xi32>
    %9 = arith.cmpi slt, %5, %8 : vector<1x1024xi32>
    %c0_i32_3 = arith.constant 0 : i32
    %10 = arith.cmpi slt, %3, %c0_i32_3 : i32
    %11 = vector.broadcast %10 : i1 to vector<1x1024xi1>
    %12 = vector.broadcast %11 : vector<1x1024xi1> to vector<1x1024xi1>
    %13 = arith.xori %9, %12 : vector<1x1024xi1>
    %14 = arith.andi %13, %7 : vector<1x1024xi1>
    %15 = vector.broadcast %3 : i32 to vector<1x1024xi32>
    %16 = arith.addi %5, %15 : vector<1x1024xi32>
    %17 = arith.select %14, %16, %5 : vector<1x1024xi1>, vector<1x1024xi32>
    %c15_i32 = arith.constant 15 : i32
    %18 = vector.broadcast %c15_i32 : i32 to vector<1x1024xi32>
    %19 = arith.cmpi slt, %17, %18 : vector<1x1024xi32>
    %c1_i32_4 = arith.constant 1 : i32
    %20 = vector.broadcast %c1_i32_4 : i32 to vector<1x1024xi32>
    %21 = arith.cmpi sge, %17, %20 : vector<1x1024xi32>
    %c14_i32 = arith.constant 14 : i32
    %22 = vector.broadcast %c14_i32 : i32 to vector<1x1024xi32>
    %23 = arith.cmpi slt, %17, %22 : vector<1x1024xi32>
    %c2_i32 = arith.constant 2 : i32
    %24 = vector.broadcast %c2_i32 : i32 to vector<1x1024xi32>
    %25 = arith.cmpi sge, %17, %24 : vector<1x1024xi32>
    %c12_i32 = arith.constant 12 : i32
    %26 = vector.broadcast %c12_i32 : i32 to vector<1x1024xi32>
    %27 = arith.cmpi slt, %17, %26 : vector<1x1024xi32>
    %c4_i32 = arith.constant 4 : i32
    %28 = vector.broadcast %c4_i32 : i32 to vector<1x1024xi32>
    %29 = arith.cmpi sge, %17, %28 : vector<1x1024xi32>
    %c8_i32 = arith.constant 8 : i32
    %30 = vector.broadcast %c8_i32 : i32 to vector<1x1024xi32>
    %31 = arith.cmpi slt, %17, %30 : vector<1x1024xi32>
    %c8_i32_5 = arith.constant 8 : i32
    %32 = vector.broadcast %c8_i32_5 : i32 to vector<1x1024xi32>
    %33 = arith.cmpi sge, %17, %32 : vector<1x1024xi32>
    %c0_6 = arith.constant 0 : index
    %c0_7 = arith.constant 0 : index
    %c0_8 = arith.constant 0 : index
    %34 = vector.load %arg5[%c0_6, %c0_7, %c0_8] : memref<10x8x1xf32, #tpu.memory_space<vmem>>, vector<10x8x1xf32>
    %c0_9 = arith.constant 0 : index
    %c0_10 = arith.constant 0 : index
    %35 = vector.load %arg2[%c0_9, %c0_10] : memref<48x20xf32, #tpu.memory_space<vmem>>, vector<48x20xf32>
    %cst = arith.constant dense<0.000000e+00> : vector<48x1024xf32>
    %36 = tpu.matmul %35, %0, %cst {dimension_numbers = #tpu.dot_dimension_numbers<[1], [0], [0], [1], [0, 0, 1, 1], [], []>} : vector<48x20xf32>, vector<20x1024xf32>, vector<48x1024xf32> -> vector<48x1024xf32>
    %37 = vector.extract_strided_slice %36 {offsets = [0, 0], sizes = [16, 1024], strides = [1, 1]} : vector<48x1024xf32> to vector<16x1024xf32>
    %c1_i32_11 = arith.constant 1 : i32
    %38 = tpu.dynamic_rotate %37 by %c1_i32_11 dim 1 : vector<16x1024xf32>, i32 -> vector<16x1024xf32>
    %cst_12 = arith.constant 0.000000e+00 : f32
    %39 = vector.shape_cast %21 : vector<1x1024xi1> to vector<1x1024xi1>
    %40 = vector.broadcast %39 : vector<1x1024xi1> to vector<16x1024xi1>
    %41 = vector.broadcast %cst_12 : f32 to vector<16x1024xf32>
    %42 = arith.select %40, %38, %41 : vector<16x1024xi1>, vector<16x1024xf32>
    %43 = vector.extract_strided_slice %36 {offsets = [16, 0], sizes = [16, 1024], strides = [1, 1]} : vector<48x1024xf32> to vector<16x1024xf32>
    %44 = arith.addf %42, %43 : vector<16x1024xf32>
    %45 = vector.extract_strided_slice %36 {offsets = [32, 0], sizes = [16, 1024], strides = [1, 1]} : vector<48x1024xf32> to vector<16x1024xf32>
    %c1023_i32 = arith.constant 1023 : i32
    %46 = tpu.dynamic_rotate %45 by %c1023_i32 dim 1 : vector<16x1024xf32>, i32 -> vector<16x1024xf32>
    %cst_13 = arith.constant 0.000000e+00 : f32
    %47 = vector.shape_cast %19 : vector<1x1024xi1> to vector<1x1024xi1>
    %48 = vector.broadcast %47 : vector<1x1024xi1> to vector<16x1024xi1>
    %49 = vector.broadcast %cst_13 : f32 to vector<16x1024xf32>
    %50 = arith.select %48, %46, %49 : vector<16x1024xi1>, vector<16x1024xf32>
    %51 = arith.addf %44, %50 : vector<16x1024xf32>
    %52 = vector.extract_strided_slice %51 {offsets = [0, 0], sizes = [3, 1024], strides = [1, 1]} : vector<16x1024xf32> to vector<3x1024xf32>
    %53 = vector.extract_strided_slice %34 {offsets = [0, 0, 0], sizes = [1, 3, 1], strides = [1, 1, 1]} : vector<10x8x1xf32> to vector<1x3x1xf32>
    %54 = vector.shape_cast %53 : vector<1x3x1xf32> to vector<3x1xf32>
    %55 = vector.broadcast %54 : vector<3x1xf32> to vector<3x1024xf32>
    %56 = arith.addf %52, %55 : vector<3x1024xf32>
    %cst_14 = arith.constant 0.000000e+00 : f32
    %57 = vector.broadcast %cst_14 : f32 to vector<3x1024xf32>
    %58 = arith.maximumf %56, %57 : vector<3x1024xf32>
    %59 = vector.extract_strided_slice %51 {offsets = [8, 0], sizes = [3, 1024], strides = [1, 1]} : vector<16x1024xf32> to vector<3x1024xf32>
    %60 = vector.extract_strided_slice %34 {offsets = [2, 0, 0], sizes = [1, 3, 1], strides = [1, 1, 1]} : vector<10x8x1xf32> to vector<1x3x1xf32>
    %61 = vector.shape_cast %60 : vector<1x3x1xf32> to vector<3x1xf32>
    %62 = vector.broadcast %61 : vector<3x1xf32> to vector<3x1024xf32>
    %63 = arith.addf %59, %62 : vector<3x1024xf32>
    %c0_15 = arith.constant 0 : index
    %c0_16 = arith.constant 0 : index
    %c0_17 = arith.constant 0 : index
    %64 = vector.load %arg4[%c0_15, %c0_16, %c0_17] : memref<4x24x3xf32, #tpu.memory_space<vmem>>, vector<1x24x3xf32>
    %65 = vector.shape_cast %64 : vector<1x24x3xf32> to vector<24x3xf32>
    %cst_18 = arith.constant dense<0.000000e+00> : vector<24x1024xf32>
    %66 = tpu.matmul %65, %58, %cst_18 {dimension_numbers = #tpu.dot_dimension_numbers<[1], [0], [0], [1], [0, 0, 1, 1], [], []>} : vector<24x3xf32>, vector<3x1024xf32>, vector<24x1024xf32> -> vector<24x1024xf32>
    %67 = vector.extract_strided_slice %66 {offsets = [0, 0], sizes = [8, 1024], strides = [1, 1]} : vector<24x1024xf32> to vector<8x1024xf32>
    %c1_i32_19 = arith.constant 1 : i32
    %68 = tpu.dynamic_rotate %67 by %c1_i32_19 dim 1 : vector<8x1024xf32>, i32 -> vector<8x1024xf32>
    %cst_20 = arith.constant 0.000000e+00 : f32
    %69 = vector.shape_cast %21 : vector<1x1024xi1> to vector<1x1024xi1>
    %70 = vector.broadcast %69 : vector<1x1024xi1> to vector<8x1024xi1>
    %71 = vector.broadcast %cst_20 : f32 to vector<8x1024xf32>
    %72 = arith.select %70, %68, %71 : vector<8x1024xi1>, vector<8x1024xf32>
    %73 = vector.extract_strided_slice %66 {offsets = [8, 0], sizes = [8, 1024], strides = [1, 1]} : vector<24x1024xf32> to vector<8x1024xf32>
    %74 = arith.addf %72, %73 : vector<8x1024xf32>
    %75 = vector.extract_strided_slice %66 {offsets = [16, 0], sizes = [8, 1024], strides = [1, 1]} : vector<24x1024xf32> to vector<8x1024xf32>
    %c1023_i32_21 = arith.constant 1023 : i32
    %76 = tpu.dynamic_rotate %75 by %c1023_i32_21 dim 1 : vector<8x1024xf32>, i32 -> vector<8x1024xf32>
    %cst_22 = arith.constant 0.000000e+00 : f32
    %77 = vector.shape_cast %19 : vector<1x1024xi1> to vector<1x1024xi1>
    %78 = vector.broadcast %77 : vector<1x1024xi1> to vector<8x1024xi1>
    %79 = vector.broadcast %cst_22 : f32 to vector<8x1024xf32>
    %80 = arith.select %78, %76, %79 : vector<8x1024xi1>, vector<8x1024xf32>
    %81 = arith.addf %74, %80 : vector<8x1024xf32>
    %82 = vector.extract_strided_slice %81 {offsets = [0, 0], sizes = [1, 1024], strides = [1, 1]} : vector<8x1024xf32> to vector<1x1024xf32>
    %83 = vector.extract_strided_slice %34 {offsets = [1, 0, 0], sizes = [1, 1, 1], strides = [1, 1, 1]} : vector<10x8x1xf32> to vector<1x1x1xf32>
    %84 = vector.shape_cast %83 : vector<1x1x1xf32> to vector<1x1xf32>
    %85 = vector.broadcast %84 : vector<1x1xf32> to vector<1x1024xf32>
    %86 = arith.addf %82, %85 : vector<1x1024xf32>
    %87 = vector.broadcast %86 : vector<1x1024xf32> to vector<3x1024xf32>
    %88 = arith.addf %87, %63 : vector<3x1024xf32>
    %cst_23 = arith.constant 0.000000e+00 : f32
    %89 = vector.broadcast %cst_23 : f32 to vector<3x1024xf32>
    %90 = arith.maximumf %88, %89 : vector<3x1024xf32>
    %c0_24 = arith.constant 0 : index
    %c0_25 = arith.constant 0 : index
    %c0_26 = arith.constant 0 : index
    %91 = vector.load %arg3[%c0_24, %c0_25, %c0_26] : memref<3x24x3xf32, #tpu.memory_space<vmem>>, vector<1x24x3xf32>
    %92 = vector.shape_cast %91 : vector<1x24x3xf32> to vector<24x3xf32>
    %cst_27 = arith.constant dense<0.000000e+00> : vector<24x1024xf32>
    %93 = tpu.matmul %92, %90, %cst_27 {dimension_numbers = #tpu.dot_dimension_numbers<[1], [0], [0], [1], [0, 0, 1, 1], [], []>} : vector<24x3xf32>, vector<3x1024xf32>, vector<24x1024xf32> -> vector<24x1024xf32>
    %94 = vector.extract_strided_slice %93 {offsets = [0, 0], sizes = [8, 1024], strides = [1, 1]} : vector<24x1024xf32> to vector<8x1024xf32>
    %c2_i32_28 = arith.constant 2 : i32
    %95 = tpu.dynamic_rotate %94 by %c2_i32_28 dim 1 : vector<8x1024xf32>, i32 -> vector<8x1024xf32>
    %cst_29 = arith.constant 0.000000e+00 : f32
    %96 = vector.shape_cast %25 : vector<1x1024xi1> to vector<1x1024xi1>
    %97 = vector.broadcast %96 : vector<1x1024xi1> to vector<8x1024xi1>
    %98 = vector.broadcast %cst_29 : f32 to vector<8x1024xf32>
    %99 = arith.select %97, %95, %98 : vector<8x1024xi1>, vector<8x1024xf32>
    %100 = vector.extract_strided_slice %93 {offsets = [8, 0], sizes = [8, 1024], strides = [1, 1]} : vector<24x1024xf32> to vector<8x1024xf32>
    %101 = arith.addf %99, %100 : vector<8x1024xf32>
    %102 = vector.extract_strided_slice %93 {offsets = [16, 0], sizes = [8, 1024], strides = [1, 1]} : vector<24x1024xf32> to vector<8x1024xf32>
    %c1022_i32 = arith.constant 1022 : i32
    %103 = tpu.dynamic_rotate %102 by %c1022_i32 dim 1 : vector<8x1024xf32>, i32 -> vector<8x1024xf32>
    %cst_30 = arith.constant 0.000000e+00 : f32
    %104 = vector.shape_cast %23 : vector<1x1024xi1> to vector<1x1024xi1>
    %105 = vector.broadcast %104 : vector<1x1024xi1> to vector<8x1024xi1>
    %106 = vector.broadcast %cst_30 : f32 to vector<8x1024xf32>
    %107 = arith.select %105, %103, %106 : vector<8x1024xi1>, vector<8x1024xf32>
    %108 = arith.addf %101, %107 : vector<8x1024xf32>
    %109 = vector.extract_strided_slice %108 {offsets = [0, 0], sizes = [3, 1024], strides = [1, 1]} : vector<8x1024xf32> to vector<3x1024xf32>
    %110 = vector.extract_strided_slice %34 {offsets = [3, 0, 0], sizes = [1, 3, 1], strides = [1, 1, 1]} : vector<10x8x1xf32> to vector<1x3x1xf32>
    %111 = vector.shape_cast %110 : vector<1x3x1xf32> to vector<3x1xf32>
    %112 = vector.broadcast %111 : vector<3x1xf32> to vector<3x1024xf32>
    %113 = arith.addf %109, %112 : vector<3x1024xf32>
    %cst_31 = arith.constant 0.000000e+00 : f32
    %114 = vector.broadcast %cst_31 : f32 to vector<3x1024xf32>
    %115 = arith.maximumf %113, %114 : vector<3x1024xf32>
    %c1 = arith.constant 1 : index
    %c0_32 = arith.constant 0 : index
    %c0_33 = arith.constant 0 : index
    %116 = vector.load %arg4[%c1, %c0_32, %c0_33] : memref<4x24x3xf32, #tpu.memory_space<vmem>>, vector<1x24x3xf32>
    %117 = vector.shape_cast %116 : vector<1x24x3xf32> to vector<24x3xf32>
    %cst_34 = arith.constant dense<0.000000e+00> : vector<24x1024xf32>
    %118 = tpu.matmul %117, %115, %cst_34 {dimension_numbers = #tpu.dot_dimension_numbers<[1], [0], [0], [1], [0, 0, 1, 1], [], []>} : vector<24x3xf32>, vector<3x1024xf32>, vector<24x1024xf32> -> vector<24x1024xf32>
    %119 = vector.extract_strided_slice %118 {offsets = [0, 0], sizes = [8, 1024], strides = [1, 1]} : vector<24x1024xf32> to vector<8x1024xf32>
    %c2_i32_35 = arith.constant 2 : i32
    %120 = tpu.dynamic_rotate %119 by %c2_i32_35 dim 1 : vector<8x1024xf32>, i32 -> vector<8x1024xf32>
    %cst_36 = arith.constant 0.000000e+00 : f32
    %121 = vector.shape_cast %25 : vector<1x1024xi1> to vector<1x1024xi1>
    %122 = vector.broadcast %121 : vector<1x1024xi1> to vector<8x1024xi1>
    %123 = vector.broadcast %cst_36 : f32 to vector<8x1024xf32>
    %124 = arith.select %122, %120, %123 : vector<8x1024xi1>, vector<8x1024xf32>
    %125 = vector.extract_strided_slice %118 {offsets = [8, 0], sizes = [8, 1024], strides = [1, 1]} : vector<24x1024xf32> to vector<8x1024xf32>
    %126 = arith.addf %124, %125 : vector<8x1024xf32>
    %127 = vector.extract_strided_slice %118 {offsets = [16, 0], sizes = [8, 1024], strides = [1, 1]} : vector<24x1024xf32> to vector<8x1024xf32>
    %c1022_i32_37 = arith.constant 1022 : i32
    %128 = tpu.dynamic_rotate %127 by %c1022_i32_37 dim 1 : vector<8x1024xf32>, i32 -> vector<8x1024xf32>
    %cst_38 = arith.constant 0.000000e+00 : f32
    %129 = vector.shape_cast %23 : vector<1x1024xi1> to vector<1x1024xi1>
    %130 = vector.broadcast %129 : vector<1x1024xi1> to vector<8x1024xi1>
    %131 = vector.broadcast %cst_38 : f32 to vector<8x1024xf32>
    %132 = arith.select %130, %128, %131 : vector<8x1024xi1>, vector<8x1024xf32>
    %133 = arith.addf %126, %132 : vector<8x1024xf32>
    %134 = vector.extract_strided_slice %133 {offsets = [0, 0], sizes = [1, 1024], strides = [1, 1]} : vector<8x1024xf32> to vector<1x1024xf32>
    %135 = vector.extract_strided_slice %34 {offsets = [4, 0, 0], sizes = [1, 1, 1], strides = [1, 1, 1]} : vector<10x8x1xf32> to vector<1x1x1xf32>
    %136 = vector.shape_cast %135 : vector<1x1x1xf32> to vector<1x1xf32>
    %137 = vector.broadcast %136 : vector<1x1xf32> to vector<1x1024xf32>
    %138 = arith.addf %134, %137 : vector<1x1024xf32>
    %139 = vector.broadcast %138 : vector<1x1024xf32> to vector<3x1024xf32>
    %140 = arith.addf %139, %90 : vector<3x1024xf32>
    %cst_39 = arith.constant 0.000000e+00 : f32
    %141 = vector.broadcast %cst_39 : f32 to vector<3x1024xf32>
    %142 = arith.maximumf %140, %141 : vector<3x1024xf32>
    %c1_40 = arith.constant 1 : index
    %c0_41 = arith.constant 0 : index
    %c0_42 = arith.constant 0 : index
    %143 = vector.load %arg3[%c1_40, %c0_41, %c0_42] : memref<3x24x3xf32, #tpu.memory_space<vmem>>, vector<1x24x3xf32>
    %144 = vector.shape_cast %143 : vector<1x24x3xf32> to vector<24x3xf32>
    %cst_43 = arith.constant dense<0.000000e+00> : vector<24x1024xf32>
    %145 = tpu.matmul %144, %142, %cst_43 {dimension_numbers = #tpu.dot_dimension_numbers<[1], [0], [0], [1], [0, 0, 1, 1], [], []>} : vector<24x3xf32>, vector<3x1024xf32>, vector<24x1024xf32> -> vector<24x1024xf32>
    %146 = vector.extract_strided_slice %145 {offsets = [0, 0], sizes = [8, 1024], strides = [1, 1]} : vector<24x1024xf32> to vector<8x1024xf32>
    %c4_i32_44 = arith.constant 4 : i32
    %147 = tpu.dynamic_rotate %146 by %c4_i32_44 dim 1 : vector<8x1024xf32>, i32 -> vector<8x1024xf32>
    %cst_45 = arith.constant 0.000000e+00 : f32
    %148 = vector.shape_cast %29 : vector<1x1024xi1> to vector<1x1024xi1>
    %149 = vector.broadcast %148 : vector<1x1024xi1> to vector<8x1024xi1>
    %150 = vector.broadcast %cst_45 : f32 to vector<8x1024xf32>
    %151 = arith.select %149, %147, %150 : vector<8x1024xi1>, vector<8x1024xf32>
    %152 = vector.extract_strided_slice %145 {offsets = [8, 0], sizes = [8, 1024], strides = [1, 1]} : vector<24x1024xf32> to vector<8x1024xf32>
    %153 = arith.addf %151, %152 : vector<8x1024xf32>
    %154 = vector.extract_strided_slice %145 {offsets = [16, 0], sizes = [8, 1024], strides = [1, 1]} : vector<24x1024xf32> to vector<8x1024xf32>
    %c1020_i32 = arith.constant 1020 : i32
    %155 = tpu.dynamic_rotate %154 by %c1020_i32 dim 1 : vector<8x1024xf32>, i32 -> vector<8x1024xf32>
    %cst_46 = arith.constant 0.000000e+00 : f32
    %156 = vector.shape_cast %27 : vector<1x1024xi1> to vector<1x1024xi1>
    %157 = vector.broadcast %156 : vector<1x1024xi1> to vector<8x1024xi1>
    %158 = vector.broadcast %cst_46 : f32 to vector<8x1024xf32>
    %159 = arith.select %157, %155, %158 : vector<8x1024xi1>, vector<8x1024xf32>
    %160 = arith.addf %153, %159 : vector<8x1024xf32>
    %161 = vector.extract_strided_slice %160 {offsets = [0, 0], sizes = [3, 1024], strides = [1, 1]} : vector<8x1024xf32> to vector<3x1024xf32>
    %162 = vector.extract_strided_slice %34 {offsets = [5, 0, 0], sizes = [1, 3, 1], strides = [1, 1, 1]} : vector<10x8x1xf32> to vector<1x3x1xf32>
    %163 = vector.shape_cast %162 : vector<1x3x1xf32> to vector<3x1xf32>
    %164 = vector.broadcast %163 : vector<3x1xf32> to vector<3x1024xf32>
    %165 = arith.addf %161, %164 : vector<3x1024xf32>
    %cst_47 = arith.constant 0.000000e+00 : f32
    %166 = vector.broadcast %cst_47 : f32 to vector<3x1024xf32>
    %167 = arith.maximumf %165, %166 : vector<3x1024xf32>
    %c2 = arith.constant 2 : index
    %c0_48 = arith.constant 0 : index
    %c0_49 = arith.constant 0 : index
    %168 = vector.load %arg4[%c2, %c0_48, %c0_49] : memref<4x24x3xf32, #tpu.memory_space<vmem>>, vector<1x24x3xf32>
    %169 = vector.shape_cast %168 : vector<1x24x3xf32> to vector<24x3xf32>
    %cst_50 = arith.constant dense<0.000000e+00> : vector<24x1024xf32>
    %170 = tpu.matmul %169, %167, %cst_50 {dimension_numbers = #tpu.dot_dimension_numbers<[1], [0], [0], [1], [0, 0, 1, 1], [], []>} : vector<24x3xf32>, vector<3x1024xf32>, vector<24x1024xf32> -> vector<24x1024xf32>
    %171 = vector.extract_strided_slice %170 {offsets = [0, 0], sizes = [8, 1024], strides = [1, 1]} : vector<24x1024xf32> to vector<8x1024xf32>
    %c4_i32_51 = arith.constant 4 : i32
    %172 = tpu.dynamic_rotate %171 by %c4_i32_51 dim 1 : vector<8x1024xf32>, i32 -> vector<8x1024xf32>
    %cst_52 = arith.constant 0.000000e+00 : f32
    %173 = vector.shape_cast %29 : vector<1x1024xi1> to vector<1x1024xi1>
    %174 = vector.broadcast %173 : vector<1x1024xi1> to vector<8x1024xi1>
    %175 = vector.broadcast %cst_52 : f32 to vector<8x1024xf32>
    %176 = arith.select %174, %172, %175 : vector<8x1024xi1>, vector<8x1024xf32>
    %177 = vector.extract_strided_slice %170 {offsets = [8, 0], sizes = [8, 1024], strides = [1, 1]} : vector<24x1024xf32> to vector<8x1024xf32>
    %178 = arith.addf %176, %177 : vector<8x1024xf32>
    %179 = vector.extract_strided_slice %170 {offsets = [16, 0], sizes = [8, 1024], strides = [1, 1]} : vector<24x1024xf32> to vector<8x1024xf32>
    %c1020_i32_53 = arith.constant 1020 : i32
    %180 = tpu.dynamic_rotate %179 by %c1020_i32_53 dim 1 : vector<8x1024xf32>, i32 -> vector<8x1024xf32>
    %cst_54 = arith.constant 0.000000e+00 : f32
    %181 = vector.shape_cast %27 : vector<1x1024xi1> to vector<1x1024xi1>
    %182 = vector.broadcast %181 : vector<1x1024xi1> to vector<8x1024xi1>
    %183 = vector.broadcast %cst_54 : f32 to vector<8x1024xf32>
    %184 = arith.select %182, %180, %183 : vector<8x1024xi1>, vector<8x1024xf32>
    %185 = arith.addf %178, %184 : vector<8x1024xf32>
    %186 = vector.extract_strided_slice %185 {offsets = [0, 0], sizes = [1, 1024], strides = [1, 1]} : vector<8x1024xf32> to vector<1x1024xf32>
    %187 = vector.extract_strided_slice %34 {offsets = [6, 0, 0], sizes = [1, 1, 1], strides = [1, 1, 1]} : vector<10x8x1xf32> to vector<1x1x1xf32>
    %188 = vector.shape_cast %187 : vector<1x1x1xf32> to vector<1x1xf32>
    %189 = vector.broadcast %188 : vector<1x1xf32> to vector<1x1024xf32>
    %190 = arith.addf %186, %189 : vector<1x1024xf32>
    %191 = vector.broadcast %190 : vector<1x1024xf32> to vector<3x1024xf32>
    %192 = arith.addf %191, %142 : vector<3x1024xf32>
    %cst_55 = arith.constant 0.000000e+00 : f32
    %193 = vector.broadcast %cst_55 : f32 to vector<3x1024xf32>
    %194 = arith.maximumf %192, %193 : vector<3x1024xf32>
    %c2_56 = arith.constant 2 : index
    %c0_57 = arith.constant 0 : index
    %c0_58 = arith.constant 0 : index
    %195 = vector.load %arg3[%c2_56, %c0_57, %c0_58] : memref<3x24x3xf32, #tpu.memory_space<vmem>>, vector<1x24x3xf32>
    %196 = vector.shape_cast %195 : vector<1x24x3xf32> to vector<24x3xf32>
    %cst_59 = arith.constant dense<0.000000e+00> : vector<24x1024xf32>
    %197 = tpu.matmul %196, %194, %cst_59 {dimension_numbers = #tpu.dot_dimension_numbers<[1], [0], [0], [1], [0, 0, 1, 1], [], []>} : vector<24x3xf32>, vector<3x1024xf32>, vector<24x1024xf32> -> vector<24x1024xf32>
    %198 = vector.extract_strided_slice %197 {offsets = [0, 0], sizes = [8, 1024], strides = [1, 1]} : vector<24x1024xf32> to vector<8x1024xf32>
    %c8_i32_60 = arith.constant 8 : i32
    %199 = tpu.dynamic_rotate %198 by %c8_i32_60 dim 1 : vector<8x1024xf32>, i32 -> vector<8x1024xf32>
    %cst_61 = arith.constant 0.000000e+00 : f32
    %200 = vector.shape_cast %33 : vector<1x1024xi1> to vector<1x1024xi1>
    %201 = vector.broadcast %200 : vector<1x1024xi1> to vector<8x1024xi1>
    %202 = vector.broadcast %cst_61 : f32 to vector<8x1024xf32>
    %203 = arith.select %201, %199, %202 : vector<8x1024xi1>, vector<8x1024xf32>
    %204 = vector.extract_strided_slice %197 {offsets = [8, 0], sizes = [8, 1024], strides = [1, 1]} : vector<24x1024xf32> to vector<8x1024xf32>
    %205 = arith.addf %203, %204 : vector<8x1024xf32>
    %206 = vector.extract_strided_slice %197 {offsets = [16, 0], sizes = [8, 1024], strides = [1, 1]} : vector<24x1024xf32> to vector<8x1024xf32>
    %c1016_i32 = arith.constant 1016 : i32
    %207 = tpu.dynamic_rotate %206 by %c1016_i32 dim 1 : vector<8x1024xf32>, i32 -> vector<8x1024xf32>
    %cst_62 = arith.constant 0.000000e+00 : f32
    %208 = vector.shape_cast %31 : vector<1x1024xi1> to vector<1x1024xi1>
    %209 = vector.broadcast %208 : vector<1x1024xi1> to vector<8x1024xi1>
    %210 = vector.broadcast %cst_62 : f32 to vector<8x1024xf32>
    %211 = arith.select %209, %207, %210 : vector<8x1024xi1>, vector<8x1024xf32>
    %212 = arith.addf %205, %211 : vector<8x1024xf32>
    %213 = vector.extract_strided_slice %212 {offsets = [0, 0], sizes = [3, 1024], strides = [1, 1]} : vector<8x1024xf32> to vector<3x1024xf32>
    %214 = vector.extract_strided_slice %34 {offsets = [7, 0, 0], sizes = [1, 3, 1], strides = [1, 1, 1]} : vector<10x8x1xf32> to vector<1x3x1xf32>
    %215 = vector.shape_cast %214 : vector<1x3x1xf32> to vector<3x1xf32>
    %216 = vector.broadcast %215 : vector<3x1xf32> to vector<3x1024xf32>
    %217 = arith.addf %213, %216 : vector<3x1024xf32>
    %cst_63 = arith.constant 0.000000e+00 : f32
    %218 = vector.broadcast %cst_63 : f32 to vector<3x1024xf32>
    %219 = arith.maximumf %217, %218 : vector<3x1024xf32>
    %c3 = arith.constant 3 : index
    %c0_64 = arith.constant 0 : index
    %c0_65 = arith.constant 0 : index
    %220 = vector.load %arg4[%c3, %c0_64, %c0_65] : memref<4x24x3xf32, #tpu.memory_space<vmem>>, vector<1x24x3xf32>
    %221 = vector.shape_cast %220 : vector<1x24x3xf32> to vector<24x3xf32>
    %cst_66 = arith.constant dense<0.000000e+00> : vector<24x1024xf32>
    %222 = tpu.matmul %221, %219, %cst_66 {dimension_numbers = #tpu.dot_dimension_numbers<[1], [0], [0], [1], [0, 0, 1, 1], [], []>} : vector<24x3xf32>, vector<3x1024xf32>, vector<24x1024xf32> -> vector<24x1024xf32>
    %223 = vector.extract_strided_slice %222 {offsets = [0, 0], sizes = [8, 1024], strides = [1, 1]} : vector<24x1024xf32> to vector<8x1024xf32>
    %c8_i32_67 = arith.constant 8 : i32
    %224 = tpu.dynamic_rotate %223 by %c8_i32_67 dim 1 : vector<8x1024xf32>, i32 -> vector<8x1024xf32>
    %cst_68 = arith.constant 0.000000e+00 : f32
    %225 = vector.shape_cast %33 : vector<1x1024xi1> to vector<1x1024xi1>
    %226 = vector.broadcast %225 : vector<1x1024xi1> to vector<8x1024xi1>
    %227 = vector.broadcast %cst_68 : f32 to vector<8x1024xf32>
    %228 = arith.select %226, %224, %227 : vector<8x1024xi1>, vector<8x1024xf32>
    %229 = vector.extract_strided_slice %222 {offsets = [8, 0], sizes = [8, 1024], strides = [1, 1]} : vector<24x1024xf32> to vector<8x1024xf32>
    %230 = arith.addf %228, %229 : vector<8x1024xf32>
    %231 = vector.extract_strided_slice %222 {offsets = [16, 0], sizes = [8, 1024], strides = [1, 1]} : vector<24x1024xf32> to vector<8x1024xf32>
    %c1016_i32_69 = arith.constant 1016 : i32
    %232 = tpu.dynamic_rotate %231 by %c1016_i32_69 dim 1 : vector<8x1024xf32>, i32 -> vector<8x1024xf32>
    %cst_70 = arith.constant 0.000000e+00 : f32
    %233 = vector.shape_cast %31 : vector<1x1024xi1> to vector<1x1024xi1>
    %234 = vector.broadcast %233 : vector<1x1024xi1> to vector<8x1024xi1>
    %235 = vector.broadcast %cst_70 : f32 to vector<8x1024xf32>
    %236 = arith.select %234, %232, %235 : vector<8x1024xi1>, vector<8x1024xf32>
    %237 = arith.addf %230, %236 : vector<8x1024xf32>
    %238 = vector.extract_strided_slice %237 {offsets = [0, 0], sizes = [1, 1024], strides = [1, 1]} : vector<8x1024xf32> to vector<1x1024xf32>
    %239 = vector.extract_strided_slice %34 {offsets = [8, 0, 0], sizes = [1, 1, 1], strides = [1, 1, 1]} : vector<10x8x1xf32> to vector<1x1x1xf32>
    %240 = vector.shape_cast %239 : vector<1x1x1xf32> to vector<1x1xf32>
    %241 = vector.broadcast %240 : vector<1x1xf32> to vector<1x1024xf32>
    %242 = arith.addf %238, %241 : vector<1x1024xf32>
    %243 = vector.broadcast %242 : vector<1x1024xf32> to vector<3x1024xf32>
    %244 = arith.addf %243, %194 : vector<3x1024xf32>
    %cst_71 = arith.constant 0.000000e+00 : f32
    %245 = vector.broadcast %cst_71 : f32 to vector<3x1024xf32>
    %246 = arith.maximumf %244, %245 : vector<3x1024xf32>
    %c0_72 = arith.constant 0 : index
    %c0_73 = arith.constant 0 : index
    %247 = vector.load %arg6[%c0_72, %c0_73] : memref<2x3xf32, #tpu.memory_space<vmem>>, vector<2x3xf32>
    %cst_74 = arith.constant dense<0.000000e+00> : vector<2x1024xf32>
    %248 = tpu.matmul %247, %246, %cst_74 {dimension_numbers = #tpu.dot_dimension_numbers<[1], [0], [0], [1], [0, 0, 1, 1], [], []>} : vector<2x3xf32>, vector<3x1024xf32>, vector<2x1024xf32> -> vector<2x1024xf32>
    %c1023_i32_75 = arith.constant 1023 : i32
    %249 = tpu.dynamic_rotate %248 by %c1023_i32_75 dim 1 : vector<2x1024xf32>, i32 -> vector<2x1024xf32>
    %250 = arith.addf %248, %249 : vector<2x1024xf32>
    %c1022_i32_76 = arith.constant 1022 : i32
    %251 = tpu.dynamic_rotate %250 by %c1022_i32_76 dim 1 : vector<2x1024xf32>, i32 -> vector<2x1024xf32>
    %252 = arith.addf %250, %251 : vector<2x1024xf32>
    %c1020_i32_77 = arith.constant 1020 : i32
    %253 = tpu.dynamic_rotate %252 by %c1020_i32_77 dim 1 : vector<2x1024xf32>, i32 -> vector<2x1024xf32>
    %254 = arith.addf %252, %253 : vector<2x1024xf32>
    %c1016_i32_78 = arith.constant 1016 : i32
    %255 = tpu.dynamic_rotate %254 by %c1016_i32_78 dim 1 : vector<2x1024xf32>, i32 -> vector<2x1024xf32>
    %256 = arith.addf %254, %255 : vector<2x1024xf32>
    %cst_79 = arith.constant 6.250000e-02 : f32
    %257 = vector.broadcast %cst_79 : f32 to vector<2x1024xf32>
    %258 = arith.mulf %256, %257 : vector<2x1024xf32>
    %259 = vector.extract_strided_slice %34 {offsets = [9, 0, 0], sizes = [1, 2, 1], strides = [1, 1, 1]} : vector<10x8x1xf32> to vector<1x2x1xf32>
    %260 = vector.shape_cast %259 : vector<1x2x1xf32> to vector<2x1xf32>
    %261 = vector.broadcast %260 : vector<2x1xf32> to vector<2x1024xf32>
    %262 = arith.addf %258, %261 : vector<2x1024xf32>
    %c0_80 = arith.constant 0 : index
    %c0_81 = arith.constant 0 : index
    %263 = vector.load %arg7[%c0_80, %c0_81] : memref<2x1024xf32, #tpu.memory_space<vmem>>, vector<2x1024xf32>
    tpu.vector_store %arg7[%c0_80, %c0_81], %262 {strides = array<i32>} : memref<2x1024xf32, #tpu.memory_space<vmem>>, vector<2x1024xf32>,
    return
  }
  func.func @transform_0(%arg0: i32) -> (i32, i32) {
    %c0_i32 = arith.constant 0 : i32
    %c0_i32_0 = arith.constant 0 : i32
    return %c0_i32, %arg0 : i32, i32
  }
  func.func @transform_1(%arg0: i32) -> (i32, i32) {
    %c0_i32 = arith.constant 0 : i32
    %c0_i32_0 = arith.constant 0 : i32
    %c0_i32_1 = arith.constant 0 : i32
    return %c0_i32, %c0_i32_0 : i32, i32
  }
  func.func @transform_2(%arg0: i32) -> (i32, i32, i32) {
    %c0_i32 = arith.constant 0 : i32
    %c0_i32_0 = arith.constant 0 : i32
    %c0_i32_1 = arith.constant 0 : i32
    %c0_i32_2 = arith.constant 0 : i32
    return %c0_i32, %c0_i32_0, %c0_i32_1 : i32, i32, i32
  }
  func.func @transform_3(%arg0: i32) -> (i32, i32, i32) {
    %c0_i32 = arith.constant 0 : i32
    %c0_i32_0 = arith.constant 0 : i32
    %c0_i32_1 = arith.constant 0 : i32
    %c0_i32_2 = arith.constant 0 : i32
    return %c0_i32, %c0_i32_0, %c0_i32_1 : i32, i32, i32
  }
  func.func @transform_4(%arg0: i32) -> (i32, i32, i32) {
    %c0_i32 = arith.constant 0 : i32
    %c0_i32_0 = arith.constant 0 : i32
    %c0_i32_1 = arith.constant 0 : i32
    %c0_i32_2 = arith.constant 0 : i32
    return %c0_i32, %c0_i32_0, %c0_i32_1 : i32, i32, i32
  }
  func.func @transform_5(%arg0: i32) -> (i32, i32) {
    %c0_i32 = arith.constant 0 : i32
    %c0_i32_0 = arith.constant 0 : i32
    %c0_i32_1 = arith.constant 0 : i32
    return %c0_i32, %c0_i32_0 : i32, i32
  }
  func.func @transform_6(%arg0: i32) -> (i32, i32) {
    %c0_i32 = arith.constant 0 : i32
    %c0_i32_0 = arith.constant 0 : i32
    return %c0_i32, %arg0 : i32, i32
  }
}

</mosaic_0001>

<llo_original>
// kernel: tcn_forward.1
$region0: #{tcn_forward.1}
  #allocation0 [shape = 'u32[]', space=smem, size = 0x4, offset = 0x4, fixed_abs, tag = 'smem constant byte address 0x4 - core index']
  #allocation1 [shape = 'u32[144,128]{1,0:T(1,128)}', space=vmem, size = 0x12000, scoped, tag = 'internal scratch']
  %s0 = inlined_call_operand.vmem [shape: f32[20,4096], index: 0, kind: input, shape index: {}]
  %s1 = inlined_call_operand.vmem [shape: f32[48,20], index: 1, kind: input, shape index: {}]
  %s2 = inlined_call_operand.vmem [shape: f32[3,24,3], index: 2, kind: input, shape index: {}]
  %s3 = inlined_call_operand.vmem [shape: f32[4,24,3], index: 3, kind: input, shape index: {}]
  %s4 = inlined_call_operand.vmem [shape: f32[10,8,1], index: 4, kind: input, shape index: {}]
  %s5 = inlined_call_operand.vmem [shape: f32[2,3], index: 5, kind: input, shape index: {}]
  %s6 = inlined_call_operand.vmem [shape: f32[2,4096], index: 6, kind: output, shape index: {}]
  %s7 = sld [smem:[#allocation0]]
  $region80: #{tcn_forward.1} parent=0
    _
  %s9 = ssub.s32 1, %s7
  %s10 = scalar_select 0, %s9, %s7
  $region1: #{tcn_forward.1} parent=0
    #allocation2 [shape = 'u8[196608]{0}', space=vmem, size = 0x30000, scoped, tag = 'input window, operand 0']
    loop: start=0, step=1, limit=6
    $region2: #{tcn_forward.1} parent=1 // loop_pre_header
      _
    $region3: #{tcn_forward.1} parent=1 // loop_header
      %s12 = sphi 0, %s16
      %p13 = scmp.ge.s32.totalorder %s12, 6
      %s22 = sphi 0, %s24
      %s25 = sphi 0, %s22
      %s26 = sphi 0, %s25
      %s42 = sphi 0, %s26
      %s46 = sphi 0, %s46
      %s48 = sphi 0, %s46
      %s49 = sphi 0, %s48
      %s63 = sphi 0, %s49
      %s67 = sphi 0, %s67
      %s69 = sphi 0, %s67
      %s70 = sphi 0, %s69
      %s84 = sphi 0, %s70
      %s88 = sphi 0, %s88
      %s90 = sphi 0, %s88
      %s91 = sphi 0, %s90
      %s105 = sphi 0, %s91
      %s109 = sphi 0, %s109
      %s111 = sphi 0, %s109
      %s112 = sphi 0, %s111
      %s126 = sphi 0, %s112
      %s130 = sphi 0, %s130
      %s132 = sphi 0, %s130
      %s133 = sphi 0, %s132
      %s147 = sphi 0, %s133
      %s153 = sphi 0, %s155
      %s156 = sphi 0, %s153
      %s157 = sphi 0, %s156
      %s173 = sphi 0, %s157
    $region4: #{tcn_forward.1} parent=1 // loop_header_branch
      %15 = sbr.rel (%p13) target = $region8
    $region5: #{tcn_forward.1} parent=1 // loop_body
      %s17 = ssub.s32 %s12, 1
      %s18 = ssub.s32 %s12, 2
      %s19 = sadd.s32 %s12, 1
      %s20 = ssub.s32 %s12, %s19
      %p21 = scmp.eq.s32.totalorder %s20, 0
      %s23 = sadd.s32 %s22, 1
      %s24 = scalar_select %p21, %s22, %s23
      %p27 = pneg %p21
      %p28 = scmp.eq.s32.totalorder %s12, 3
      %p29 = por %p27, %p28
      %p30 = scmp.ne.s32.totalorder %s22, %s25
      %p31 = scmp.eq.s32.totalorder %s12, 0
      %p32 = por %p30, %p31
      %p33 = scmp.ne.s32.totalorder %s22, %s25
      %p34 = scmp.eq.s32.totalorder %s17, 3
      %p35 = por %p33, %p34
      %p36 = scmp.ne.s32.totalorder %s25, %s26
      %p37 = scmp.eq.s32.totalorder %s17, 0
      %p38 = por %p36, %p37
      %p39 = scmp.ne.s32.totalorder %s25, %s26
      %p40 = scmp.eq.s32.totalorder %s18, 3
      %p41 = por %p39, %p40
      %p43 = scmp.ne.s32.totalorder %s26, %s42
      %p44 = scmp.eq.s32.totalorder %s18, 0
      %p45 = por %p43, %p44
      %s47 = sadd.s32 %s46, 1
      %p50 = scmp.eq.s32.totalorder %s12, 3
      %p51 = scmp.ne.s32.totalorder %s46, %s48
      %p52 = scmp.eq.s32.totalorder %s12, 0
      %p53 = por %p51, %p52
      %p54 = scmp.ne.s32.totalorder %s46, %s48
      %p55 = scmp.eq.s32.totalorder %s17, 3
      %p56 = por %p54, %p55
      %p57 = scmp.ne.s32.totalorder %s48, %s49
      %p58 = scmp.eq.s32.totalorder %s17, 0
      %p59 = por %p57, %p58
      %p60 = scmp.ne.s32.totalorder %s48, %s49
      %p61 = scmp.eq.s32.totalorder %s18, 3
      %p62 = por %p60, %p61
      %p64 = scmp.ne.s32.totalorder %s49, %s63
      %p65 = scmp.eq.s32.totalorder %s18, 0
      %p66 = por %p64, %p65
      %s68 = sadd.s32 %s67, 1
      %p71 = scmp.eq.s32.totalorder %s12, 3
      %p72 = scmp.ne.s32.totalorder %s67, %s69
      %p73 = scmp.eq.s32.totalorder %s12, 0
      %p74 = por %p72, %p73
      %p75 = scmp.ne.s32.totalorder %s67, %s69
      %p76 = scmp.eq.s32.totalorder %s17, 3
      %p77 = por %p75, %p76
      %p78 = scmp.ne.s32.totalorder %s69, %s70
      %p79 = scmp.eq.s32.totalorder %s17, 0
      %p80 = por %p78, %p79
      %p81 = scmp.ne.s32.totalorder %s69, %s70
      %p82 = scmp.eq.s32.totalorder %s18, 3
      %p83 = por %p81, %p82
      %p85 = scmp.ne.s32.totalorder %s70, %s84
      %p86 = scmp.eq.s32.totalorder %s18, 0
      %p87 = por %p85, %p86
      %s89 = sadd.s32 %s88, 1
      %p92 = scmp.eq.s32.totalorder %s12, 3
      %p93 = scmp.ne.s32.totalorder %s88, %s90
      %p94 = scmp.eq.s32.totalorder %s12, 0
      %p95 = por %p93, %p94
      %p96 = scmp.ne.s32.totalorder %s88, %s90
      %p97 = scmp.eq.s32.totalorder %s17, 3
      %p98 = por %p96, %p97
      %p99 = scmp.ne.s32.totalorder %s90, %s91
      %p100 = scmp.eq.s32.totalorder %s17, 0
      %p101 = por %p99, %p100
      %p102 = scmp.ne.s32.totalorder %s90, %s91
      %p103 = scmp.eq.s32.totalorder %s18, 3
      %p104 = por %p102, %p103
      %p106 = scmp.ne.s32.totalorder %s91, %s105
      %p107 = scmp.eq.s32.totalorder %s18, 0
      %p108 = por %p106, %p107
      %s110 = sadd.s32 %s109, 1
      %p113 = scmp.eq.s32.totalorder %s12, 3
      %p114 = scmp.ne.s32.totalorder %s109, %s111
      %p115 = scmp.eq.s32.totalorder %s12, 0
      %p116 = por %p114, %p115
      %p117 = scmp.ne.s32.totalorder %s109, %s111
      %p118 = scmp.eq.s32.totalorder %s17, 3
      %p119 = por %p117, %p118
      %p120 = scmp.ne.s32.totalorder %s111, %s112
      %p121 = scmp.eq.s32.totalorder %s17, 0
      %p122 = por %p120, %p121
      %p123 = scmp.ne.s32.totalorder %s111, %s112
      %p124 = scmp.eq.s32.totalorder %s18, 3
      %p125 = por %p123, %p124
      %p127 = scmp.ne.s32.totalorder %s112, %s126
      %p128 = scmp.eq.s32.totalorder %s18, 0
      %p129 = por %p127, %p128
      %s131 = sadd.s32 %s130, 1
      %p134 = scmp.eq.s32.totalorder %s12, 3
      %p135 = scmp.ne.s32.totalorder %s130, %s132
      %p136 = scmp.eq.s32.totalorder %s12, 0
      %p137 = por %p135, %p136
      %p138 = scmp.ne.s32.totalorder %s130, %s132
      %p139 = scmp.eq.s32.totalorder %s17, 3
      %p140 = por %p138, %p139
      %p141 = scmp.ne.s32.totalorder %s132, %s133
      %p142 = scmp.eq.s32.totalorder %s17, 0
      %p143 = por %p141, %p142
      %p144 = scmp.ne.s32.totalorder %s132, %s133
      %p145 = scmp.eq.s32.totalorder %s18, 3
      %p146 = por %p144, %p145
      %p148 = scmp.ne.s32.totalorder %s133, %s147
      %p149 = scmp.eq.s32.totalorder %s18, 0
      %p150 = por %p148, %p149
      %s151 = ssub.s32 %s12, %s19
      %p152 = scmp.eq.s32.totalorder %s151, 0
      %s154 = sadd.s32 %s153, 1
      %s155 = scalar_select %p152, %s153, %s154
      %p158 = pneg %p152
      %p159 = scmp.eq.s32.totalorder %s12, 3
      %p160 = por %p158, %p159
      %p161 = scmp.ne.s32.totalorder %s153, %s156
      %p162 = scmp.eq.s32.totalorder %s12, 0
      %p163 = por %p161, %p162
      %p164 = scmp.ne.s32.totalorder %s153, %s156
      %p165 = scmp.eq.s32.totalorder %s17, 3
      %p166 = por %p164, %p165
      %p167 = scmp.ne.s32.totalorder %s156, %s157
      %p168 = scmp.eq.s32.totalorder %s17, 0
      %p169 = por %p167, %p168
      %p170 = scmp.ne.s32.totalorder %s156, %s157
      %p171 = scmp.eq.s32.totalorder %s18, 3
      %p172 = por %p170, %p171
      %p174 = scmp.ne.s32.totalorder %s157, %s173
      %p175 = scmp.eq.s32.totalorder %s18, 0
      %p176 = por %p174, %p175
      %p177 = scmp.le.s32.totalorder 1, %s12
      %p178 = scmp.lt.s32.totalorder %s12, 5
      %p179 = pnand %p177, %p178
      %p180 = pneg %p179
      // Predicated region
      $region9: #{tcn_forward.1} parent=5 // pred_check
        _
      $region10: #{tcn_forward.1} parent=5 // pred_check_branch
        %182 = sbr.rel (%p179) target = $region12
      $region11: #{tcn_forward.1} parent=5 // pred_region
        %s183 = ssub.s32 %s12, 1
        // Predicated region
        $region13: #{tcn_forward.1} parent=11 // pred_check
          %p184 = pneg %p59
        $region14: #{tcn_forward.1} parent=11 // pred_check_branch
          %186 = sbr.rel (%p184) target = $region16
        $region15: #{tcn_forward.1} parent=11 // pred_region
          _
        $region16: #{tcn_forward.1} parent=11 // pred_fallthru
          _
        // Predicated region
        $region17: #{tcn_forward.1} parent=11 // pred_check
          %p187 = pneg %p80
        $region18: #{tcn_forward.1} parent=11 // pred_check_branch
          %189 = sbr.rel (%p187) target = $region20
        $region19: #{tcn_forward.1} parent=11 // pred_region
          _
        $region20: #{tcn_forward.1} parent=11 // pred_fallthru
          _
        // Predicated region
        $region21: #{tcn_forward.1} parent=11 // pred_check
          %p190 = pneg %p101
        $region22: #{tcn_forward.1} parent=11 // pred_check_branch
          %192 = sbr.rel (%p190) target = $region24
        $region23: #{tcn_forward.1} parent=11 // pred_region
          _
        $region24: #{tcn_forward.1} parent=11 // pred_fallthru
          _
        // Predicated region
        $region25: #{tcn_forward.1} parent=11 // pred_check
          %p193 = pneg %p122
        $region26: #{tcn_forward.1} parent=11 // pred_check_branch
          %195 = sbr.rel (%p193) target = $region28
        $region27: #{tcn_forward.1} parent=11 // pred_region
          _
        $region28: #{tcn_forward.1} parent=11 // pred_fallthru
          _
        // Predicated region
        $region29: #{tcn_forward.1} parent=11 // pred_check
          %p196 = pneg %p143
        $region30: #{tcn_forward.1} parent=11 // pred_check_branch
          %198 = sbr.rel (%p196) target = $region32
        $region31: #{tcn_forward.1} parent=11 // pred_region
          _
        $region32: #{tcn_forward.1} parent=11 // pred_fallthru
          _
      $region12: #{tcn_forward.1} parent=5 // pred_fallthru
        _
      %p199 = scmp.lt.s32.totalorder %s12, 4
      // Predicated region
      $region33: #{tcn_forward.1} parent=5 // pred_check
        %p200 = pneg %p199
      $region34: #{tcn_forward.1} parent=5 // pred_check_branch
        %202 = sbr.rel (%p200) target = $region36
      $region35: #{tcn_forward.1} parent=5 // pred_region
        // Predicated region
        $region37: #{tcn_forward.1} parent=35 // pred_check
          %p203 = pneg %p32
        $region38: #{tcn_forward.1} parent=35 // pred_check_branch
          %205 = sbr.rel (%p203) target = $region40
        $region39: #{tcn_forward.1} parent=35 // pred_region
          %s206 = sand.u32 %s22, 1
          %s207 = sand.u32 %s22, 1
          %s208 = smul.addr %s207, 192
          %s209 = scalar_lea.vmem [#allocation2], %s208
          %s210 = smul.u32 8, %s12
          %s211 = smul.addr %s210, 8
          %s212 = scalar_lea.vmem %s0, %s211
          // Predicated region
          $region41: #{tcn_forward.1} parent=39 // pred_check
            _
          $region42: #{tcn_forward.1} parent=39 // pred_check_branch
            %214 = sbr.rel (0) target = $region44
          $region43: #{tcn_forward.1} parent=39 // pred_region
            // Predicated region
            $region45: #{tcn_forward.1} parent=43 // pred_check
              _
            $region46: #{tcn_forward.1} parent=43 // pred_check_branch
              %216 = sbr.rel (0) target = $region48
            $region47: #{tcn_forward.1} parent=43 // pred_region
              loop: start=0, step=1, limit=1
              $region49: #{tcn_forward.1} parent=47 // loop_pre_header
                _
              $region50: #{tcn_forward.1} parent=47 // loop_header
                %s218 = sphi 0, %s222
                %p219 = scmp.ge.s32.totalorder %s218, 1
                %s223 = sphi %s212, %s212
                %s224 = sphi %s209, %s209
              $region51: #{tcn_forward.1} parent=47 // loop_header_branch
                %221 = sbr.rel (%p219) target = $region55
              $region52: #{tcn_forward.1} parent=47 // loop_body
                %v225 = vld [vmem:[%s223] sm:$0xff]
                %226 = vst [vmem:[%s224] sm:$0xff] %v225
                %v227 = vld [vmem:[%s223 + $0x8] sm:$0xff]
                %228 = vst [vmem:[%s224 + $0x8] sm:$0xff] %v227
                %v229 = vld [vmem:[%s223 + $0x10] sm:$0xff]
                %230 = vst [vmem:[%s224 + $0x10] sm:$0xff] %v229
                %v231 = vld [vmem:[%s223 + $0x18] sm:$0xff]
                %232 = vst [vmem:[%s224 + $0x18] sm:$0xff] %v231
                %v233 = vld [vmem:[%s223 + $0x20] sm:$0xff]
                %234 = vst [vmem:[%s224 + $0x20] sm:$0xff] %v233
                %v235 = vld [vmem:[%s223 + $0x28] sm:$0xff]
                %236 = vst [vmem:[%s224 + $0x28] sm:$0xff] %v235
                %v237 = vld [vmem:[%s223 + $0x30] sm:$0xff]
                %238 = vst [vmem:[%s224 + $0x30] sm:$0xff] %v237
                %v239 = vld [vmem:[%s223 + $0x38] sm:$0xff]
                %240 = vst [vmem:[%s224 + $0x38] sm:$0xff] %v239
                %v241 = vld [vmem:[%s223 + $0x100] sm:$0xff]
                %242 = vst [vmem:[%s224 + $0x40] sm:$0xff] %v241
                %v243 = vld [vmem:[%s223 + $0x108] sm:$0xff]
                %244 = vst [vmem:[%s224 + $0x48] sm:$0xff] %v243
                %v245 = vld [vmem:[%s223 + $0x110] sm:$0xff]
                %246 = vst [vmem:[%s224 + $0x50] sm:$0xff] %v245
                %v247 = vld [vmem:[%s223 + $0x118] sm:$0xff]
                %248 = vst [vmem:[%s224 + $0x58] sm:$0xff] %v247
                %v249 = vld [vmem:[%s223 + $0x120] sm:$0xff]
                %250 = vst [vmem:[%s224 + $0x60] sm:$0xff] %v249
                %v251 = vld [vmem:[%s223 + $0x128] sm:$0xff]
                %252 = vst [vmem:[%s224 + $0x68] sm:$0xff] %v251
                %v253 = vld [vmem:[%s223 + $0x130] sm:$0xff]
                %254 = vst [vmem:[%s224 + $0x70] sm:$0xff] %v253
                %v255 = vld [vmem:[%s223 + $0x138] sm:$0xff]
                %256 = vst [vmem:[%s224 + $0x78] sm:$0xff] %v255
                %v257 = vld [vmem:[%s223 + $0x200] sm:$0xff]
                %258 = vst [vmem:[%s224 + $0x80] sm:$0xff] %v257
                %v259 = vld [vmem:[%s223 + $0x208] sm:$0xff]
                %260 = vst [vmem:[%s224 + $0x88] sm:$0xff] %v259
                %v261 = vld [vmem:[%s223 + $0x210] sm:$0xff]
                %262 = vst [vmem:[%s224 + $0x90] sm:$0xff] %v261
                %v263 = vld [vmem:[%s223 + $0x218] sm:$0xff]
                %264 = vst [vmem:[%s224 + $0x98] sm:$0xff] %v263
                %v265 = vld [vmem:[%s223 + $0x220] sm:$0xff]
                %266 = vst [vmem:[%s224 + $0xa0] sm:$0xff] %v265
                %v267 = vld [vmem:[%s223 + $0x228] sm:$0xff]
                %268 = vst [vmem:[%s224 + $0xa8] sm:$0xff] %v267
                %v269 = vld [vmem:[%s223 + $0x230] sm:$0xff]
                %270 = vst [vmem:[%s224 + $0xb0] sm:$0xff] %v269
                %v271 = vld [vmem:[%s223 + $0x238] sm:$0xff]
                %272 = vst [vmem:[%s224 + $0xb8] sm:$0xff] %v271
              $region53: #{tcn_forward.1} parent=47 // loop_footer
                %s222 = sadd.s32 1, %s218
              $region54: #{tcn_forward.1} parent=47 // loop_footer_branch
                %217 = sbr.rel target = $region50
              $region55: #{tcn_forward.1} parent=47 // loop_exit
                _
            $region48: #{tcn_forward.1} parent=43 // pred_fallthru
              _
            // Predicated region
            $region56: #{tcn_forward.1} parent=43 // pred_check
              _
            $region57: #{tcn_forward.1} parent=43 // pred_check_branch
              %274 = sbr.rel target = $region59
            $region58: #{tcn_forward.1} parent=43 // pred_region
              _
            $region59: #{tcn_forward.1} parent=43 // pred_fallthru
              _
          $region44: #{tcn_forward.1} parent=39 // pred_fallthru
            _
          %275 = vnop
        $region40: #{tcn_forward.1} parent=35 // pred_fallthru
          _
      $region36: #{tcn_forward.1} parent=5 // pred_fallthru
        _
      %p276 = scmp.le.s32.totalorder 1, %s12
      %p277 = scmp.lt.s32.totalorder %s12, 5
      %p278 = pnand %p276, %p277
      %p279 = pneg %p278
      // Predicated region
      $region60: #{tcn_forward.1} parent=5 // pred_check
        _
      $region61: #{tcn_forward.1} parent=5 // pred_check_branch
        %281 = sbr.rel (%p278) target = $region63
      $region62: #{tcn_forward.1} parent=5 // pred_region
        %s282 = ssub.s32 %s12, 1
        %s283 = sand.u32 %s25, 1
        %s284 = sand.u32 %s25, 1
        %s285 = smul.addr %s284, 192
        %s286 = scalar_lea.vmem [#allocation2], %s285
        // Predicated region
        $region64: #{tcn_forward.1} parent=62 // pred_check
          %p287 = pneg %p38
        $region65: #{tcn_forward.1} parent=62 // pred_check_branch
          %289 = sbr.rel (%p287) target = $region67
        $region66: #{tcn_forward.1} parent=62 // pred_region
          _
        $region67: #{tcn_forward.1} parent=62 // pred_fallthru
          _
        %s290 = sand.u32 %s25, 1
        %s291 = sand.u32 %s25, 1
        %s292 = smul.addr %s291, 192
        %s293 = scalar_lea.vmem [#allocation2], %s292
        %p294 = pneg %p38
        %p295 = pneg %p35
        %p296 = pneg %p59
        %p297 = pneg %p56
        %p298 = pneg %p80
        %p299 = pneg %p77
        %p300 = pneg %p101
        %p301 = pneg %p98
        %p302 = pneg %p122
        %p303 = pneg %p119
        %p304 = pneg %p143
        %p305 = pneg %p140
        %p306 = pneg %p169
        %p307 = pneg %p166
        %s308 = smul.u32 8, %s17
        %p309 = scmp.lt.s32.totalorder %s308, 31
        %s310 = scalar_select %p309, %s308, 31
        %s311 = smul.addr %s310, 2
        %s312 = scalar_lea.vmem %s6, %s311
        %s313 = smul.u32 8, %s17
        %s314 = smul.u32 8, %s17
        %p315 = scmp.lt.s32.totalorder %s314, 31
        %s316 = scalar_select %p315, %s314, 31
        %s317 = smul.addr %s316, 2
        %s318 = scalar_lea.vmem %s6, %s317
        %s319 = smul.u32 8, %s17
        %v320 = vld [vmem:[%s286] sm:$0xff]
        %v321 = vld [vmem:[%s286 + $0x8] sm:$0xff]
        %v322 = vld [vmem:[%s286 + $0x10] sm:$0xff]
        %v323 = vld [vmem:[%s286 + $0x18] sm:$0xff]
        %v324 = vld [vmem:[%s286 + $0x20] sm:$0xff]
        %v325 = vld [vmem:[%s286 + $0x28] sm:$0xff]
        %v326 = vld [vmem:[%s286 + $0x30] sm:$0xff]
        %v327 = vld [vmem:[%s286 + $0x38] sm:$0xff]
        %v328 = vld [vmem:[%s286 + $0x40] sm:$0xff]
        %v329 = vld [vmem:[%s286 + $0x48] sm:$0xff]
        %v330 = vld [vmem:[%s286 + $0x50] sm:$0xff]
        %v331 = vld [vmem:[%s286 + $0x58] sm:$0xff]
        %v332 = vld [vmem:[%s286 + $0x60] sm:$0xff]
        %v333 = vld [vmem:[%s286 + $0x68] sm:$0xff]
        %v334 = vld [vmem:[%s286 + $0x70] sm:$0xff]
        %v335 = vld [vmem:[%s286 + $0x78] sm:$0xff]
        %v336 = vld [vmem:[%s286 + $0x80] sm:$0xf]
        %v337 = vld [vmem:[%s286 + $0x88] sm:$0xf]
        %v338 = vld [vmem:[%s286 + $0x90] sm:$0xf]
        %v339 = vld [vmem:[%s286 + $0x98] sm:$0xf]
        %v340 = vld [vmem:[%s286 + $0xa0] sm:$0xf]
        %v341 = vld [vmem:[%s286 + $0xa8] sm:$0xf]
        %v342 = vld [vmem:[%s286 + $0xb0] sm:$0xf]
        %v343 = vld [vmem:[%s286 + $0xb8] sm:$0xf]
        %v344 = vlaneseq
        %v345 = vand.u32 %v344, 127
        %v346 = vadd.s32 %v345, 128
        %v347 = vadd.s32 %v345, 256
        %v348 = vadd.s32 %v345, 384
        %v349 = vadd.s32 %v345, 512
        %v350 = vadd.s32 %v345, 640
        %v351 = vadd.s32 %v345, 768
        %v352 = vadd.s32 %v345, 896
        %vm353 = vcmp.lt.s32.totalorder %v345, 0
        %v354 = vsub.s32 0, %v345
        %v355 = vsel %vm353, %v354, %v345
        %v356 = vshrl.u32 %v355, 4
        %v357 = vand.u32 %v355, 15
        %v358 = vsub.s32 0, %v357
        %v359 = vsel %vm353, %v358, %v357
        %vm360 = vcmp.lt.s32.totalorder %v346, 0
        %v361 = vsub.s32 0, %v346
        %v362 = vsel %vm360, %v361, %v346
        %v363 = vshrl.u32 %v362, 4
        %v364 = vand.u32 %v362, 15
        %v365 = vsub.s32 0, %v364
        %v366 = vsel %vm360, %v365, %v364
        %vm367 = vcmp.lt.s32.totalorder %v347, 0
        %v368 = vsub.s32 0, %v347
        %v369 = vsel %vm367, %v368, %v347
        %v370 = vshrl.u32 %v369, 4
        %v371 = vand.u32 %v369, 15
        %v372 = vsub.s32 0, %v371
        %v373 = vsel %vm367, %v372, %v371
        %vm374 = vcmp.lt.s32.totalorder %v348, 0
        %v375 = vsub.s32 0, %v348
        %v376 = vsel %vm374, %v375, %v348
        %v377 = vshrl.u32 %v376, 4
        %v378 = vand.u32 %v376, 15
        %v379 = vsub.s32 0, %v378
        %v380 = vsel %vm374, %v379, %v378
        %vm381 = vcmp.lt.s32.totalorder %v349, 0
        %v382 = vsub.s32 0, %v349
        %v383 = vsel %vm381, %v382, %v349
        %v384 = vshrl.u32 %v383, 4
        %v385 = vand.u32 %v383, 15
        %v386 = vsub.s32 0, %v385
        %v387 = vsel %vm381, %v386, %v385
        %vm388 = vcmp.lt.s32.totalorder %v350, 0
        %v389 = vsub.s32 0, %v350
        %v390 = vsel %vm388, %v389, %v350
        %v391 = vshrl.u32 %v390, 4
        %v392 = vand.u32 %v390, 15
        %v393 = vsub.s32 0, %v392
        %v394 = vsel %vm388, %v393, %v392
        %vm395 = vcmp.lt.s32.totalorder %v351, 0
        %v396 = vsub.s32 0, %v351
        %v397 = vsel %vm395, %v396, %v351
        %v398 = vshrl.u32 %v397, 4
        %v399 = vand.u32 %v397, 15
        %v400 = vsub.s32 0, %v399
        %v401 = vsel %vm395, %v400, %v399
        %vm402 = vcmp.lt.s32.totalorder %v352, 0
        %v403 = vsub.s32 0, %v352
        %v404 = vsel %vm402, %v403, %v352
        %v405 = vshrl.u32 %v404, 4
        %v406 = vand.u32 %v404, 15
        %v407 = vsub.s32 0, %v406
        %v408 = vsel %vm402, %v407, %v406
        %vm409 = vcmp.ne.s32.totalorder %v359, 0
        %vm410 = vcmp.ne.s32.totalorder %v366, 0
        %vm411 = vcmp.ne.s32.totalorder %v373, 0
        %vm412 = vcmp.ne.s32.totalorder %v380, 0
        %vm413 = vcmp.ne.s32.totalorder %v387, 0
        %vm414 = vcmp.ne.s32.totalorder %v394, 0
        %vm415 = vcmp.ne.s32.totalorder %v401, 0
        %vm416 = vcmp.ne.s32.totalorder %v408, 0
        %vm417 = vcmp.lt.s32.totalorder %v359, 0
        %vm418 = vcmp.lt.s32.totalorder %v366, 0
        %vm419 = vcmp.lt.s32.totalorder %v373, 0
        %vm420 = vcmp.lt.s32.totalorder %v380, 0
        %vm421 = vcmp.lt.s32.totalorder %v387, 0
        %vm422 = vcmp.lt.s32.totalorder %v394, 0
        %vm423 = vcmp.lt.s32.totalorder %v401, 0
        %vm424 = vcmp.lt.s32.totalorder %v408, 0
        %vm425 = vmand %vm417, %vm409
        %vm426 = vmand %vm418, %vm410
        %vm427 = vmand %vm419, %vm411
        %vm428 = vmand %vm420, %vm412
        %vm429 = vmand %vm421, %vm413
        %vm430 = vmand %vm422, %vm414
        %vm431 = vmand %vm423, %vm415
        %vm432 = vmand %vm424, %vm416
        %v433 = vadd.s32 %v359, 16
        %v434 = vadd.s32 %v366, 16
        %v435 = vadd.s32 %v373, 16
        %v436 = vadd.s32 %v380, 16
        %v437 = vadd.s32 %v387, 16
        %v438 = vadd.s32 %v394, 16
        %v439 = vadd.s32 %v401, 16
        %v440 = vadd.s32 %v408, 16
        %v441 = vsel %vm425, %v433, %v359
        %v442 = vsel %vm426, %v434, %v366
        %v443 = vsel %vm427, %v435, %v373
        %v444 = vsel %vm428, %v436, %v380
        %v445 = vsel %vm429, %v437, %v387
        %v446 = vsel %vm430, %v438, %v394
        %v447 = vsel %vm431, %v439, %v401
        %v448 = vsel %vm432, %v440, %v408
        %vm449 = vcmp.lt.s32.totalorder %v441, 15
        %vm450 = vcmp.lt.s32.totalorder %v442, 15
        %vm451 = vcmp.lt.s32.totalorder %v443, 15
        %vm452 = vcmp.lt.s32.totalorder %v444, 15
        %vm453 = vcmp.lt.s32.totalorder %v445, 15
        %vm454 = vcmp.lt.s32.totalorder %v446, 15
        %vm455 = vcmp.lt.s32.totalorder %v447, 15
        %vm456 = vcmp.lt.s32.totalorder %v448, 15
        %vm457 = vcmp.ge.s32.totalorder %v441, 1
        %vm458 = vcmp.ge.s32.totalorder %v442, 1
        %vm459 = vcmp.ge.s32.totalorder %v443, 1
        %vm460 = vcmp.ge.s32.totalorder %v444, 1
        %vm461 = vcmp.ge.s32.totalorder %v445, 1
        %vm462 = vcmp.ge.s32.totalorder %v446, 1
        %vm463 = vcmp.ge.s32.totalorder %v447, 1
        %vm464 = vcmp.ge.s32.totalorder %v448, 1
        %vm465 = vcmp.lt.s32.totalorder %v441, 14
        %vm466 = vcmp.lt.s32.totalorder %v442, 14
        %vm467 = vcmp.lt.s32.totalorder %v443, 14
        %vm468 = vcmp.lt.s32.totalorder %v444, 14
        %vm469 = vcmp.lt.s32.totalorder %v445, 14
        %vm470 = vcmp.lt.s32.totalorder %v446, 14
        %vm471 = vcmp.lt.s32.totalorder %v447, 14
        %vm472 = vcmp.lt.s32.totalorder %v448, 14
        %vm473 = vcmp.ge.s32.totalorder %v441, 2
        %vm474 = vcmp.ge.s32.totalorder %v442, 2
        %vm475 = vcmp.ge.s32.totalorder %v443, 2
        %vm476 = vcmp.ge.s32.totalorder %v444, 2
        %vm477 = vcmp.ge.s32.totalorder %v445, 2
        %vm478 = vcmp.ge.s32.totalorder %v446, 2
        %vm479 = vcmp.ge.s32.totalorder %v447, 2
        %vm480 = vcmp.ge.s32.totalorder %v448, 2
        %vm481 = vcmp.lt.s32.totalorder %v441, 12
        %vm482 = vcmp.lt.s32.totalorder %v442, 12
        %vm483 = vcmp.lt.s32.totalorder %v443, 12
        %vm484 = vcmp.lt.s32.totalorder %v444, 12
        %vm485 = vcmp.lt.s32.totalorder %v445, 12
        %vm486 = vcmp.lt.s32.totalorder %v446, 12
        %vm487 = vcmp.lt.s32.totalorder %v447, 12
        %vm488 = vcmp.lt.s32.totalorder %v448, 12
        %vm489 = vcmp.ge.s32.totalorder %v441, 4
        %vm490 = vcmp.ge.s32.totalorder %v442, 4
        %vm491 = vcmp.ge.s32.totalorder %v443, 4
        %vm492 = vcmp.ge.s32.totalorder %v444, 4
        %vm493 = vcmp.ge.s32.totalorder %v445, 4
        %vm494 = vcmp.ge.s32.totalorder %v446, 4
        %vm495 = vcmp.ge.s32.totalorder %v447, 4
        %vm496 = vcmp.ge.s32.totalorder %v448, 4
        %vm497 = vcmp.lt.s32.totalorder %v441, 8
        %vm498 = vcmp.lt.s32.totalorder %v442, 8
        %vm499 = vcmp.lt.s32.totalorder %v443, 8
        %vm500 = vcmp.lt.s32.totalorder %v444, 8
        %vm501 = vcmp.lt.s32.totalorder %v445, 8
        %vm502 = vcmp.lt.s32.totalorder %v446, 8
        %vm503 = vcmp.lt.s32.totalorder %v447, 8
        %vm504 = vcmp.lt.s32.totalorder %v448, 8
        %vm505 = vcmp.ge.s32.totalorder %v441, 8
        %vm506 = vcmp.ge.s32.totalorder %v442, 8
        %vm507 = vcmp.ge.s32.totalorder %v443, 8
        %vm508 = vcmp.ge.s32.totalorder %v444, 8
        %vm509 = vcmp.ge.s32.totalorder %v445, 8
        %vm510 = vcmp.ge.s32.totalorder %v446, 8
        %vm511 = vcmp.ge.s32.totalorder %v447, 8
        %vm512 = vcmp.ge.s32.totalorder %v448, 8
        %v513 = vld [vmem:[%s4] sm:$0xff]
        %v514 = vld [vmem:[%s4 + $0x8] sm:$0xff]
        %v515 = vld [vmem:[%s4 + $0x10] sm:$0xff]
        %v516 = vld [vmem:[%s4 + $0x18] sm:$0xff]
        %v517 = vld [vmem:[%s4 + $0x20] sm:$0xff]
        %v518 = vld [vmem:[%s4 + $0x28] sm:$0xff]
        %v519 = vld [vmem:[%s4 + $0x30] sm:$0xff]
        %v520 = vld [vmem:[%s4 + $0x38] sm:$0xff]
        %v521 = vld [vmem:[%s4 + $0x40] sm:$0xff]
        %v522 = vld [vmem:[%s4 + $0x48] sm:$0xff]
        %v523 = vld [vmem:[%s1] sm:$0xff]
        %v524 = vld [vmem:[%s1 + $0x8] sm:$0xff]
        %v525 = vld [vmem:[%s1 + $0x10] sm:$0xff]
        %v526 = vld [vmem:[%s1 + $0x18] sm:$0xff]
        %v527 = vld [vmem:[%s1 + $0x20] sm:$0xff]
        %v528 = vld [vmem:[%s1 + $0x28] sm:$0xff]
        %vm529 = vcmask 162816
        %v531 = vsel %vm529, %v523, 0
        %v534 = vsel %vm529, %v524, 0
        %v537 = vsel %vm529, %v525, 0
        %v540 = vsel %vm529, %v526, 0
        %v543 = vsel %vm529, %v527, 0
        %v546 = vsel %vm529, %v528, 0
        %vm548 = vcmask 1043456
        %v550 = vsel %vm548, %v336, 0
        %v553 = vsel %vm548, %v337, 0
        %v556 = vsel %vm548, %v338, 0
        %v559 = vsel %vm548, %v339, 0
        %v562 = vsel %vm548, %v340, 0
        %v565 = vsel %vm548, %v341, 0
        %v568 = vsel %vm548, %v342, 0
        %v571 = vsel %vm548, %v343, 0
        %573 = vmatprep.subr.mxu0 %v321
        %574 = vmatpush1.msra.mxu0 %v320
        %575 = vmatprep.subr.mxu0 %v329
        %576 = vmatpush1.msra.mxu0 %v328
        %577 = vmatprep.subr.mxu0 %v553
        %578 = vmatpush1.msra.mxu0 %v550
        %579 = vmatprep.subr.mxu0 0.0
        %580 = vmatpush1.msra.mxu0 0.0
        %581 = vmatprep.subr.mxu0 0.0
        %582 = vmatpush1.msra.mxu0 0.0
        %583 = vmatprep.subr.mxu0 0.0
        %584 = vmatpush1.msra.mxu0 0.0
        %585 = vmatprep.subr.mxu0 0.0
        %586 = vmatpush1.msra.mxu0 0.0
        %587 = vmatprep.subr.mxu0 0.0
        %588 = vmatpush1.msra.mxu0 0.0
        %589 = vmatprep.subr.mxu0 0.0
        %590 = vmatpush1.msra.mxu0 0.0
        %591 = vmatprep.subr.mxu0 0.0
        %592 = vmatpush1.msra.mxu0 0.0
        %593 = vmatprep.subr.mxu0 0.0
        %594 = vmatpush1.msra.mxu0 0.0
        %595 = vmatprep.subr.mxu0 0.0
        %596 = vmatpush1.msra.mxu0 0.0
        %597 = vmatprep.subr.mxu0 0.0
        %598 = vmatpush1.msra.mxu0 0.0
        %599 = vmatprep.subr.mxu0 0.0
        %600 = vmatpush1.msra.mxu0 0.0
        %601 = vmatprep.subr.mxu0 0.0
        %602 = vmatpush1.msra.mxu0 0.0
        %603 = vmatprep.subr.mxu0 0.0
        %604 = vmatpush1.msra.mxu0 0.0
        %605 = vmatprep.subr.mxu0 0.0
        %606 = vmatpush1.msra.mxu0 0.0
        %607 = vmatprep.subr.mxu0 0.0
        %608 = vmatpush1.msra.mxu0 0.0
        %609 = vmatprep.subr.mxu0 0.0
        %610 = vmatpush1.msra.mxu0 0.0
        %611 = vmatprep.subr.mxu0 0.0
        %612 = vmatpush1.msra.mxu0 0.0
        %613 = vmatprep.subr.mxu0 0.0
        %614 = vmatpush1.msra.mxu0 0.0
        %615 = vmatprep.subr.mxu0 0.0
        %616 = vmatpush1.msra.mxu0 0.0
        %617 = vmatprep.subr.mxu0 0.0
        %618 = vmatpush1.msra.mxu0 0.0
        %619 = vmatprep.subr.mxu0 0.0
        %620 = vmatpush1.msra.mxu0 0.0
        %621 = vmatprep.subr.mxu0 0.0
        %622 = vmatpush1.msra.mxu0 0.0
        %623 = vmatprep.subr.mxu0 0.0
        %624 = vmatpush1.msra.mxu0 0.0
        %625 = vmatprep.subr.mxu0 0.0
        %626 = vmatpush1.msra.mxu0 0.0
        %627 = vmatprep.subr.mxu0 0.0
        %628 = vmatpush1.msra.mxu0 0.0
        %629 = vmatprep.subr.mxu0 0.0
        %630 = vmatpush1.msra.mxu0 0.0
        %631 = vmatprep.subr.mxu0 0.0
        %632 = vmatpush1.msra.mxu0 0.0
        %633 = vmatprep.subr.mxu0 0.0
        %634 = vmatpush1.msra.mxu0 0.0
        %635 = vmatprep.subr.mxu0 0.0
        %636 = vmatpush1.msra.mxu0 0.0
        %637 = vmatprep.mubr.f32.mxu0 0.0
        %638 = vmatmul.mubr.f32.gmra.mrb[0].mxu0 %v531
        %v639 = vpop.f32.mrb[0].mxu0
        %v640 = vadd.f32 0.0, %v639
        %v641 = vpop.f32.mrb[0].mxu0
        %v642 = vadd.f32 0.0, %v641
        %643 = vmatprep.mubr.f32.mxu0 0.0
        %644 = vmatmul.mubr.f32.gmra.mrb[0].mxu0 %v534
        %v645 = vpop.f32.mrb[0].mxu0
        %v646 = vadd.f32 0.0, %v645
        %v647 = vpop.f32.mrb[0].mxu0
        %v648 = vadd.f32 0.0, %v647
        %649 = vmatprep.mubr.f32.mxu0 0.0
        %650 = vmatmul.mubr.f32.gmra.mrb[0].mxu0 %v537
        %v651 = vpop.f32.mrb[0].mxu0
        %v652 = vadd.f32 0.0, %v651
        %v653 = vpop.f32.mrb[0].mxu0
        %v654 = vadd.f32 0.0, %v653
        %655 = vmatprep.mubr.f32.mxu0 0.0
        %656 = vmatmul.mubr.f32.gmra.mrb[0].mxu0 %v540
        %v657 = vpop.f32.mrb[0].mxu0
        %v658 = vadd.f32 0.0, %v657
        %v659 = vpop.f32.mrb[0].mxu0
        %v660 = vadd.f32 0.0, %v659
        %661 = vmatprep.mubr.f32.mxu0 0.0
        %662 = vmatmul.mubr.f32.gmra.mrb[0].mxu0 %v543
        %v663 = vpop.f32.mrb[0].mxu0
        %v664 = vadd.f32 0.0, %v663
        %v665 = vpop.f32.mrb[0].mxu0
        %v666 = vadd.f32 0.0, %v665
        %667 = vmatprep.mubr.f32.mxu0 0.0
        %668 = vmatmul.mubr.f32.gmra.mrb[0].mxu0 %v546
        %v669 = vpop.f32.mrb[0].mxu0
        %v670 = vadd.f32 0.0, %v669
        %v671 = vpop.f32.mrb[0].mxu0
        %v672 = vadd.f32 0.0, %v671
        %673 = vdwg.mxu0
        %674 = vmatprep.subr.mxu0 %v323
        %675 = vmatpush1.msra.mxu0 %v322
        %676 = vmatprep.subr.mxu0 %v331
        %677 = vmatpush1.msra.mxu0 %v330
        %678 = vmatprep.subr.mxu0 %v559
        %679 = vmatpush1.msra.mxu0 %v556
        %680 = vmatprep.subr.mxu0 0.0
        %681 = vmatpush1.msra.mxu0 0.0
        %682 = vmatprep.subr.mxu0 0.0
        %683 = vmatpush1.msra.mxu0 0.0
        %684 = vmatprep.subr.mxu0 0.0
        %685 = vmatpush1.msra.mxu0 0.0
        %686 = vmatprep.subr.mxu0 0.0
        %687 = vmatpush1.msra.mxu0 0.0
        %688 = vmatprep.subr.mxu0 0.0
        %689 = vmatpush1.msra.mxu0 0.0
        %690 = vmatprep.subr.mxu0 0.0
        %691 = vmatpush1.msra.mxu0 0.0
        %692 = vmatprep.subr.mxu0 0.0
        %693 = vmatpush1.msra.mxu0 0.0
        %694 = vmatprep.subr.mxu0 0.0
        %695 = vmatpush1.msra.mxu0 0.0
        %696 = vmatprep.subr.mxu0 0.0
        %697 = vmatpush1.msra.mxu0 0.0
        %698 = vmatprep.subr.mxu0 0.0
        %699 = vmatpush1.msra.mxu0 0.0
        %700 = vmatprep.subr.mxu0 0.0
        %701 = vmatpush1.msra.mxu0 0.0
        %702 = vmatprep.subr.mxu0 0.0
        %703 = vmatpush1.msra.mxu0 0.0
        %704 = vmatprep.subr.mxu0 0.0
        %705 = vmatpush1.msra.mxu0 0.0
        %706 = vmatprep.subr.mxu0 0.0
        %707 = vmatpush1.msra.mxu0 0.0
        %708 = vmatprep.subr.mxu0 0.0
        %709 = vmatpush1.msra.mxu0 0.0
        %710 = vmatprep.subr.mxu0 0.0
        %711 = vmatpush1.msra.mxu0 0.0
        %712 = vmatprep.subr.mxu0 0.0
        %713 = vmatpush1.msra.mxu0 0.0
        %714 = vmatprep.subr.mxu0 0.0
        %715 = vmatpush1.msra.mxu0 0.0
        %716 = vmatprep.subr.mxu0 0.0
        %717 = vmatpush1.msra.mxu0 0.0
        %718 = vmatprep.subr.mxu0 0.0
        %719 = vmatpush1.msra.mxu0 0.0
        %720 = vmatprep.subr.mxu0 0.0
        %721 = vmatpush1.msra.mxu0 0.0
        %722 = vmatprep.subr.mxu0 0.0
        %723 = vmatpush1.msra.mxu0 0.0
        %724 = vmatprep.subr.mxu0 0.0
        %725 = vmatpush1.msra.mxu0 0.0
        %726 = vmatprep.subr.mxu0 0.0
        %727 = vmatpush1.msra.mxu0 0.0
        %728 = vmatprep.subr.mxu0 0.0
        %729 = vmatpush1.msra.mxu0 0.0
        %730 = vmatprep.subr.mxu0 0.0
        %731 = vmatpush1.msra.mxu0 0.0
        %732 = vmatprep.subr.mxu0 0.0
        %733 = vmatpush1.msra.mxu0 0.0
        %734 = vmatprep.subr.mxu0 0.0
        %735 = vmatpush1.msra.mxu0 0.0
        %736 = vmatprep.subr.mxu0 0.0
        %737 = vmatpush1.msra.mxu0 0.0
        %738 = vmatprep.mubr.f32.mxu0 0.0
        %739 = vmatmul.mubr.f32.gmra.mrb[0].mxu0 %v531
        %v740 = vpop.f32.mrb[0].mxu0
        %v741 = vadd.f32 0.0, %v740
        %v742 = vpop.f32.mrb[0].mxu0
        %v743 = vadd.f32 0.0, %v742
        %744 = vmatprep.mubr.f32.mxu0 0.0
        %745 = vmatmul.mubr.f32.gmra.mrb[0].mxu0 %v534
        %v746 = vpop.f32.mrb[0].mxu0
        %v747 = vadd.f32 0.0, %v746
        %v748 = vpop.f32.mrb[0].mxu0
        %v749 = vadd.f32 0.0, %v748
        %750 = vmatprep.mubr.f32.mxu0 0.0
        %751 = vmatmul.mubr.f32.gmra.mrb[0].mxu0 %v537
        %v752 = vpop.f32.mrb[0].mxu0
        %v753 = vadd.f32 0.0, %v752
        %v754 = vpop.f32.mrb[0].mxu0
        %v755 = vadd.f32 0.0, %v754
        %756 = vmatprep.mubr.f32.mxu0 0.0
        %757 = vmatmul.mubr.f32.gmra.mrb[0].mxu0 %v540
        %v758 = vpop.f32.mrb[0].mxu0
        %v759 = vadd.f32 0.0, %v758
        %v760 = vpop.f32.mrb[0].mxu0
        %v761 = vadd.f32 0.0, %v760
        %762 = vmatprep.mubr.f32.mxu0 0.0
        %763 = vmatmul.mubr.f32.gmra.mrb[0].mxu0 %v543
        %v764 = vpop.f32.mrb[0].mxu0
        %v765 = vadd.f32 0.0, %v764
        %v766 = vpop.f32.mrb[0].mxu0
        %v767 = vadd.f32 0.0, %v766
        %768 = vmatprep.mubr.f32.mxu0 0.0
        %769 = vmatmul.mubr.f32.gmra.mrb[0].mxu0 %v546
        %v770 = vpop.f32.mrb[0].mxu0
        %v771 = vadd.f32 0.0, %v770
        %v772 = vpop.f32.mrb[0].mxu0
        %v773 = vadd.f32 0.0, %v772
        %774 = vdwg.mxu0
        %775 = vmatprep.subr.mxu0 %v325
        %776 = vmatpush1.msra.mxu0 %v324
        %777 = vmatprep.subr.mxu0 %v333
        %778 = vmatpush1.msra.mxu0 %v332
        %779 = vmatprep.subr.mxu0 %v565
        %780 = vmatpush1.msra.mxu0 %v562
        %781 = vmatprep.subr.mxu0 0.0
        %782 = vmatpush1.msra.mxu0 0.0
        %783 = vmatprep.subr.mxu0 0.0
        %784 = vmatpush1.msra.mxu0 0.0
        %785 = vmatprep.subr.mxu0 0.0
        %786 = vmatpush1.msra.mxu0 0.0
        %787 = vmatprep.subr.mxu0 0.0
        %788 = vmatpush1.msra.mxu0 0.0
        %789 = vmatprep.subr.mxu0 0.0
        %790 = vmatpush1.msra.mxu0 0.0
        %791 = vmatprep.subr.mxu0 0.0
        %792 = vmatpush1.msra.mxu0 0.0
        %793 = vmatprep.subr.mxu0 0.0
        %794 = vmatpush1.msra.mxu0 0.0
        %795 = vmatprep.subr.mxu0 0.0
        %796 = vmatpush1.msra.mxu0 0.0
        %797 = vmatprep.subr.mxu0 0.0
        %798 = vmatpush1.msra.mxu0 0.0
        %799 = vmatprep.subr.mxu0 0.0
        %800 = vmatpush1.msra.mxu0 0.0
        %801 = vmatprep.subr.mxu0 0.0
        %802 = vmatpush1.msra.mxu0 0.0
        %803 = vmatprep.subr.mxu0 0.0
        %804 = vmatpush1.msra.mxu0 0.0
        %805 = vmatprep.subr.mxu0 0.0
        %806 = vmatpush1.msra.mxu0 0.0
        %807 = vmatprep.subr.mxu0 0.0
        %808 = vmatpush1.msra.mxu0 0.0
        %809 = vmatprep.subr.mxu0 0.0
        %810 = vmatpush1.msra.mxu0 0.0
        %811 = vmatprep.subr.mxu0 0.0
        %812 = vmatpush1.msra.mxu0 0.0
        %813 = vmatprep.subr.mxu0 0.0
        %814 = vmatpush1.msra.mxu0 0.0
        %815 = vmatprep.subr.mxu0 0.0
        %816 = vmatpush1.msra.mxu0 0.0
        %817 = vmatprep.subr.mxu0 0.0
        %818 = vmatpush1.msra.mxu0 0.0
        %819 = vmatprep.subr.mxu0 0.0
        %820 = vmatpush1.msra.mxu0 0.0
        %821 = vmatprep.subr.mxu0 0.0
        %822 = vmatpush1.msra.mxu0 0.0
        %823 = vmatprep.subr.mxu0 0.0
        %824 = vmatpush1.msra.mxu0 0.0
        %825 = vmatprep.subr.mxu0 0.0
        %826 = vmatpush1.msra.mxu0 0.0
        %827 = vmatprep.subr.mxu0 0.0
        %828 = vmatpush1.msra.mxu0 0.0
        %829 = vmatprep.subr.mxu0 0.0
        %830 = vmatpush1.msra.mxu0 0.0
        %831 = vmatprep.subr.mxu0 0.0
        %832 = vmatpush1.msra.mxu0 0.0
        %833 = vmatprep.subr.mxu0 0.0
        %834 = vmatpush1.msra.mxu0 0.0
        %835 = vmatprep.subr.mxu0 0.0
        %836 = vmatpush1.msra.mxu0 0.0
        %837 = vmatprep.subr.mxu0 0.0
        %838 = vmatpush1.msra.mxu0 0.0
        %839 = vmatprep.mubr.f32.mxu0 0.0
        %840 = vmatmul.mubr.f32.gmra.mrb[0].mxu0 %v531
        %v841 = vpop.f32.mrb[0].mxu0
        %v842 = vadd.f32 0.0, %v841
        %v843 = vpop.f32.mrb[0].mxu0
        %v844 = vadd.f32 0.0, %v843
        %845 = vmatprep.mubr.f32.mxu0 0.0
        %846 = vmatmul.mubr.f32.gmra.mrb[0].mxu0 %v534
        %v847 = vpop.f32.mrb[0].mxu0
        %v848 = vadd.f32 0.0, %v847
        %v849 = vpop.f32.mrb[0].mxu0
        %v850 = vadd.f32 0.0, %v849
        %851 = vmatprep.mubr.f32.mxu0 0.0
        %852 = vmatmul.mubr.f32.gmra.mrb[0].mxu0 %v537
        %v853 = vpop.f32.mrb[0].mxu0
        %v854 = vadd.f32 0.0, %v853
        %v855 = vpop.f32.mrb[0].mxu0
        %v856 = vadd.f32 0.0, %v855
        %857 = vmatprep.mubr.f32.mxu0 0.0
        %858 = vmatmul.mubr.f32.gmra.mrb[0].mxu0 %v540
        %v859 = vpop.f32.mrb[0].mxu0
        %v860 = vadd.f32 0.0, %v859
        %v861 = vpop.f32.mrb[0].mxu0
        %v862 = vadd.f32 0.0, %v861
        %863 = vmatprep.mubr.f32.mxu0 0.0
        %864 = vmatmul.mubr.f32.gmra.mrb[0].mxu0 %v543
        %v865 = vpop.f32.mrb[0].mxu0
        %v866 = vadd.f32 0.0, %v865
        %v867 = vpop.f32.mrb[0].mxu0
        %v868 = vadd.f32 0.0, %v867
        %869 = vmatprep.mubr.f32.mxu0 0.0
        %870 = vmatmul.mubr.f32.gmra.mrb[0].mxu0 %v546
        %v871 = vpop.f32.mrb[0].mxu0
        %v872 = vadd.f32 0.0, %v871
        %v873 = vpop.f32.mrb[0].mxu0
        %v874 = vadd.f32 0.0, %v873
        %875 = vdwg.mxu0
        %876 = vmatprep.subr.mxu0 %v327
        %877 = vmatpush1.msra.mxu0 %v326
        %878 = vmatprep.subr.mxu0 %v335
        %879 = vmatpush1.msra.mxu0 %v334
        %880 = vmatprep.subr.mxu0 %v571
        %881 = vmatpush1.msra.mxu0 %v568
        %882 = vmatprep.subr.mxu0 0.0
        %883 = vmatpush1.msra.mxu0 0.0
        %884 = vmatprep.subr.mxu0 0.0
        %885 = vmatpush1.msra.mxu0 0.0
        %886 = vmatprep.subr.mxu0 0.0
        %887 = vmatpush1.msra.mxu0 0.0
        %888 = vmatprep.subr.mxu0 0.0
        %889 = vmatpush1.msra.mxu0 0.0
        %890 = vmatprep.subr.mxu0 0.0
        %891 = vmatpush1.msra.mxu0 0.0
        %892 = vmatprep.subr.mxu0 0.0
        %893 = vmatpush1.msra.mxu0 0.0
        %894 = vmatprep.subr.mxu0 0.0
        %895 = vmatpush1.msra.mxu0 0.0
        %896 = vmatprep.subr.mxu0 0.0
        %897 = vmatpush1.msra.mxu0 0.0
        %898 = vmatprep.subr.mxu0 0.0
        %899 = vmatpush1.msra.mxu0 0.0
        %900 = vmatprep.subr.mxu0 0.0
        %901 = vmatpush1.msra.mxu0 0.0
        %902 = vmatprep.subr.mxu0 0.0
        %903 = vmatpush1.msra.mxu0 0.0
        %904 = vmatprep.subr.mxu0 0.0
        %905 = vmatpush1.msra.mxu0 0.0
        %906 = vmatprep.subr.mxu0 0.0
        %907 = vmatpush1.msra.mxu0 0.0
        %908 = vmatprep.subr.mxu0 0.0
        %909 = vmatpush1.msra.mxu0 0.0
        %910 = vmatprep.subr.mxu0 0.0
        %911 = vmatpush1.msra.mxu0 0.0
        %912 = vmatprep.subr.mxu0 0.0
        %913 = vmatpush1.msra.mxu0 0.0
        %914 = vmatprep.subr.mxu0 0.0
        %915 = vmatpush1.msra.mxu0 0.0
        %916 = vmatprep.subr.mxu0 0.0
        %917 = vmatpush1.msra.mxu0 0.0
        %918 = vmatprep.subr.mxu0 0.0
        %919 = vmatpush1.msra.mxu0 0.0
        %920 = vmatprep.subr.mxu0 0.0
        %921 = vmatpush1.msra.mxu0 0.0
        %922 = vmatprep.subr.mxu0 0.0
        %923 = vmatpush1.msra.mxu0 0.0
        %924 = vmatprep.subr.mxu0 0.0
        %925 = vmatpush1.msra.mxu0 0.0
        %926 = vmatprep.subr.mxu0 0.0
        %927 = vmatpush1.msra.mxu0 0.0
        %928 = vmatprep.subr.mxu0 0.0
        %929 = vmatpush1.msra.mxu0 0.0
        %930 = vmatprep.subr.mxu0 0.0
        %931 = vmatpush1.msra.mxu0 0.0
        %932 = vmatprep.subr.mxu0 0.0
        %933 = vmatpush1.msra.mxu0 0.0
        %934 = vmatprep.subr.mxu0 0.0
        %935 = vmatpush1.msra.mxu0 0.0
        %936 = vmatprep.subr.mxu0 0.0
        %937 = vmatpush1.msra.mxu0 0.0
        %938 = vmatprep.subr.mxu0 0.0
        %939 = vmatpush1.msra.mxu0 0.0
        %940 = vmatprep.mubr.f32.mxu0 0.0
        %941 = vmatmul.mubr.f32.gmra.mrb[0].mxu0 %v531
        %v942 = vpop.f32.mrb[0].mxu0
        %v943 = vadd.f32 0.0, %v942
        %v944 = vpop.f32.mrb[0].mxu0
        %v945 = vadd.f32 0.0, %v944
        %946 = vmatprep.mubr.f32.mxu0 0.0
        %947 = vmatmul.mubr.f32.gmra.mrb[0].mxu0 %v534
        %v948 = vpop.f32.mrb[0].mxu0
        %v949 = vadd.f32 0.0, %v948
        %v950 = vpop.f32.mrb[0].mxu0
        %v951 = vadd.f32 0.0, %v950
        %952 = vmatprep.mubr.f32.mxu0 0.0
        %953 = vmatmul.mubr.f32.gmra.mrb[0].mxu0 %v537
        %v954 = vpop.f32.mrb[0].mxu0
        %v955 = vadd.f32 0.0, %v954
        %v956 = vpop.f32.mrb[0].mxu0
        %v957 = vadd.f32 0.0, %v956
        %958 = vmatprep.mubr.f32.mxu0 0.0
        %959 = vmatmul.mubr.f32.gmra.mrb[0].mxu0 %v540
        %v960 = vpop.f32.mrb[0].mxu0
        %v961 = vadd.f32 0.0, %v960
        %v962 = vpop.f32.mrb[0].mxu0
        %v963 = vadd.f32 0.0, %v962
        %964 = vmatprep.mubr.f32.mxu0 0.0
        %965 = vmatmul.mubr.f32.gmra.mrb[0].mxu0 %v543
        %v966 = vpop.f32.mrb[0].mxu0
        %v967 = vadd.f32 0.0, %v966
        %v968 = vpop.f32.mrb[0].mxu0
        %v969 = vadd.f32 0.0, %v968
        %970 = vmatprep.mubr.f32.mxu0 0.0
        %971 = vmatmul.mubr.f32.gmra.mrb[0].mxu0 %v546
        %v972 = vpop.f32.mrb[0].mxu0
        %v973 = vadd.f32 0.0, %v972
        %v974 = vpop.f32.mrb[0].mxu0
        %v975 = vadd.f32 0.0, %v974
        %976 = vdwg.mxu0
        %977 = vrot.lane.b32.xlu0 %v640, 1
        %v978 = vpop.permute.xlu0 %977
        %979 = vrot.lane.b32.xlu0 %v646, 1
        %v980 = vpop.permute.xlu0 %979
        %981 = vrot.lane.b32.xlu0 %v642, 1
        %v982 = vpop.permute.xlu0 %981
        %983 = vrot.lane.b32.xlu0 %v648, 1
        %v984 = vpop.permute.xlu0 %983
        %985 = vrot.lane.b32.xlu0 %v741, 1
        %v986 = vpop.permute.xlu0 %985
        %987 = vrot.lane.b32.xlu0 %v747, 1
        %v988 = vpop.permute.xlu0 %987
        %989 = vrot.lane.b32.xlu0 %v743, 1
        %v990 = vpop.permute.xlu0 %989
        %991 = vrot.lane.b32.xlu0 %v749, 1
        %v992 = vpop.permute.xlu0 %991
        %993 = vrot.lane.b32.xlu0 %v842, 1
        %v994 = vpop.permute.xlu0 %993
        %995 = vrot.lane.b32.xlu0 %v848, 1
        %v996 = vpop.permute.xlu0 %995
        %997 = vrot.lane.b32.xlu0 %v844, 1
        %v998 = vpop.permute.xlu0 %997
        %999 = vrot.lane.b32.xlu0 %v850, 1
        %v1000 = vpop.permute.xlu0 %999
        %1001 = vrot.lane.b32.xlu0 %v943, 1
        %v1002 = vpop.permute.xlu0 %1001
        %1003 = vrot.lane.b32.xlu0 %v949, 1
        %v1004 = vpop.permute.xlu0 %1003
        %1005 = vrot.lane.b32.xlu0 %v945, 1
        %v1006 = vpop.permute.xlu0 %1005
        %1007 = vrot.lane.b32.xlu0 %v951, 1
        %v1008 = vpop.permute.xlu0 %1007
        %vm1009 = vcmp.lt.s32.totalorder %v345, 1
        %v1010 = vsel %vm1009, %v1002, %v1006
        %v1011 = vsel %vm1009, %v1004, %v1008
        %v1012 = vsel %vm1009, %v998, %v1002
        %v1013 = vsel %vm1009, %v1000, %v1004
        %v1014 = vsel %vm1009, %v994, %v998
        %v1015 = vsel %vm1009, %v996, %v1000
        %v1016 = vsel %vm1009, %v990, %v994
        %v1017 = vsel %vm1009, %v992, %v996
        %v1018 = vsel %vm1009, %v986, %v990
        %v1019 = vsel %vm1009, %v988, %v992
        %v1020 = vsel %vm1009, %v982, %v986
        %v1021 = vsel %vm1009, %v984, %v988
        %v1022 = vsel %vm1009, %v978, %v982
        %v1023 = vsel %vm1009, %v980, %v984
        %v1024 = vsel %vm1009, %v1006, %v978
        %v1025 = vsel %vm1009, %v1008, %v980
        %v1026 = vsel %vm457, 1, 0
        %v1027 = vsel %vm458, 1, 0
        %v1028 = vsel %vm459, 1, 0
        %v1029 = vsel %vm460, 1, 0
        %v1030 = vsel %vm461, 1, 0
        %v1031 = vsel %vm462, 1, 0
        %v1032 = vsel %vm463, 1, 0
        %v1033 = vsel %vm464, 1, 0
        %vm1034 = vcmp.eq.s32.totalorder %v1026, 1
        %vm1035 = vcmp.eq.s32.totalorder %v1027, 1
        %vm1036 = vcmp.eq.s32.totalorder %v1028, 1
        %vm1037 = vcmp.eq.s32.totalorder %v1029, 1
        %vm1038 = vcmp.eq.s32.totalorder %v1030, 1
        %vm1039 = vcmp.eq.s32.totalorder %v1031, 1
        %vm1040 = vcmp.eq.s32.totalorder %v1032, 1
        %vm1041 = vcmp.eq.s32.totalorder %v1033, 1
        %v1042 = vsel %vm1034, %v1024, 0.0
        %v1043 = vsel %vm1035, %v1022, 0.0
        %v1044 = vsel %vm1036, %v1020, 0.0
        %v1045 = vsel %vm1037, %v1018, 0.0
        %v1046 = vsel %vm1038, %v1016, 0.0
        %v1047 = vsel %vm1039, %v1014, 0.0
        %v1048 = vsel %vm1040, %v1012, 0.0
        %v1049 = vsel %vm1041, %v1010, 0.0
        %v1050 = vsel %vm1034, %v1025, 0.0
        %v1051 = vsel %vm1035, %v1023, 0.0
        %v1052 = vsel %vm1036, %v1021, 0.0
        %v1053 = vsel %vm1037, %v1019, 0.0
        %v1054 = vsel %vm1038, %v1017, 0.0
        %v1055 = vsel %vm1039, %v1015, 0.0
        %v1056 = vsel %vm1040, %v1013, 0.0
        %v1057 = vsel %vm1041, %v1011, 0.0
        %v1058 = vadd.f32 %v1042, %v652
        %v1059 = vadd.f32 %v1043, %v654
        %v1060 = vadd.f32 %v1044, %v753
        %v1061 = vadd.f32 %v1045, %v755
        %v1062 = vadd.f32 %v1046, %v854
        %v1063 = vadd.f32 %v1047, %v856
        %v1064 = vadd.f32 %v1048, %v955
        %v1065 = vadd.f32 %v1049, %v957
        %v1066 = vadd.f32 %v1050, %v658
        %v1067 = vadd.f32 %v1051, %v660
        %v1068 = vadd.f32 %v1052, %v759
        %v1069 = vadd.f32 %v1053, %v761
        %v1070 = vadd.f32 %v1054, %v860
        %v1071 = vadd.f32 %v1055, %v862
        %v1072 = vadd.f32 %v1056, %v961
        %v1073 = vadd.f32 %v1057, %v963
        %1074 = vrot.lane.b32.xlu0 %v664, 127
        %v1075 = vpop.permute.xlu0 %1074
        %1076 = vrot.lane.b32.xlu0 %v670, 127
        %v1077 = vpop.permute.xlu0 %1076
        %1078 = vrot.lane.b32.xlu0 %v666, 127
        %v1079 = vpop.permute.xlu0 %1078
        %1080 = vrot.lane.b32.xlu0 %v672, 127
        %v1081 = vpop.permute.xlu0 %1080
        %1082 = vrot.lane.b32.xlu0 %v765, 127
        %v1083 = vpop.permute.xlu0 %1082
        %1084 = vrot.lane.b32.xlu0 %v771, 127
        %v1085 = vpop.permute.xlu0 %1084
        %1086 = vrot.lane.b32.xlu0 %v767, 127
        %v1087 = vpop.permute.xlu0 %1086
        %1088 = vrot.lane.b32.xlu0 %v773, 127
        %v1089 = vpop.permute.xlu0 %1088
        %1090 = vrot.lane.b32.xlu0 %v866, 127
        %v1091 = vpop.permute.xlu0 %1090
        %1092 = vrot.lane.b32.xlu0 %v872, 127
        %v1093 = vpop.permute.xlu0 %1092
        %1094 = vrot.lane.b32.xlu0 %v868, 127
        %v1095 = vpop.permute.xlu0 %1094
        %1096 = vrot.lane.b32.xlu0 %v874, 127
        %v1097 = vpop.permute.xlu0 %1096
        %1098 = vrot.lane.b32.xlu0 %v967, 127
        %v1099 = vpop.permute.xlu0 %1098
        %1100 = vrot.lane.b32.xlu0 %v973, 127
        %v1101 = vpop.permute.xlu0 %1100
        %1102 = vrot.lane.b32.xlu0 %v969, 127
        %v1103 = vpop.permute.xlu0 %1102
        %1104 = vrot.lane.b32.xlu0 %v975, 127
        %v1105 = vpop.permute.xlu0 %1104
        %vm1106 = vcmp.lt.s32.totalorder %v345, 127
        %v1107 = vsel %vm1106, %v1099, %v1103
        %v1108 = vsel %vm1106, %v1101, %v1105
        %v1109 = vsel %vm1106, %v1095, %v1099
        %v1110 = vsel %vm1106, %v1097, %v1101
        %v1111 = vsel %vm1106, %v1091, %v1095
        %v1112 = vsel %vm1106, %v1093, %v1097
        %v1113 = vsel %vm1106, %v1087, %v1091
        %v1114 = vsel %vm1106, %v1089, %v1093
        %v1115 = vsel %vm1106, %v1083, %v1087
        %v1116 = vsel %vm1106, %v1085, %v1089
        %v1117 = vsel %vm1106, %v1079, %v1083
        %v1118 = vsel %vm1106, %v1081, %v1085
        %v1119 = vsel %vm1106, %v1075, %v1079
        %v1120 = vsel %vm1106, %v1077, %v1081
        %v1121 = vsel %vm1106, %v1103, %v1075
        %v1122 = vsel %vm1106, %v1105, %v1077
        %v1123 = vsel %vm449, 1, 0
        %v1124 = vsel %vm450, 1, 0
        %v1125 = vsel %vm451, 1, 0
        %v1126 = vsel %vm452, 1, 0
        %v1127 = vsel %vm453, 1, 0
        %v1128 = vsel %vm454, 1, 0
        %v1129 = vsel %vm455, 1, 0
        %v1130 = vsel %vm456, 1, 0
        %vm1131 = vcmp.eq.s32.totalorder %v1123, 1
        %vm1132 = vcmp.eq.s32.totalorder %v1124, 1
        %vm1133 = vcmp.eq.s32.totalorder %v1125, 1
        %vm1134 = vcmp.eq.s32.totalorder %v1126, 1
        %vm1135 = vcmp.eq.s32.totalorder %v1127, 1
        %vm1136 = vcmp.eq.s32.totalorder %v1128, 1
        %vm1137 = vcmp.eq.s32.totalorder %v1129, 1
        %vm1138 = vcmp.eq.s32.totalorder %v1130, 1
        %v1139 = vsel %vm1131, %v1119, 0.0
        %v1140 = vsel %vm1132, %v1117, 0.0
        %v1141 = vsel %vm1133, %v1115, 0.0
        %v1142 = vsel %vm1134, %v1113, 0.0
        %v1143 = vsel %vm1135, %v1111, 0.0
        %v1144 = vsel %vm1136, %v1109, 0.0
        %v1145 = vsel %vm1137, %v1107, 0.0
        %v1146 = vsel %vm1138, %v1121, 0.0
        %v1147 = vsel %vm1131, %v1120, 0.0
        %v1148 = vsel %vm1132, %v1118, 0.0
        %v1149 = vsel %vm1133, %v1116, 0.0
        %v1150 = vsel %vm1134, %v1114, 0.0
        %v1151 = vsel %vm1135, %v1112, 0.0
        %v1152 = vsel %vm1136, %v1110, 0.0
        %v1153 = vsel %vm1137, %v1108, 0.0
        %v1154 = vsel %vm1138, %v1122, 0.0
        %v1155 = vadd.f32 %v1058, %v1139
        %v1156 = vadd.f32 %v1059, %v1140
        %v1157 = vadd.f32 %v1060, %v1141
        %v1158 = vadd.f32 %v1061, %v1142
        %v1159 = vadd.f32 %v1062, %v1143
        %v1160 = vadd.f32 %v1063, %v1144
        %v1161 = vadd.f32 %v1064, %v1145
        %v1162 = vadd.f32 %v1065, %v1146
        %v1163 = vadd.f32 %v1066, %v1147
        %v1164 = vadd.f32 %v1067, %v1148
        %v1165 = vadd.f32 %v1068, %v1149
        %v1166 = vadd.f32 %v1069, %v1150
        %v1167 = vadd.f32 %v1070, %v1151
        %v1168 = vadd.f32 %v1071, %v1152
        %v1169 = vadd.f32 %v1072, %v1153
        %v1170 = vadd.f32 %v1073, %v1154
        %1172 = vset.pattern.permute.xlu0 0
        %1173 = vperm.xlu0 %1172, %v513
        %v1174 = vpop.permute.xlu0 %1173
        %v1176 = vadd.f32 %v1155, %v1174
        %v1177 = vadd.f32 %v1156, %v1174
        %v1178 = vadd.f32 %v1157, %v1174
        %v1179 = vadd.f32 %v1158, %v1174
        %v1180 = vadd.f32 %v1159, %v1174
        %v1181 = vadd.f32 %v1160, %v1174
        %v1182 = vadd.f32 %v1161, %v1174
        %v1183 = vadd.f32 %v1162, %v1174
        %v1184 = vmax.f32 %v1176, 0.0
        %v1185 = vmax.f32 %v1177, 0.0
        %v1186 = vmax.f32 %v1178, 0.0
        %v1187 = vmax.f32 %v1179, 0.0
        %v1188 = vmax.f32 %v1180, 0.0
        %v1189 = vmax.f32 %v1181, 0.0
        %v1190 = vmax.f32 %v1182, 0.0
        %v1191 = vmax.f32 %v1183, 0.0
        %1193 = vset.pattern.permute.xlu0 0
        %1194 = vperm.xlu0 %1193, %v515
        %v1195 = vpop.permute.xlu0 %1194
        %v1197 = vadd.f32 %v1163, %v1195
        %v1198 = vadd.f32 %v1164, %v1195
        %v1199 = vadd.f32 %v1165, %v1195
        %v1200 = vadd.f32 %v1166, %v1195
        %v1201 = vadd.f32 %v1167, %v1195
        %v1202 = vadd.f32 %v1168, %v1195
        %v1203 = vadd.f32 %v1169, %v1195
        %v1204 = vadd.f32 %v1170, %v1195
        %v1205 = vld [vmem:[%s3] sm:$0xff]
        %v1206 = vld [vmem:[%s3 + $0x8] sm:$0xff]
        %v1207 = vld [vmem:[%s3 + $0x10] sm:$0xff]
        %vm1208 = vcmask 23552
        %v1210 = vsel %vm1208, %v1205, 0
        %v1213 = vsel %vm1208, %v1206, 0
        %v1216 = vsel %vm1208, %v1207, 0
        %vm1218 = vcmask 1042432
        %v1220 = vsel %vm1218, %v1184, 0
        %v1223 = vsel %vm1218, %v1185, 0
        %v1226 = vsel %vm1218, %v1186, 0
        %v1229 = vsel %vm1218, %v1187, 0
        %v1232 = vsel %vm1218, %v1188, 0
        %v1235 = vsel %vm1218, %v1189, 0
        %v1238 = vsel %vm1218, %v1190, 0
        %v1241 = vsel %vm1218, %v1191, 0
        %1243 = vmatprep.subr.mxu0 %v1223
        %1244 = vmatpush1.msra.mxu0 %v1220
        %1245 = vmatprep.subr.mxu0 0.0
        %1246 = vmatpush1.msra.mxu0 0.0
        %1247 = vmatprep.subr.mxu0 0.0
        %1248 = vmatpush1.msra.mxu0 0.0
        %1249 = vmatprep.subr.mxu0 0.0
        %1250 = vmatpush1.msra.mxu0 0.0
        %1251 = vmatprep.subr.mxu0 0.0
        %1252 = vmatpush1.msra.mxu0 0.0
        %1253 = vmatprep.subr.mxu0 0.0
        %1254 = vmatpush1.msra.mxu0 0.0
        %1255 = vmatprep.subr.mxu0 0.0
        %1256 = vmatpush1.msra.mxu0 0.0
        %1257 = vmatprep.subr.mxu0 0.0
        %1258 = vmatpush1.msra.mxu0 0.0
        %1259 = vmatprep.subr.mxu0 0.0
        %1260 = vmatpush1.msra.mxu0 0.0
        %1261 = vmatprep.subr.mxu0 0.0
        %1262 = vmatpush1.msra.mxu0 0.0
        %1263 = vmatprep.subr.mxu0 0.0
        %1264 = vmatpush1.msra.mxu0 0.0
        %1265 = vmatprep.subr.mxu0 0.0
        %1266 = vmatpush1.msra.mxu0 0.0
        %1267 = vmatprep.subr.mxu0 0.0
        %1268 = vmatpush1.msra.mxu0 0.0
        %1269 = vmatprep.subr.mxu0 0.0
        %1270 = vmatpush1.msra.mxu0 0.0
        %1271 = vmatprep.subr.mxu0 0.0
        %1272 = vmatpush1.msra.mxu0 0.0
        %1273 = vmatprep.subr.mxu0 0.0
        %1274 = vmatpush1.msra.mxu0 0.0
        %1275 = vmatprep.subr.mxu0 0.0
        %1276 = vmatpush1.msra.mxu0 0.0
        %1277 = vmatprep.subr.mxu0 0.0
        %1278 = vmatpush1.msra.mxu0 0.0
        %1279 = vmatprep.subr.mxu0 0.0
        %1280 = vmatpush1.msra.mxu0 0.0
        %1281 = vmatprep.subr.mxu0 0.0
        %1282 = vmatpush1.msra.mxu0 0.0
        %1283 = vmatprep.subr.mxu0 0.0
        %1284 = vmatpush1.msra.mxu0 0.0
        %1285 = vmatprep.subr.mxu0 0.0
        %1286 = vmatpush1.msra.mxu0 0.0
        %1287 = vmatprep.subr.mxu0 0.0
        %1288 = vmatpush1.msra.mxu0 0.0
        %1289 = vmatprep.subr.mxu0 0.0
        %1290 = vmatpush1.msra.mxu0 0.0
        %1291 = vmatprep.subr.mxu0 0.0
        %1292 = vmatpush1.msra.mxu0 0.0
        %1293 = vmatprep.subr.mxu0 0.0
        %1294 = vmatpush1.msra.mxu0 0.0
        %1295 = vmatprep.subr.mxu0 0.0
        %1296 = vmatpush1.msra.mxu0 0.0
        %1297 = vmatprep.subr.mxu0 0.0
        %1298 = vmatpush1.msra.mxu0 0.0
        %1299 = vmatprep.subr.mxu0 0.0
        %1300 = vmatpush1.msra.mxu0 0.0
        %1301 = vmatprep.subr.mxu0 0.0
        %1302 = vmatpush1.msra.mxu0 0.0
        %1303 = vmatprep.subr.mxu0 0.0
        %1304 = vmatpush1.msra.mxu0 0.0
        %1305 = vmatprep.subr.mxu0 0.0
        %1306 = vmatpush1.msra.mxu0 0.0
        %1307 = vmatprep.mubr.f32.mxu0 0.0
        %1308 = vmatmul.mubr.f32.gmra.mrb[0].mxu0 %v1210
        %v1309 = vpop.f32.mrb[0].mxu0
        %v1310 = vadd.f32 0.0, %v1309
        %v1311 = vpop.f32.mrb[0].mxu0
        %v1312 = vadd.f32 0.0, %v1311
        %1313 = vmatprep.mubr.f32.mxu0 0.0
        %1314 = vmatmul.mubr.f32.gmra.mrb[0].mxu0 %v1213
        %v1315 = vpop.f32.mrb[0].mxu0
        %v1316 = vadd.f32 0.0, %v1315
        %v1317 = vpop.f32.mrb[0].mxu0
        %v1318 = vadd.f32 0.0, %v1317
        %1319 = vmatprep.mubr.f32.mxu0 0.0
        %1320 = vmatmul.mubr.f32.gmra.mrb[0].mxu0 %v1216
        %v1321 = vpop.f32.mrb[0].mxu0
        %v1322 = vadd.f32 0.0, %v1321
        %v1323 = vpop.f32.mrb[0].mxu0
        %v1324 = vadd.f32 0.0, %v1323
        %1325 = vdwg.mxu0
        %1326 = vmatprep.subr.mxu0 %v1229
        %1327 = vmatpush1.msra.mxu0 %v1226
        %1328 = vmatprep.subr.mxu0 0.0
        %1329 = vmatpush1.msra.mxu0 0.0
        %1330 = vmatprep.subr.mxu0 0.0
        %1331 = vmatpush1.msra.mxu0 0.0
        %1332 = vmatprep.subr.mxu0 0.0
        %1333 = vmatpush1.msra.mxu0 0.0
        %1334 = vmatprep.subr.mxu0 0.0
        %1335 = vmatpush1.msra.mxu0 0.0
        %1336 = vmatprep.subr.mxu0 0.0
        %1337 = vmatpush1.msra.mxu0 0.0
        %1338 = vmatprep.subr.mxu0 0.0
        %1339 = vmatpush1.msra.mxu0 0.0
        %1340 = vmatprep.subr.mxu0 0.0
        %1341 = vmatpush1.msra.mxu0 0.0
        %1342 = vmatprep.subr.mxu0 0.0
        %1343 = vmatpush1.msra.mxu0 0.0
        %1344 = vmatprep.subr.mxu0 0.0
        %1345 = vmatpush1.msra.mxu0 0.0
        %1346 = vmatprep.subr.mxu0 0.0
        %1347 = vmatpush1.msra.mxu0 0.0
        %1348 = vmatprep.subr.mxu0 0.0
        %1349 = vmatpush1.msra.mxu0 0.0
        %1350 = vmatprep.subr.mxu0 0.0
        %1351 = vmatpush1.msra.mxu0 0.0
        %1352 = vmatprep.subr.mxu0 0.0
        %1353 = vmatpush1.msra.mxu0 0.0
        %1354 = vmatprep.subr.mxu0 0.0
        %1355 = vmatpush1.msra.mxu0 0.0
        %1356 = vmatprep.subr.mxu0 0.0
        %1357 = vmatpush1.msra.mxu0 0.0
        %1358 = vmatprep.subr.mxu0 0.0
        %1359 = vmatpush1.msra.mxu0 0.0
        %1360 = vmatprep.subr.mxu0 0.0
        %1361 = vmatpush1.msra.mxu0 0.0
        %1362 = vmatprep.subr.mxu0 0.0
        %1363 = vmatpush1.msra.mxu0 0.0
        %1364 = vmatprep.subr.mxu0 0.0
        %1365 = vmatpush1.msra.mxu0 0.0
        %1366 = vmatprep.subr.mxu0 0.0
        %1367 = vmatpush1.msra.mxu0 0.0
        %1368 = vmatprep.subr.mxu0 0.0
        %1369 = vmatpush1.msra.mxu0 0.0
        %1370 = vmatprep.subr.mxu0 0.0
        %1371 = vmatpush1.msra.mxu0 0.0
        %1372 = vmatprep.subr.mxu0 0.0
        %1373 = vmatpush1.msra.mxu0 0.0
        %1374 = vmatprep.subr.mxu0 0.0
        %1375 = vmatpush1.msra.mxu0 0.0
        %1376 = vmatprep.subr.mxu0 0.0
        %1377 = vmatpush1.msra.mxu0 0.0
        %1378 = vmatprep.subr.mxu0 0.0
        %1379 = vmatpush1.msra.mxu0 0.0
        %1380 = vmatprep.subr.mxu0 0.0
        %1381 = vmatpush1.msra.mxu0 0.0
        %1382 = vmatprep.subr.mxu0 0.0
        %1383 = vmatpush1.msra.mxu0 0.0
        %1384 = vmatprep.subr.mxu0 0.0
        %1385 = vmatpush1.msra.mxu0 0.0
        %1386 = vmatprep.subr.mxu0 0.0
        %1387 = vmatpush1.msra.mxu0 0.0
        %1388 = vmatprep.subr.mxu0 0.0
        %1389 = vmatpush1.msra.mxu0 0.0
        %1390 = vmatprep.mubr.f32.mxu0 0.0
        %1391 = vmatmul.mubr.f32.gmra.mrb[0].mxu0 %v1210
        %v1392 = vpop.f32.mrb[0].mxu0
        %v1393 = vadd.f32 0.0, %v1392
        %v1394 = vpop.f32.mrb[0].mxu0
        %v1395 = vadd.f32 0.0, %v1394
        %1396 = vmatprep.mubr.f32.mxu0 0.0
        %1397 = vmatmul.mubr.f32.gmra.mrb[0].mxu0 %v1213
        %v1398 = vpop.f32.mrb[0].mxu0
        %v1399 = vadd.f32 0.0, %v1398
        %v1400 = vpop.f32.mrb[0].mxu0
        %v1401 = vadd.f32 0.0, %v1400
        %1402 = vmatprep.mubr.f32.mxu0 0.0
        %1403 = vmatmul.mubr.f32.gmra.mrb[0].mxu0 %v1216
        %v1404 = vpop.f32.mrb[0].mxu0
        %v1405 = vadd.f32 0.0, %v1404
        %v1406 = vpop.f32.mrb[0].mxu0
        %v1407 = vadd.f32 0.0, %v1406
        %1408 = vdwg.mxu0
        %1409 = vmatprep.subr.mxu0 %v1235
        %1410 = vmatpush1.msra.mxu0 %v1232
        %1411 = vmatprep.subr.mxu0 0.0
        %1412 = vmatpush1.msra.mxu0 0.0
        %1413 = vmatprep.subr.mxu0 0.0
        %1414 = vmatpush1.msra.mxu0 0.0
        %1415 = vmatprep.subr.mxu0 0.0
        %1416 = vmatpush1.msra.mxu0 0.0
        %1417 = vmatprep.subr.mxu0 0.0
        %1418 = vmatpush1.msra.mxu0 0.0
        %1419 = vmatprep.subr.mxu0 0.0
        %1420 = vmatpush1.msra.mxu0 0.0
        %1421 = vmatprep.subr.mxu0 0.0
        %1422 = vmatpush1.msra.mxu0 0.0
        %1423 = vmatprep.subr.mxu0 0.0
        %1424 = vmatpush1.msra.mxu0 0.0
        %1425 = vmatprep.subr.mxu0 0.0
        %1426 = vmatpush1.msra.mxu0 0.0
        %1427 = vmatprep.subr.mxu0 0.0
        %1428 = vmatpush1.msra.mxu0 0.0
        %1429 = vmatprep.subr.mxu0 0.0
        %1430 = vmatpush1.msra.mxu0 0.0
        %1431 = vmatprep.subr.mxu0 0.0
        %1432 = vmatpush1.msra.mxu0 0.0
        %1433 = vmatprep.subr.mxu0 0.0
        %1434 = vmatpush1.msra.mxu0 0.0
        %1435 = vmatprep.subr.mxu0 0.0
        %1436 = vmatpush1.msra.mxu0 0.0
        %1437 = vmatprep.subr.mxu0 0.0
        %1438 = vmatpush1.msra.mxu0 0.0
        %1439 = vmatprep.subr.mxu0 0.0
        %1440 = vmatpush1.msra.mxu0 0.0
        %1441 = vmatprep.subr.mxu0 0.0
        %1442 = vmatpush1.msra.mxu0 0.0
        %1443 = vmatprep.subr.mxu0 0.0
        %1444 = vmatpush1.msra.mxu0 0.0
        %1445 = vmatprep.subr.mxu0 0.0
        %1446 = vmatpush1.msra.mxu0 0.0
        %1447 = vmatprep.subr.mxu0 0.0
        %1448 = vmatpush1.msra.mxu0 0.0
        %1449 = vmatprep.subr.mxu0 0.0
        %1450 = vmatpush1.msra.mxu0 0.0
        %1451 = vmatprep.subr.mxu0 0.0
        %1452 = vmatpush1.msra.mxu0 0.0
        %1453 = vmatprep.subr.mxu0 0.0
        %1454 = vmatpush1.msra.mxu0 0.0
        %1455 = vmatprep.subr.mxu0 0.0
        %1456 = vmatpush1.msra.mxu0 0.0
        %1457 = vmatprep.subr.mxu0 0.0
        %1458 = vmatpush1.msra.mxu0 0.0
        %1459 = vmatprep.subr.mxu0 0.0
        %1460 = vmatpush1.msra.mxu0 0.0
        %1461 = vmatprep.subr.mxu0 0.0
        %1462 = vmatpush1.msra.mxu0 0.0
        %1463 = vmatprep.subr.mxu0 0.0
        %1464 = vmatpush1.msra.mxu0 0.0
        %1465 = vmatprep.subr.mxu0 0.0
        %1466 = vmatpush1.msra.mxu0 0.0
        %1467 = vmatprep.subr.mxu0 0.0
        %1468 = vmatpush1.msra.mxu0 0.0
        %1469 = vmatprep.subr.mxu0 0.0
        %1470 = vmatpush1.msra.mxu0 0.0
        %1471 = vmatprep.subr.mxu0 0.0
        %1472 = vmatpush1.msra.mxu0 0.0
        %1473 = vmatprep.mubr.f32.mxu0 0.0
        %1474 = vmatmul.mubr.f32.gmra.mrb[0].mxu0 %v1210
        %v1475 = vpop.f32.mrb[0].mxu0
        %v1476 = vadd.f32 0.0, %v1475
        %v1477 = vpop.f32.mrb[0].mxu0
        %v1478 = vadd.f32 0.0, %v1477
        %1479 = vmatprep.mubr.f32.mxu0 0.0
        %1480 = vmatmul.mubr.f32.gmra.mrb[0].mxu0 %v1213
        %v1481 = vpop.f32.mrb[0].mxu0
        %v1482 = vadd.f32 0.0, %v1481
        %v1483 = vpop.f32.mrb[0].mxu0
        %v1484 = vadd.f32 0.0, %v1483
        %1485 = vmatprep.mubr.f32.mxu0 0.0
        %1486 = vmatmul.mubr.f32.gmra.mrb[0].mxu0 %v1216
        %v1487 = vpop.f32.mrb[0].mxu0
        %v1488 = vadd.f32 0.0, %v1487
        %v1489 = vpop.f32.mrb[0].mxu0
        %v1490 = vadd.f32 0.0, %v1489
        %1491 = vdwg.mxu0
        %1492 = vmatprep.subr.mxu0 %v1241
        %1493 = vmatpush1.msra.mxu0 %v1238
        %1494 = vmatprep.subr.mxu0 0.0
        %1495 = vmatpush1.msra.mxu0 0.0
        %1496 = vmatprep.subr.mxu0 0.0
        %1497 = vmatpush1.msra.mxu0 0.0
        %1498 = vmatprep.subr.mxu0 0.0
        %1499 = vmatpush1.msra.mxu0 0.0
        %1500 = vmatprep.subr.mxu0 0.0
        %1501 = vmatpush1.msra.mxu0 0.0
        %1502 = vmatprep.subr.mxu0 0.0
        %1503 = vmatpush1.msra.mxu0 0.0
        %1504 = vmatprep.subr.mxu0 0.0
        %1505 = vmatpush1.msra.mxu0 0.0
        %1506 = vmatprep.subr.mxu0 0.0
        %1507 = vmatpush1.msra.mxu0 0.0
        %1508 = vmatprep.subr.mxu0 0.0
        %1509 = vmatpush1.msra.mxu0 0.0
        %1510 = vmatprep.subr.mxu0 0.0
        %1511 = vmatpush1.msra.mxu0 0.0
        %1512 = vmatprep.subr.mxu0 0.0
        %1513 = vmatpush1.msra.mxu0 0.0
        %1514 = vmatprep.subr.mxu0 0.0
        %1515 = vmatpush1.msra.mxu0 0.0
        %1516 = vmatprep.subr.mxu0 0.0
        %1517 = vmatpush1.msra.mxu0 0.0
        %1518 = vmatprep.subr.mxu0 0.0
        %1519 = vmatpush1.msra.mxu0 0.0
        %1520 = vmatprep.subr.mxu0 0.0
        %1521 = vmatpush1.msra.mxu0 0.0
        %1522 = vmatprep.subr.mxu0 0.0
        %1523 = vmatpush1.msra.mxu0 0.0
        %1524 = vmatprep.subr.mxu0 0.0
        %1525 = vmatpush1.msra.mxu0 0.0
        %1526 = vmatprep.subr.mxu0 0.0
        %1527 = vmatpush1.msra.mxu0 0.0
        %1528 = vmatprep.subr.mxu0 0.0
        %1529 = vmatpush1.msra.mxu0 0.0
        %1530 = vmatprep.subr.mxu0 0.0
        %1531 = vmatpush1.msra.mxu0 0.0
        %1532 = vmatprep.subr.mxu0 0.0
        %1533 = vmatpush1.msra.mxu0 0.0
        %1534 = vmatprep.subr.mxu0 0.0
        %1535 = vmatpush1.msra.mxu0 0.0
        %1536 = vmatprep.subr.mxu0 0.0
        %1537 = vmatpush1.msra.mxu0 0.0
        %1538 = vmatprep.subr.mxu0 0.0
        %1539 = vmatpush1.msra.mxu0 0.0
        %1540 = vmatprep.subr.mxu0 0.0
        %1541 = vmatpush1.msra.mxu0 0.0
        %1542 = vmatprep.subr.mxu0 0.0
        %1543 = vmatpush1.msra.mxu0 0.0
        %1544 = vmatprep.subr.mxu0 0.0
        %1545 = vmatpush1.msra.mxu0 0.0
        %1546 = vmatprep.subr.mxu0 0.0
        %1547 = vmatpush1.msra.mxu0 0.0
        %1548 = vmatprep.subr.mxu0 0.0
        %1549 = vmatpush1.msra.mxu0 0.0
        %1550 = vmatprep.subr.mxu0 0.0
        %1551 = vmatpush1.msra.mxu0 0.0
        %1552 = vmatprep.subr.mxu0 0.0
        %1553 = vmatpush1.msra.mxu0 0.0
        %1554 = vmatprep.subr.mxu0 0.0
        %1555 = vmatpush1.msra.mxu0 0.0
        %1556 = vmatprep.mubr.f32.mxu0 0.0
        %1557 = vmatmul.mubr.f32.gmra.mrb[0].mxu0 %v1210
        %v1558 = vpop.f32.mrb[0].mxu0
        %v1559 = vadd.f32 0.0, %v1558
        %v1560 = vpop.f32.mrb[0].mxu0
        %v1561 = vadd.f32 0.0, %v1560
        %1562 = vmatprep.mubr.f32.mxu0 0.0
        %1563 = vmatmul.mubr.f32.gmra.mrb[0].mxu0 %v1213
        %v1564 = vpop.f32.mrb[0].mxu0
        %v1565 = vadd.f32 0.0, %v1564
        %v1566 = vpop.f32.mrb[0].mxu0
        %v1567 = vadd.f32 0.0, %v1566
        %1568 = vmatprep.mubr.f32.mxu0 0.0
        %1569 = vmatmul.mubr.f32.gmra.mrb[0].mxu0 %v1216
        %v1570 = vpop.f32.mrb[0].mxu0
        %v1571 = vadd.f32 0.0, %v1570
        %v1572 = vpop.f32.mrb[0].mxu0
        %v1573 = vadd.f32 0.0, %v1572
        %1574 = vdwg.mxu0
        %1575 = vrot.lane.b32.xlu0 %v1310, 1
        %v1576 = vpop.permute.xlu0 %1575
        %1577 = vrot.lane.b32.xlu0 %v1312, 1
        %v1578 = vpop.permute.xlu0 %1577
        %1579 = vrot.lane.b32.xlu0 %v1393, 1
        %v1580 = vpop.permute.xlu0 %1579
        %1581 = vrot.lane.b32.xlu0 %v1395, 1
        %v1582 = vpop.permute.xlu0 %1581
        %1583 = vrot.lane.b32.xlu0 %v1476, 1
        %v1584 = vpop.permute.xlu0 %1583
        %1585 = vrot.lane.b32.xlu0 %v1478, 1
        %v1586 = vpop.permute.xlu0 %1585
        %1587 = vrot.lane.b32.xlu0 %v1559, 1
        %v1588 = vpop.permute.xlu0 %1587
        %1589 = vrot.lane.b32.xlu0 %v1561, 1
        %v1590 = vpop.permute.xlu0 %1589
        %v1591 = vsel %vm1009, %v1588, %v1590
        %v1592 = vsel %vm1009, %v1586, %v1588
        %v1593 = vsel %vm1009, %v1584, %v1586
        %v1594 = vsel %vm1009, %v1582, %v1584
        %v1595 = vsel %vm1009, %v1580, %v1582
        %v1596 = vsel %vm1009, %v1578, %v1580
        %v1597 = vsel %vm1009, %v1576, %v1578
        %v1598 = vsel %vm1009, %v1590, %v1576
        %v1599 = vsel %vm1034, %v1598, 0.0
        %v1600 = vsel %vm1035, %v1597, 0.0
        %v1601 = vsel %vm1036, %v1596, 0.0
        %v1602 = vsel %vm1037, %v1595, 0.0
        %v1603 = vsel %vm1038, %v1594, 0.0
        %v1604 = vsel %vm1039, %v1593, 0.0
        %v1605 = vsel %vm1040, %v1592, 0.0
        %v1606 = vsel %vm1041, %v1591, 0.0
        %v1607 = vadd.f32 %v1599, %v1316
        %v1608 = vadd.f32 %v1600, %v1318
        %v1609 = vadd.f32 %v1601, %v1399
        %v1610 = vadd.f32 %v1602, %v1401
        %v1611 = vadd.f32 %v1603, %v1482
        %v1612 = vadd.f32 %v1604, %v1484
        %v1613 = vadd.f32 %v1605, %v1565
        %v1614 = vadd.f32 %v1606, %v1567
        %1615 = vrot.lane.b32.xlu0 %v1322, 127
        %v1616 = vpop.permute.xlu0 %1615
        %1617 = vrot.lane.b32.xlu0 %v1324, 127
        %v1618 = vpop.permute.xlu0 %1617
        %1619 = vrot.lane.b32.xlu0 %v1405, 127
        %v1620 = vpop.permute.xlu0 %1619
        %1621 = vrot.lane.b32.xlu0 %v1407, 127
        %v1622 = vpop.permute.xlu0 %1621
        %1623 = vrot.lane.b32.xlu0 %v1488, 127
        %v1624 = vpop.permute.xlu0 %1623
        %1625 = vrot.lane.b32.xlu0 %v1490, 127
        %v1626 = vpop.permute.xlu0 %1625
        %1627 = vrot.lane.b32.xlu0 %v1571, 127
        %v1628 = vpop.permute.xlu0 %1627
        %1629 = vrot.lane.b32.xlu0 %v1573, 127
        %v1630 = vpop.permute.xlu0 %1629
        %v1631 = vsel %vm1106, %v1628, %v1630
        %v1632 = vsel %vm1106, %v1626, %v1628
        %v1633 = vsel %vm1106, %v1624, %v1626
        %v1634 = vsel %vm1106, %v1622, %v1624
        %v1635 = vsel %vm1106, %v1620, %v1622
        %v1636 = vsel %vm1106, %v1618, %v1620
        %v1637 = vsel %vm1106, %v1616, %v1618
        %v1638 = vsel %vm1106, %v1630, %v1616
        %v1639 = vsel %vm1131, %v1637, 0.0
        %v1640 = vsel %vm1132, %v1636, 0.0
        %v1641 = vsel %vm1133, %v1635, 0.0
        %v1642 = vsel %vm1134, %v1634, 0.0
        %v1643 = vsel %vm1135, %v1633, 0.0
        %v1644 = vsel %vm1136, %v1632, 0.0
        %v1645 = vsel %vm1137, %v1631, 0.0
        %v1646 = vsel %vm1138, %v1638, 0.0
        %v1647 = vadd.f32 %v1607, %v1639
        %v1648 = vadd.f32 %v1608, %v1640
        %v1649 = vadd.f32 %v1609, %v1641
        %v1650 = vadd.f32 %v1610, %v1642
        %v1651 = vadd.f32 %v1611, %v1643
        %v1652 = vadd.f32 %v1612, %v1644
        %v1653 = vadd.f32 %v1613, %v1645
        %v1654 = vadd.f32 %v1614, %v1646
        %1656 = vset.pattern.permute.xlu0 0
        %1657 = vperm.xlu0 %1656, %v514
        %v1658 = vpop.permute.xlu0 %1657
        %v1660 = vadd.f32 %v1647, %v1658
        %v1661 = vadd.f32 %v1648, %v1658
        %v1662 = vadd.f32 %v1649, %v1658
        %v1663 = vadd.f32 %v1650, %v1658
        %v1664 = vadd.f32 %v1651, %v1658
        %v1665 = vadd.f32 %v1652, %v1658
        %v1666 = vadd.f32 %v1653, %v1658
        %v1667 = vadd.f32 %v1654, %v1658
        %v1668 = vlaneseq
        %v1669 = vshrl.u32 %v1668, 7
        %v1670 = vsub.s32 0, %v1669
        %v1671 = vrot.slane %v1660, %v1670
        %v1672 = vlaneseq
        %v1673 = vshrl.u32 %v1672, 7
        %v1674 = vsub.s32 0, %v1673
        %v1675 = vrot.slane %v1661, %v1674
        %v1676 = vlaneseq
        %v1677 = vshrl.u32 %v1676, 7
        %v1678 = vsub.s32 0, %v1677
        %v1679 = vrot.slane %v1662, %v1678
        %v1680 = vlaneseq
        %v1681 = vshrl.u32 %v1680, 7
        %v1682 = vsub.s32 0, %v1681
        %v1683 = vrot.slane %v1663, %v1682
        %v1684 = vlaneseq
        %v1685 = vshrl.u32 %v1684, 7
        %v1686 = vsub.s32 0, %v1685
        %v1687 = vrot.slane %v1664, %v1686
        %v1688 = vlaneseq
        %v1689 = vshrl.u32 %v1688, 7
        %v1690 = vsub.s32 0, %v1689
        %v1691 = vrot.slane %v1665, %v1690
        %v1692 = vlaneseq
        %v1693 = vshrl.u32 %v1692, 7
        %v1694 = vsub.s32 0, %v1693
        %v1695 = vrot.slane %v1666, %v1694
        %v1696 = vlaneseq
        %v1697 = vshrl.u32 %v1696, 7
        %v1698 = vsub.s32 0, %v1697
        %v1699 = vrot.slane %v1667, %v1698
        %v1700 = vadd.f32 %v1671, %v1197
        %v1701 = vadd.f32 %v1675, %v1198
        %v1702 = vadd.f32 %v1679, %v1199
        %v1703 = vadd.f32 %v1683, %v1200
        %v1704 = vadd.f32 %v1687, %v1201
        %v1705 = vadd.f32 %v1691, %v1202
        %v1706 = vadd.f32 %v1695, %v1203
        %v1707 = vadd.f32 %v1699, %v1204
        %v1708 = vmax.f32 %v1700, 0.0
        %v1709 = vmax.f32 %v1701, 0.0
        %v1710 = vmax.f32 %v1702, 0.0
        %v1711 = vmax.f32 %v1703, 0.0
        %v1712 = vmax.f32 %v1704, 0.0
        %v1713 = vmax.f32 %v1705, 0.0
        %v1714 = vmax.f32 %v1706, 0.0
        %v1715 = vmax.f32 %v1707, 0.0
        %v1716 = vld [vmem:[%s2] sm:$0xff]
        %v1717 = vld [vmem:[%s2 + $0x8] sm:$0xff]
        %v1718 = vld [vmem:[%s2 + $0x10] sm:$0xff]
        %v1720 = vsel %vm1208, %v1716, 0
        %v1723 = vsel %vm1208, %v1717, 0
        %v1726 = vsel %vm1208, %v1718, 0
        %v1729 = vsel %vm1218, %v1708, 0
        %v1732 = vsel %vm1218, %v1709, 0
        %v1735 = vsel %vm1218, %v1710, 0
        %v1738 = vsel %vm1218, %v1711, 0
        %v1741 = vsel %vm1218, %v1712, 0
        %v1744 = vsel %vm1218, %v1713, 0
        %v1747 = vsel %vm1218, %v1714, 0
        %v1750 = vsel %vm1218, %v1715, 0
        %1752 = vmatprep.subr.mxu0 %v1732
        %1753 = vmatpush1.msra.mxu0 %v1729
        %1754 = vmatprep.subr.mxu0 0.0
        %1755 = vmatpush1.msra.mxu0 0.0
        %1756 = vmatprep.subr.mxu0 0.0
        %1757 = vmatpush1.msra.mxu0 0.0
        %1758 = vmatprep.subr.mxu0 0.0
        %1759 = vmatpush1.msra.mxu0 0.0
        %1760 = vmatprep.subr.mxu0 0.0
        %1761 = vmatpush1.msra.mxu0 0.0
        %1762 = vmatprep.subr.mxu0 0.0
        %1763 = vmatpush1.msra.mxu0 0.0
        %1764 = vmatprep.subr.mxu0 0.0
        %1765 = vmatpush1.msra.mxu0 0.0
        %1766 = vmatprep.subr.mxu0 0.0
        %1767 = vmatpush1.msra.mxu0 0.0
        %1768 = vmatprep.subr.mxu0 0.0
        %1769 = vmatpush1.msra.mxu0 0.0
        %1770 = vmatprep.subr.mxu0 0.0
        %1771 = vmatpush1.msra.mxu0 0.0
        %1772 = vmatprep.subr.mxu0 0.0
        %1773 = vmatpush1.msra.mxu0 0.0
        %1774 = vmatprep.subr.mxu0 0.0
        %1775 = vmatpush1.msra.mxu0 0.0
        %1776 = vmatprep.subr.mxu0 0.0
        %1777 = vmatpush1.msra.mxu0 0.0
        %1778 = vmatprep.subr.mxu0 0.0
        %1779 = vmatpush1.msra.mxu0 0.0
        %1780 = vmatprep.subr.mxu0 0.0
        %1781 = vmatpush1.msra.mxu0 0.0
        %1782 = vmatprep.subr.mxu0 0.0
        %1783 = vmatpush1.msra.mxu0 0.0
        %1784 = vmatprep.subr.mxu0 0.0
        %1785 = vmatpush1.msra.mxu0 0.0
        %1786 = vmatprep.subr.mxu0 0.0
        %1787 = vmatpush1.msra.mxu0 0.0
        %1788 = vmatprep.subr.mxu0 0.0
        %1789 = vmatpush1.msra.mxu0 0.0
        %1790 = vmatprep.subr.mxu0 0.0
        %1791 = vmatpush1.msra.mxu0 0.0
        %1792 = vmatprep.subr.mxu0 0.0
        %1793 = vmatpush1.msra.mxu0 0.0
        %1794 = vmatprep.subr.mxu0 0.0
        %1795 = vmatpush1.msra.mxu0 0.0
        %1796 = vmatprep.subr.mxu0 0.0
        %1797 = vmatpush1.msra.mxu0 0.0
        %1798 = vmatprep.subr.mxu0 0.0
        %1799 = vmatpush1.msra.mxu0 0.0
        %1800 = vmatprep.subr.mxu0 0.0
        %1801 = vmatpush1.msra.mxu0 0.0
        %1802 = vmatprep.subr.mxu0 0.0
        %1803 = vmatpush1.msra.mxu0 0.0
        %1804 = vmatprep.subr.mxu0 0.0
        %1805 = vmatpush1.msra.mxu0 0.0
        %1806 = vmatprep.subr.mxu0 0.0
        %1807 = vmatpush1.msra.mxu0 0.0
        %1808 = vmatprep.subr.mxu0 0.0
        %1809 = vmatpush1.msra.mxu0 0.0
        %1810 = vmatprep.subr.mxu0 0.0
        %1811 = vmatpush1.msra.mxu0 0.0
        %1812 = vmatprep.subr.mxu0 0.0
        %1813 = vmatpush1.msra.mxu0 0.0
        %1814 = vmatprep.subr.mxu0 0.0
        %1815 = vmatpush1.msra.mxu0 0.0
        %1816 = vmatprep.mubr.f32.mxu0 0.0
        %1817 = vmatmul.mubr.f32.gmra.mrb[0].mxu0 %v1720
        %v1818 = vpop.f32.mrb[0].mxu0
        %v1819 = vadd.f32 0.0, %v1818
        %v1820 = vpop.f32.mrb[0].mxu0
        %v1821 = vadd.f32 0.0, %v1820
        %1822 = vmatprep.mubr.f32.mxu0 0.0
        %1823 = vmatmul.mubr.f32.gmra.mrb[0].mxu0 %v1723
        %v1824 = vpop.f32.mrb[0].mxu0
        %v1825 = vadd.f32 0.0, %v1824
        %v1826 = vpop.f32.mrb[0].mxu0
        %v1827 = vadd.f32 0.0, %v1826
        %1828 = vmatprep.mubr.f32.mxu0 0.0
        %1829 = vmatmul.mubr.f32.gmra.mrb[0].mxu0 %v1726
        %v1830 = vpop.f32.mrb[0].mxu0
        %v1831 = vadd.f32 0.0, %v1830
        %v1832 = vpop.f32.mrb[0].mxu0
        %v1833 = vadd.f32 0.0, %v1832
        %1834 = vdwg.mxu0
        %1835 = vmatprep.subr.mxu0 %v1738
        %1836 = vmatpush1.msra.mxu0 %v1735
        %1837 = vmatprep.subr.mxu0 0.0
        %1838 = vmatpush1.msra.mxu0 0.0
        %1839 = vmatprep.subr.mxu0 0.0
        %1840 = vmatpush1.msra.mxu0 0.0
        %1841 = vmatprep.subr.mxu0 0.0
        %1842 = vmatpush1.msra.mxu0 0.0
        %1843 = vmatprep.subr.mxu0 0.0
        %1844 = vmatpush1.msra.mxu0 0.0
        %1845 = vmatprep.subr.mxu0 0.0
        %1846 = vmatpush1.msra.mxu0 0.0
        %1847 = vmatprep.subr.mxu0 0.0
        %1848 = vmatpush1.msra.mxu0 0.0
        %1849 = vmatprep.subr.mxu0 0.0
        %1850 = vmatpush1.msra.mxu0 0.0
        %1851 = vmatprep.subr.mxu0 0.0
        %1852 = vmatpush1.msra.mxu0 0.0
        %1853 = vmatprep.subr.mxu0 0.0
        %1854 = vmatpush1.msra.mxu0 0.0
        %1855 = vmatprep.subr.mxu0 0.0
        %1856 = vmatpush1.msra.mxu0 0.0
        %1857 = vmatprep.subr.mxu0 0.0
        %1858 = vmatpush1.msra.mxu0 0.0
        %1859 = vmatprep.subr.mxu0 0.0
        %1860 = vmatpush1.msra.mxu0 0.0
        %1861 = vmatprep.subr.mxu0 0.0
        %1862 = vmatpush1.msra.mxu0 0.0
        %1863 = vmatprep.subr.mxu0 0.0
        %1864 = vmatpush1.msra.mxu0 0.0
        %1865 = vmatprep.subr.mxu0 0.0
        %1866 = vmatpush1.msra.mxu0 0.0
        %1867 = vmatprep.subr.mxu0 0.0
        %1868 = vmatpush1.msra.mxu0 0.0
        %1869 = vmatprep.subr.mxu0 0.0
        %1870 = vmatpush1.msra.mxu0 0.0
        %1871 = vmatprep.subr.mxu0 0.0
        %1872 = vmatpush1.msra.mxu0 0.0
        %1873 = vmatprep.subr.mxu0 0.0
        %1874 = vmatpush1.msra.mxu0 0.0
        %1875 = vmatprep.subr.mxu0 0.0
        %1876 = vmatpush1.msra.mxu0 0.0
        %1877 = vmatprep.subr.mxu0 0.0
        %1878 = vmatpush1.msra.mxu0 0.0
        %1879 = vmatprep.subr.mxu0 0.0
        %1880 = vmatpush1.msra.mxu0 0.0
        %1881 = vmatprep.subr.mxu0 0.0
        %1882 = vmatpush1.msra.mxu0 0.0
        %1883 = vmatprep.subr.mxu0 0.0
        %1884 = vmatpush1.msra.mxu0 0.0
        %1885 = vmatprep.subr.mxu0 0.0
        %1886 = vmatpush1.msra.mxu0 0.0
        %1887 = vmatprep.subr.mxu0 0.0
        %1888 = vmatpush1.msra.mxu0 0.0
        %1889 = vmatprep.subr.mxu0 0.0
        %1890 = vmatpush1.msra.mxu0 0.0
        %1891 = vmatprep.subr.mxu0 0.0
        %1892 = vmatpush1.msra.mxu0 0.0
        %1893 = vmatprep.subr.mxu0 0.0
        %1894 = vmatpush1.msra.mxu0 0.0
        %1895 = vmatprep.subr.mxu0 0.0
        %1896 = vmatpush1.msra.mxu0 0.0
        %1897 = vmatprep.subr.mxu0 0.0
        %1898 = vmatpush1.msra.mxu0 0.0
        %1899 = vmatprep.mubr.f32.mxu0 0.0
        %1900 = vmatmul.mubr.f32.gmra.mrb[0].mxu0 %v1720
        %v1901 = vpop.f32.mrb[0].mxu0
        %v1902 = vadd.f32 0.0, %v1901
        %v1903 = vpop.f32.mrb[0].mxu0
        %v1904 = vadd.f32 0.0, %v1903
        %1905 = vmatprep.mubr.f32.mxu0 0.0
        %1906 = vmatmul.mubr.f32.gmra.mrb[0].mxu0 %v1723
        %v1907 = vpop.f32.mrb[0].mxu0
        %v1908 = vadd.f32 0.0, %v1907
        %v1909 = vpop.f32.mrb[0].mxu0
        %v1910 = vadd.f32 0.0, %v1909
        %1911 = vmatprep.mubr.f32.mxu0 0.0
        %1912 = vmatmul.mubr.f32.gmra.mrb[0].mxu0 %v1726
        %v1913 = vpop.f32.mrb[0].mxu0
        %v1914 = vadd.f32 0.0, %v1913
        %v1915 = vpop.f32.mrb[0].mxu0
        %v1916 = vadd.f32 0.0, %v1915
        %1917 = vdwg.mxu0
        %1918 = vmatprep.subr.mxu0 %v1744
        %1919 = vmatpush1.msra.mxu0 %v1741
        %1920 = vmatprep.subr.mxu0 0.0
        %1921 = vmatpush1.msra.mxu0 0.0
        %1922 = vmatprep.subr.mxu0 0.0
        %1923 = vmatpush1.msra.mxu0 0.0
        %1924 = vmatprep.subr.mxu0 0.0
        %1925 = vmatpush1.msra.mxu0 0.0
        %1926 = vmatprep.subr.mxu0 0.0
        %1927 = vmatpush1.msra.mxu0 0.0
        %1928 = vmatprep.subr.mxu0 0.0
        %1929 = vmatpush1.msra.mxu0 0.0
        %1930 = vmatprep.subr.mxu0 0.0
        %1931 = vmatpush1.msra.mxu0 0.0
        %1932 = vmatprep.subr.mxu0 0.0
        %1933 = vmatpush1.msra.mxu0 0.0
        %1934 = vmatprep.subr.mxu0 0.0
        %1935 = vmatpush1.msra.mxu0 0.0
        %1936 = vmatprep.subr.mxu0 0.0
        %1937 = vmatpush1.msra.mxu0 0.0
        %1938 = vmatprep.subr.mxu0 0.0
        %1939 = vmatpush1.msra.mxu0 0.0
        %1940 = vmatprep.subr.mxu0 0.0
        %1941 = vmatpush1.msra.mxu0 0.0
        %1942 = vmatprep.subr.mxu0 0.0
        %1943 = vmatpush1.msra.mxu0 0.0
        %1944 = vmatprep.subr.mxu0 0.0
        %1945 = vmatpush1.msra.mxu0 0.0
        %1946 = vmatprep.subr.mxu0 0.0
        %1947 = vmatpush1.msra.mxu0 0.0
        %1948 = vmatprep.subr.mxu0 0.0
        %1949 = vmatpush1.msra.mxu0 0.0
        %1950 = vmatprep.subr.mxu0 0.0
        %1951 = vmatpush1.msra.mxu0 0.0
        %1952 = vmatprep.subr.mxu0 0.0
        %1953 = vmatpush1.msra.mxu0 0.0
        %1954 = vmatprep.subr.mxu0 0.0
        %1955 = vmatpush1.msra.mxu0 0.0
        %1956 = vmatprep.subr.mxu0 0.0
        %1957 = vmatpush1.msra.mxu0 0.0
        %1958 = vmatprep.subr.mxu0 0.0
        %1959 = vmatpush1.msra.mxu0 0.0
        %1960 = vmatprep.subr.mxu0 0.0
        %1961 = vmatpush1.msra.mxu0 0.0
        %1962 = vmatprep.subr.mxu0 0.0
        %1963 = vmatpush1.msra.mxu0 0.0
        %1964 = vmatprep.subr.mxu0 0.0
        %1965 = vmatpush1.msra.mxu0 0.0
        %1966 = vmatprep.subr.mxu0 0.0
        %1967 = vmatpush1.msra.mxu0 0.0
        %1968 = vmatprep.subr.mxu0 0.0
        %1969 = vmatpush1.msra.mxu0 0.0
        %1970 = vmatprep.subr.mxu0 0.0
        %1971 = vmatpush1.msra.mxu0 0.0
        %1972 = vmatprep.subr.mxu0 0.0
        %1973 = vmatpush1.msra.mxu0 0.0
        %1974 = vmatprep.subr.mxu0 0.0
        %1975 = vmatpush1.msra.mxu0 0.0
        %1976 = vmatprep.subr.mxu0 0.0
        %1977 = vmatpush1.msra.mxu0 0.0
        %1978 = vmatprep.subr.mxu0 0.0
        %1979 = vmatpush1.msra.mxu0 0.0
        %1980 = vmatprep.subr.mxu0 0.0
        %1981 = vmatpush1.msra.mxu0 0.0
        %1982 = vmatprep.mubr.f32.mxu0 0.0
        %1983 = vmatmul.mubr.f32.gmra.mrb[0].mxu0 %v1720
        %v1984 = vpop.f32.mrb[0].mxu0
        %v1985 = vadd.f32 0.0, %v1984
        %v1986 = vpop.f32.mrb[0].mxu0
        %v1987 = vadd.f32 0.0, %v1986
        %1988 = vmatprep.mubr.f32.mxu0 0.0
        %1989 = vmatmul.mubr.f32.gmra.mrb[0].mxu0 %v1723
        %v1990 = vpop.f32.mrb[0].mxu0
        %v1991 = vadd.f32 0.0, %v1990
        %v1992 = vpop.f32.mrb[0].mxu0
        %v1993 = vadd.f32 0.0, %v1992
        %1994 = vmatprep.mubr.f32.mxu0 0.0
        %1995 = vmatmul.mubr.f32.gmra.mrb[0].mxu0 %v1726
        %v1996 = vpop.f32.mrb[0].mxu0
        %v1997 = vadd.f32 0.0, %v1996
        %v1998 = vpop.f32.mrb[0].mxu0
        %v1999 = vadd.f32 0.0, %v1998
        %2000 = vdwg.mxu0
        %2001 = vmatprep.subr.mxu0 %v1750
        %2002 = vmatpush1.msra.mxu0 %v1747
        %2003 = vmatprep.subr.mxu0 0.0
        %2004 = vmatpush1.msra.mxu0 0.0
        %2005 = vmatprep.subr.mxu0 0.0
        %2006 = vmatpush1.msra.mxu0 0.0
        %2007 = vmatprep.subr.mxu0 0.0
        %2008 = vmatpush1.msra.mxu0 0.0
        %2009 = vmatprep.subr.mxu0 0.0
        %2010 = vmatpush1.msra.mxu0 0.0
        %2011 = vmatprep.subr.mxu0 0.0
        %2012 = vmatpush1.msra.mxu0 0.0
        %2013 = vmatprep.subr.mxu0 0.0
        %2014 = vmatpush1.msra.mxu0 0.0
        %2015 = vmatprep.subr.mxu0 0.0
        %2016 = vmatpush1.msra.mxu0 0.0
        %2017 = vmatprep.subr.mxu0 0.0
        %2018 = vmatpush1.msra.mxu0 0.0
        %2019 = vmatprep.subr.mxu0 0.0
        %2020 = vmatpush1.msra.mxu0 0.0
        %2021 = vmatprep.subr.mxu0 0.0
        %2022 = vmatpush1.msra.mxu0 0.0
        %2023 = vmatprep.subr.mxu0 0.0
        %2024 = vmatpush1.msra.mxu0 0.0
        %2025 = vmatprep.subr.mxu0 0.0
        %2026 = vmatpush1.msra.mxu0 0.0
        %2027 = vmatprep.subr.mxu0 0.0
        %2028 = vmatpush1.msra.mxu0 0.0
        %2029 = vmatprep.subr.mxu0 0.0
        %2030 = vmatpush1.msra.mxu0 0.0
        %2031 = vmatprep.subr.mxu0 0.0
        %2032 = vmatpush1.msra.mxu0 0.0
        %2033 = vmatprep.subr.mxu0 0.0
        %2034 = vmatpush1.msra.mxu0 0.0
        %2035 = vmatprep.subr.mxu0 0.0
        %2036 = vmatpush1.msra.mxu0 0.0
        %2037 = vmatprep.subr.mxu0 0.0
        %2038 = vmatpush1.msra.mxu0 0.0
        %2039 = vmatprep.subr.mxu0 0.0
        %2040 = vmatpush1.msra.mxu0 0.0
        %2041 = vmatprep.subr.mxu0 0.0
        %2042 = vmatpush1.msra.mxu0 0.0
        %2043 = vmatprep.subr.mxu0 0.0
        %2044 = vmatpush1.msra.mxu0 0.0
        %2045 = vmatprep.subr.mxu0 0.0
        %2046 = vmatpush1.msra.mxu0 0.0
        %2047 = vmatprep.subr.mxu0 0.0
        %2048 = vmatpush1.msra.mxu0 0.0
        %2049 = vmatprep.subr.mxu0 0.0
        %2050 = vmatpush1.msra.mxu0 0.0
        %2051 = vmatprep.subr.mxu0 0.0
        %2052 = vmatpush1.msra.mxu0 0.0
        %2053 = vmatprep.subr.mxu0 0.0
        %2054 = vmatpush1.msra.mxu0 0.0
        %2055 = vmatprep.subr.mxu0 0.0
        %2056 = vmatpush1.msra.mxu0 0.0
        %2057 = vmatprep.subr.mxu0 0.0
        %2058 = vmatpush1.msra.mxu0 0.0
        %2059 = vmatprep.subr.mxu0 0.0
        %2060 = vmatpush1.msra.mxu0 0.0
        %2061 = vmatprep.subr.mxu0 0.0
        %2062 = vmatpush1.msra.mxu0 0.0
        %2063 = vmatprep.subr.mxu0 0.0
        %2064 = vmatpush1.msra.mxu0 0.0
        %2065 = vmatprep.mubr.f32.mxu0 0.0
        %2066 = vmatmul.mubr.f32.gmra.mrb[0].mxu0 %v1720
        %v2067 = vpop.f32.mrb[0].mxu0
        %v2068 = vadd.f32 0.0, %v2067
        %v2069 = vpop.f32.mrb[0].mxu0
        %v2070 = vadd.f32 0.0, %v2069
        %2071 = vmatprep.mubr.f32.mxu0 0.0
        %2072 = vmatmul.mubr.f32.gmra.mrb[0].mxu0 %v1723
        %v2073 = vpop.f32.mrb[0].mxu0
        %v2074 = vadd.f32 0.0, %v2073
        %v2075 = vpop.f32.mrb[0].mxu0
        %v2076 = vadd.f32 0.0, %v2075
        %2077 = vmatprep.mubr.f32.mxu0 0.0
        %2078 = vmatmul.mubr.f32.gmra.mrb[0].mxu0 %v1726
        %v2079 = vpop.f32.mrb[0].mxu0
        %v2080 = vadd.f32 0.0, %v2079
        %v2081 = vpop.f32.mrb[0].mxu0
        %v2082 = vadd.f32 0.0, %v2081
        %2083 = vdwg.mxu0
        %2084 = vrot.lane.b32.xlu0 %v1819, 2
        %v2085 = vpop.permute.xlu0 %2084
        %2086 = vrot.lane.b32.xlu0 %v1821, 2
        %v2087 = vpop.permute.xlu0 %2086
        %2088 = vrot.lane.b32.xlu0 %v1902, 2
        %v2089 = vpop.permute.xlu0 %2088
        %2090 = vrot.lane.b32.xlu0 %v1904, 2
        %v2091 = vpop.permute.xlu0 %2090
        %2092 = vrot.lane.b32.xlu0 %v1985, 2
        %v2093 = vpop.permute.xlu0 %2092
        %2094 = vrot.lane.b32.xlu0 %v1987, 2
        %v2095 = vpop.permute.xlu0 %2094
        %2096 = vrot.lane.b32.xlu0 %v2068, 2
        %v2097 = vpop.permute.xlu0 %2096
        %2098 = vrot.lane.b32.xlu0 %v2070, 2
        %v2099 = vpop.permute.xlu0 %2098
        %vm2100 = vcmp.lt.s32.totalorder %v345, 2
        %v2101 = vsel %vm2100, %v2097, %v2099
        %v2102 = vsel %vm2100, %v2095, %v2097
        %v2103 = vsel %vm2100, %v2093, %v2095
        %v2104 = vsel %vm2100, %v2091, %v2093
        %v2105 = vsel %vm2100, %v2089, %v2091
        %v2106 = vsel %vm2100, %v2087, %v2089
        %v2107 = vsel %vm2100, %v2085, %v2087
        %v2108 = vsel %vm2100, %v2099, %v2085
        %v2109 = vsel %vm473, 1, 0
        %v2110 = vsel %vm474, 1, 0
        %v2111 = vsel %vm475, 1, 0
        %v2112 = vsel %vm476, 1, 0
        %v2113 = vsel %vm477, 1, 0
        %v2114 = vsel %vm478, 1, 0
        %v2115 = vsel %vm479, 1, 0
        %v2116 = vsel %vm480, 1, 0
        %vm2117 = vcmp.eq.s32.totalorder %v2109, 1
        %vm2118 = vcmp.eq.s32.totalorder %v2110, 1
        %vm2119 = vcmp.eq.s32.totalorder %v2111, 1
        %vm2120 = vcmp.eq.s32.totalorder %v2112, 1
        %vm2121 = vcmp.eq.s32.totalorder %v2113, 1
        %vm2122 = vcmp.eq.s32.totalorder %v2114, 1
        %vm2123 = vcmp.eq.s32.totalorder %v2115, 1
        %vm2124 = vcmp.eq.s32.totalorder %v2116, 1
        %v2125 = vsel %vm2117, %v2108, 0.0
        %v2126 = vsel %vm2118, %v2107, 0.0
        %v2127 = vsel %vm2119, %v2106, 0.0
        %v2128 = vsel %vm2120, %v2105, 0.0
        %v2129 = vsel %vm2121, %v2104, 0.0
        %v2130 = vsel %vm2122, %v2103, 0.0
        %v2131 = vsel %vm2123, %v2102, 0.0
        %v2132 = vsel %vm2124, %v2101, 0.0
        %v2133 = vadd.f32 %v2125, %v1825
        %v2134 = vadd.f32 %v2126, %v1827
        %v2135 = vadd.f32 %v2127, %v1908
        %v2136 = vadd.f32 %v2128, %v1910
        %v2137 = vadd.f32 %v2129, %v1991
        %v2138 = vadd.f32 %v2130, %v1993
        %v2139 = vadd.f32 %v2131, %v2074
        %v2140 = vadd.f32 %v2132, %v2076
        %2141 = vrot.lane.b32.xlu0 %v1831, 126
        %v2142 = vpop.permute.xlu0 %2141
        %2143 = vrot.lane.b32.xlu0 %v1833, 126
        %v2144 = vpop.permute.xlu0 %2143
        %2145 = vrot.lane.b32.xlu0 %v1914, 126
        %v2146 = vpop.permute.xlu0 %2145
        %2147 = vrot.lane.b32.xlu0 %v1916, 126
        %v2148 = vpop.permute.xlu0 %2147
        %2149 = vrot.lane.b32.xlu0 %v1997, 126
        %v2150 = vpop.permute.xlu0 %2149
        %2151 = vrot.lane.b32.xlu0 %v1999, 126
        %v2152 = vpop.permute.xlu0 %2151
        %2153 = vrot.lane.b32.xlu0 %v2080, 126
        %v2154 = vpop.permute.xlu0 %2153
        %2155 = vrot.lane.b32.xlu0 %v2082, 126
        %v2156 = vpop.permute.xlu0 %2155
        %vm2157 = vcmp.lt.s32.totalorder %v345, 126
        %v2158 = vsel %vm2157, %v2154, %v2156
        %v2159 = vsel %vm2157, %v2152, %v2154
        %v2160 = vsel %vm2157, %v2150, %v2152
        %v2161 = vsel %vm2157, %v2148, %v2150
        %v2162 = vsel %vm2157, %v2146, %v2148
        %v2163 = vsel %vm2157, %v2144, %v2146
        %v2164 = vsel %vm2157, %v2142, %v2144
        %v2165 = vsel %vm2157, %v2156, %v2142
        %v2166 = vsel %vm465, 1, 0
        %v2167 = vsel %vm466, 1, 0
        %v2168 = vsel %vm467, 1, 0
        %v2169 = vsel %vm468, 1, 0
        %v2170 = vsel %vm469, 1, 0
        %v2171 = vsel %vm470, 1, 0
        %v2172 = vsel %vm471, 1, 0
        %v2173 = vsel %vm472, 1, 0
        %vm2174 = vcmp.eq.s32.totalorder %v2166, 1
        %vm2175 = vcmp.eq.s32.totalorder %v2167, 1
        %vm2176 = vcmp.eq.s32.totalorder %v2168, 1
        %vm2177 = vcmp.eq.s32.totalorder %v2169, 1
        %vm2178 = vcmp.eq.s32.totalorder %v2170, 1
        %vm2179 = vcmp.eq.s32.totalorder %v2171, 1
        %vm2180 = vcmp.eq.s32.totalorder %v2172, 1
        %vm2181 = vcmp.eq.s32.totalorder %v2173, 1
        %v2182 = vsel %vm2174, %v2164, 0.0
        %v2183 = vsel %vm2175, %v2163, 0.0
        %v2184 = vsel %vm2176, %v2162, 0.0
        %v2185 = vsel %vm2177, %v2161, 0.0
        %v2186 = vsel %vm2178, %v2160, 0.0
        %v2187 = vsel %vm2179, %v2159, 0.0
        %v2188 = vsel %vm2180, %v2158, 0.0
        %v2189 = vsel %vm2181, %v2165, 0.0
        %v2190 = vadd.f32 %v2133, %v2182
        %v2191 = vadd.f32 %v2134, %v2183
        %v2192 = vadd.f32 %v2135, %v2184
        %v2193 = vadd.f32 %v2136, %v2185
        %v2194 = vadd.f32 %v2137, %v2186
        %v2195 = vadd.f32 %v2138, %v2187
        %v2196 = vadd.f32 %v2139, %v2188
        %v2197 = vadd.f32 %v2140, %v2189
        %2199 = vset.pattern.permute.xlu0 0
        %2200 = vperm.xlu0 %2199, %v516
        %v2201 = vpop.permute.xlu0 %2200
        %v2203 = vadd.f32 %v2190, %v2201
        %v2204 = vadd.f32 %v2191, %v2201
        %v2205 = vadd.f32 %v2192, %v2201
        %v2206 = vadd.f32 %v2193, %v2201
        %v2207 = vadd.f32 %v2194, %v2201
        %v2208 = vadd.f32 %v2195, %v2201
        %v2209 = vadd.f32 %v2196, %v2201
        %v2210 = vadd.f32 %v2197, %v2201
        %v2211 = vmax.f32 %v2203, 0.0
        %v2212 = vmax.f32 %v2204, 0.0
        %v2213 = vmax.f32 %v2205, 0.0
        %v2214 = vmax.f32 %v2206, 0.0
        %v2215 = vmax.f32 %v2207, 0.0
        %v2216 = vmax.f32 %v2208, 0.0
        %v2217 = vmax.f32 %v2209, 0.0
        %v2218 = vmax.f32 %v2210, 0.0
        %s2219 = scalar_lea.vmem %s3, 24
        %v2220 = vld [vmem:[%s2219] sm:$0xff]
        %v2221 = vld [vmem:[%s2219 + $0x8] sm:$0xff]
        %v2222 = vld [vmem:[%s2219 + $0x10] sm:$0xff]
        %v2224 = vsel %vm1208, %v2220, 0
        %v2227 = vsel %vm1208, %v2221, 0
        %v2230 = vsel %vm1208, %v2222, 0
        %v2233 = vsel %vm1218, %v2211, 0
        %v2236 = vsel %vm1218, %v2212, 0
        %v2239 = vsel %vm1218, %v2213, 0
        %v2242 = vsel %vm1218, %v2214, 0
        %v2245 = vsel %vm1218, %v2215, 0
        %v2248 = vsel %vm1218, %v2216, 0
        %v2251 = vsel %vm1218, %v2217, 0
        %v2254 = vsel %vm1218, %v2218, 0
        %2256 = vmatprep.subr.mxu0 %v2236
        %2257 = vmatpush1.msra.mxu0 %v2233
        %2258 = vmatprep.subr.mxu0 0.0
        %2259 = vmatpush1.msra.mxu0 0.0
        %2260 = vmatprep.subr.mxu0 0.0
        %2261 = vmatpush1.msra.mxu0 0.0
        %2262 = vmatprep.subr.mxu0 0.0
        %2263 = vmatpush1.msra.mxu0 0.0
        %2264 = vmatprep.subr.mxu0 0.0
        %2265 = vmatpush1.msra.mxu0 0.0
        %2266 = vmatprep.subr.mxu0 0.0
        %2267 = vmatpush1.msra.mxu0 0.0
        %2268 = vmatprep.subr.mxu0 0.0
        %2269 = vmatpush1.msra.mxu0 0.0
        %2270 = vmatprep.subr.mxu0 0.0
        %2271 = vmatpush1.msra.mxu0 0.0
        %2272 = vmatprep.subr.mxu0 0.0
        %2273 = vmatpush1.msra.mxu0 0.0
        %2274 = vmatprep.subr.mxu0 0.0
        %2275 = vmatpush1.msra.mxu0 0.0
        %2276 = vmatprep.subr.mxu0 0.0
        %2277 = vmatpush1.msra.mxu0 0.0
        %2278 = vmatprep.subr.mxu0 0.0
        %2279 = vmatpush1.msra.mxu0 0.0
        %2280 = vmatprep.subr.mxu0 0.0
        %2281 = vmatpush1.msra.mxu0 0.0
        %2282 = vmatprep.subr.mxu0 0.0
        %2283 = vmatpush1.msra.mxu0 0.0
        %2284 = vmatprep.subr.mxu0 0.0
        %2285 = vmatpush1.msra.mxu0 0.0
        %2286 = vmatprep.subr.mxu0 0.0
        %2287 = vmatpush1.msra.mxu0 0.0
        %2288 = vmatprep.subr.mxu0 0.0
        %2289 = vmatpush1.msra.mxu0 0.0
        %2290 = vmatprep.subr.mxu0 0.0
        %2291 = vmatpush1.msra.mxu0 0.0
        %2292 = vmatprep.subr.mxu0 0.0
        %2293 = vmatpush1.msra.mxu0 0.0
        %2294 = vmatprep.subr.mxu0 0.0
        %2295 = vmatpush1.msra.mxu0 0.0
        %2296 = vmatprep.subr.mxu0 0.0
        %2297 = vmatpush1.msra.mxu0 0.0
        %2298 = vmatprep.subr.mxu0 0.0
        %2299 = vmatpush1.msra.mxu0 0.0
        %2300 = vmatprep.subr.mxu0 0.0
        %2301 = vmatpush1.msra.mxu0 0.0
        %2302 = vmatprep.subr.mxu0 0.0
        %2303 = vmatpush1.msra.mxu0 0.0
        %2304 = vmatprep.subr.mxu0 0.0
        %2305 = vmatpush1.msra.mxu0 0.0
        %2306 = vmatprep.subr.mxu0 0.0
        %2307 = vmatpush1.msra.mxu0 0.0
        %2308 = vmatprep.subr.mxu0 0.0
        %2309 = vmatpush1.msra.mxu0 0.0
        %2310 = vmatprep.subr.mxu0 0.0
        %2311 = vmatpush1.msra.mxu0 0.0
        %2312 = vmatprep.subr.mxu0 0.0
        %2313 = vmatpush1.msra.mxu0 0.0
        %2314 = vmatprep.subr.mxu0 0.0
        %2315 = vmatpush1.msra.mxu0 0.0
        %2316 = vmatprep.subr.mxu0 0.0
        %2317 = vmatpush1.msra.mxu0 0.0
        %2318 = vmatprep.subr.mxu0 0.0
        %2319 = vmatpush1.msra.mxu0 0.0
        %2320 = vmatprep.mubr.f32.mxu0 0.0
        %2321 = vmatmul.mubr.f32.gmra.mrb[0].mxu0 %v2224
        %v2322 = vpop.f32.mrb[0].mxu0
        %v2323 = vadd.f32 0.0, %v2322
        %v2324 = vpop.f32.mrb[0].mxu0
        %v2325 = vadd.f32 0.0, %v2324
        %2326 = vmatprep.mubr.f32.mxu0 0.0
        %2327 = vmatmul.mubr.f32.gmra.mrb[0].mxu0 %v2227
        %v2328 = vpop.f32.mrb[0].mxu0
        %v2329 = vadd.f32 0.0, %v2328
        %v2330 = vpop.f32.mrb[0].mxu0
        %v2331 = vadd.f32 0.0, %v2330
        %2332 = vmatprep.mubr.f32.mxu0 0.0
        %2333 = vmatmul.mubr.f32.gmra.mrb[0].mxu0 %v2230
        %v2334 = vpop.f32.mrb[0].mxu0
        %v2335 = vadd.f32 0.0, %v2334
        %v2336 = vpop.f32.mrb[0].mxu0
        %v2337 = vadd.f32 0.0, %v2336
        %2338 = vdwg.mxu0
        %2339 = vmatprep.subr.mxu0 %v2242
        %2340 = vmatpush1.msra.mxu0 %v2239
        %2341 = vmatprep.subr.mxu0 0.0
        %2342 = vmatpush1.msra.mxu0 0.0
        %2343 = vmatprep.subr.mxu0 0.0
        %2344 = vmatpush1.msra.mxu0 0.0
        %2345 = vmatprep.subr.mxu0 0.0
        %2346 = vmatpush1.msra.mxu0 0.0
        %2347 = vmatprep.subr.mxu0 0.0
        %2348 = vmatpush1.msra.mxu0 0.0
        %2349 = vmatprep.subr.mxu0 0.0
        %2350 = vmatpush1.msra.mxu0 0.0
        %2351 = vmatprep.subr.mxu0 0.0
        %2352 = vmatpush1.msra.mxu0 0.0
        %2353 = vmatprep.subr.mxu0 0.0
        %2354 = vmatpush1.msra.mxu0 0.0
        %2355 = vmatprep.subr.mxu0 0.0
        %2356 = vmatpush1.msra.mxu0 0.0
        %2357 = vmatprep.subr.mxu0 0.0
        %2358 = vmatpush1.msra.mxu0 0.0
        %2359 = vmatprep.subr.mxu0 0.0
        %2360 = vmatpush1.msra.mxu0 0.0
        %2361 = vmatprep.subr.mxu0 0.0
        %2362 = vmatpush1.msra.mxu0 0.0
        %2363 = vmatprep.subr.mxu0 0.0
        %2364 = vmatpush1.msra.mxu0 0.0
        %2365 = vmatprep.subr.mxu0 0.0
        %2366 = vmatpush1.msra.mxu0 0.0
        %2367 = vmatprep.subr.mxu0 0.0
        %2368 = vmatpush1.msra.mxu0 0.0
        %2369 = vmatprep.subr.mxu0 0.0
        %2370 = vmatpush1.msra.mxu0 0.0
        %2371 = vmatprep.subr.mxu0 0.0
        %2372 = vmatpush1.msra.mxu0 0.0
        %2373 = vmatprep.subr.mxu0 0.0
        %2374 = vmatpush1.msra.mxu0 0.0
        %2375 = vmatprep.subr.mxu0 0.0
        %2376 = vmatpush1.msra.mxu0 0.0
        %2377 = vmatprep.subr.mxu0 0.0
        %2378 = vmatpush1.msra.mxu0 0.0
        %2379 = vmatprep.subr.mxu0 0.0
        %2380 = vmatpush1.msra.mxu0 0.0
        %2381 = vmatprep.subr.mxu0 0.0
        %2382 = vmatpush1.msra.mxu0 0.0
        %2383 = vmatprep.subr.mxu0 0.0
        %2384 = vmatpush1.msra.mxu0 0.0
        %2385 = vmatprep.subr.mxu0 0.0
        %2386 = vmatpush1.msra.mxu0 0.0
        %2387 = vmatprep.subr.mxu0 0.0
        %2388 = vmatpush1.msra.mxu0 0.0
        %2389 = vmatprep.subr.mxu0 0.0
        %2390 = vmatpush1.msra.mxu0 0.0
        %2391 = vmatprep.subr.mxu0 0.0
        %2392 = vmatpush1.msra.mxu0 0.0
        %2393 = vmatprep.subr.mxu0 0.0
        %2394 = vmatpush1.msra.mxu0 0.0
        %2395 = vmatprep.subr.mxu0 0.0
        %2396 = vmatpush1.msra.mxu0 0.0
        %2397 = vmatprep.subr.mxu0 0.0
        %2398 = vmatpush1.msra.mxu0 0.0
        %2399 = vmatprep.subr.mxu0 0.0
        %2400 = vmatpush1.msra.mxu0 0.0
        %2401 = vmatprep.subr.mxu0 0.0
        %2402 = vmatpush1.msra.mxu0 0.0
        %2403 = vmatprep.mubr.f32.mxu0 0.0
        %2404 = vmatmul.mubr.f32.gmra.mrb[0].mxu0 %v2224
        %v2405 = vpop.f32.mrb[0].mxu0
        %v2406 = vadd.f32 0.0, %v2405
        %v2407 = vpop.f32.mrb[0].mxu0
        %v2408 = vadd.f32 0.0, %v2407
        %2409 = vmatprep.mubr.f32.mxu0 0.0
        %2410 = vmatmul.mubr.f32.gmra.mrb[0].mxu0 %v2227
        %v2411 = vpop.f32.mrb[0].mxu0
        %v2412 = vadd.f32 0.0, %v2411
        %v2413 = vpop.f32.mrb[0].mxu0
        %v2414 = vadd.f32 0.0, %v2413
        %2415 = vmatprep.mubr.f32.mxu0 0.0
        %2416 = vmatmul.mubr.f32.gmra.mrb[0].mxu0 %v2230
        %v2417 = vpop.f32.mrb[0].mxu0
        %v2418 = vadd.f32 0.0, %v2417
        %v2419 = vpop.f32.mrb[0].mxu0
        %v2420 = vadd.f32 0.0, %v2419
        %2421 = vdwg.mxu0
        %2422 = vmatprep.subr.mxu0 %v2248
        %2423 = vmatpush1.msra.mxu0 %v2245
        %2424 = vmatprep.subr.mxu0 0.0
        %2425 = vmatpush1.msra.mxu0 0.0
        %2426 = vmatprep.subr.mxu0 0.0
        %2427 = vmatpush1.msra.mxu0 0.0
        %2428 = vmatprep.subr.mxu0 0.0
        %2429 = vmatpush1.msra.mxu0 0.0
        %2430 = vmatprep.subr.mxu0 0.0
        %2431 = vmatpush1.msra.mxu0 0.0
        %2432 = vmatprep.subr.mxu0 0.0
        %2433 = vmatpush1.msra.mxu0 0.0
        %2434 = vmatprep.subr.mxu0 0.0
        %2435 = vmatpush1.msra.mxu0 0.0
        %2436 = vmatprep.subr.mxu0 0.0
        %2437 = vmatpush1.msra.mxu0 0.0
        %2438 = vmatprep.subr.mxu0 0.0
        %2439 = vmatpush1.msra.mxu0 0.0
        %2440 = vmatprep.subr.mxu0 0.0
        %2441 = vmatpush1.msra.mxu0 0.0
        %2442 = vmatprep.subr.mxu0 0.0
        %2443 = vmatpush1.msra.mxu0 0.0
        %2444 = vmatprep.subr.mxu0 0.0
        %2445 = vmatpush1.msra.mxu0 0.0
        %2446 = vmatprep.subr.mxu0 0.0
        %2447 = vmatpush1.msra.mxu0 0.0
        %2448 = vmatprep.subr.mxu0 0.0
        %2449 = vmatpush1.msra.mxu0 0.0
        %2450 = vmatprep.subr.mxu0 0.0
        %2451 = vmatpush1.msra.mxu0 0.0
        %2452 = vmatprep.subr.mxu0 0.0
        %2453 = vmatpush1.msra.mxu0 0.0
        %2454 = vmatprep.subr.mxu0 0.0
        %2455 = vmatpush1.msra.mxu0 0.0
        %2456 = vmatprep.subr.mxu0 0.0
        %2457 = vmatpush1.msra.mxu0 0.0
        %2458 = vmatprep.subr.mxu0 0.0
        %2459 = vmatpush1.msra.mxu0 0.0
        %2460 = vmatprep.subr.mxu0 0.0
        %2461 = vmatpush1.msra.mxu0 0.0
        %2462 = vmatprep.subr.mxu0 0.0
        %2463 = vmatpush1.msra.mxu0 0.0
        %2464 = vmatprep.subr.mxu0 0.0
        %2465 = vmatpush1.msra.mxu0 0.0
        %2466 = vmatprep.subr.mxu0 0.0
        %2467 = vmatpush1.msra.mxu0 0.0
        %2468 = vmatprep.subr.mxu0 0.0
        %2469 = vmatpush1.msra.mxu0 0.0
        %2470 = vmatprep.subr.mxu0 0.0
        %2471 = vmatpush1.msra.mxu0 0.0
        %2472 = vmatprep.subr.mxu0 0.0
        %2473 = vmatpush1.msra.mxu0 0.0
        %2474 = vmatprep.subr.mxu0 0.0
        %2475 = vmatpush1.msra.mxu0 0.0
        %2476 = vmatprep.subr.mxu0 0.0
        %2477 = vmatpush1.msra.mxu0 0.0
        %2478 = vmatprep.subr.mxu0 0.0
        %2479 = vmatpush1.msra.mxu0 0.0
        %2480 = vmatprep.subr.mxu0 0.0
        %2481 = vmatpush1.msra.mxu0 0.0
        %2482 = vmatprep.subr.mxu0 0.0
        %2483 = vmatpush1.msra.mxu0 0.0
        %2484 = vmatprep.subr.mxu0 0.0
        %2485 = vmatpush1.msra.mxu0 0.0
        %2486 = vmatprep.mubr.f32.mxu0 0.0
        %2487 = vmatmul.mubr.f32.gmra.mrb[0].mxu0 %v2224
        %v2488 = vpop.f32.mrb[0].mxu0
        %v2489 = vadd.f32 0.0, %v2488
        %v2490 = vpop.f32.mrb[0].mxu0
        %v2491 = vadd.f32 0.0, %v2490
        %2492 = vmatprep.mubr.f32.mxu0 0.0
        %2493 = vmatmul.mubr.f32.gmra.mrb[0].mxu0 %v2227
        %v2494 = vpop.f32.mrb[0].mxu0
        %v2495 = vadd.f32 0.0, %v2494
        %v2496 = vpop.f32.mrb[0].mxu0
        %v2497 = vadd.f32 0.0, %v2496
        %2498 = vmatprep.mubr.f32.mxu0 0.0
        %2499 = vmatmul.mubr.f32.gmra.mrb[0].mxu0 %v2230
        %v2500 = vpop.f32.mrb[0].mxu0
        %v2501 = vadd.f32 0.0, %v2500
        %v2502 = vpop.f32.mrb[0].mxu0
        %v2503 = vadd.f32 0.0, %v2502
        %2504 = vdwg.mxu0
        %2505 = vmatprep.subr.mxu0 %v2254
        %2506 = vmatpush1.msra.mxu0 %v2251
        %2507 = vmatprep.subr.mxu0 0.0
        %2508 = vmatpush1.msra.mxu0 0.0
        %2509 = vmatprep.subr.mxu0 0.0
        %2510 = vmatpush1.msra.mxu0 0.0
        %2511 = vmatprep.subr.mxu0 0.0
        %2512 = vmatpush1.msra.mxu0 0.0
        %2513 = vmatprep.subr.mxu0 0.0
        %2514 = vmatpush1.msra.mxu0 0.0
        %2515 = vmatprep.subr.mxu0 0.0
        %2516 = vmatpush1.msra.mxu0 0.0
        %2517 = vmatprep.subr.mxu0 0.0
        %2518 = vmatpush1.msra.mxu0 0.0
        %2519 = vmatprep.subr.mxu0 0.0
        %2520 = vmatpush1.msra.mxu0 0.0
        %2521 = vmatprep.subr.mxu0 0.0
        %2522 = vmatpush1.msra.mxu0 0.0
        %2523 = vmatprep.subr.mxu0 0.0
        %2524 = vmatpush1.msra.mxu0 0.0
        %2525 = vmatprep.subr.mxu0 0.0
        %2526 = vmatpush1.msra.mxu0 0.0
        %2527 = vmatprep.subr.mxu0 0.0
        %2528 = vmatpush1.msra.mxu0 0.0
        %2529 = vmatprep.subr.mxu0 0.0
        %2530 = vmatpush1.msra.mxu0 0.0
        %2531 = vmatprep.subr.mxu0 0.0
        %2532 = vmatpush1.msra.mxu0 0.0
        %2533 = vmatprep.subr.mxu0 0.0
        %2534 = vmatpush1.msra.mxu0 0.0
        %2535 = vmatprep.subr.mxu0 0.0
        %2536 = vmatpush1.msra.mxu0 0.0
        %2537 = vmatprep.subr.mxu0 0.0
        %2538 = vmatpush1.msra.mxu0 0.0
        %2539 = vmatprep.subr.mxu0 0.0
        %2540 = vmatpush1.msra.mxu0 0.0
        %2541 = vmatprep.subr.mxu0 0.0
        %2542 = vmatpush1.msra.mxu0 0.0
        %2543 = vmatprep.subr.mxu0 0.0
        %2544 = vmatpush1.msra.mxu0 0.0
        %2545 = vmatprep.subr.mxu0 0.0
        %2546 = vmatpush1.msra.mxu0 0.0
        %2547 = vmatprep.subr.mxu0 0.0
        %2548 = vmatpush1.msra.mxu0 0.0
        %2549 = vmatprep.subr.mxu0 0.0
        %2550 = vmatpush1.msra.mxu0 0.0
        %2551 = vmatprep.subr.mxu0 0.0
        %2552 = vmatpush1.msra.mxu0 0.0
        %2553 = vmatprep.subr.mxu0 0.0
        %2554 = vmatpush1.msra.mxu0 0.0
        %2555 = vmatprep.subr.mxu0 0.0
        %2556 = vmatpush1.msra.mxu0 0.0
        %2557 = vmatprep.subr.mxu0 0.0
        %2558 = vmatpush1.msra.mxu0 0.0
        %2559 = vmatprep.subr.mxu0 0.0
        %2560 = vmatpush1.msra.mxu0 0.0
        %2561 = vmatprep.subr.mxu0 0.0
        %2562 = vmatpush1.msra.mxu0 0.0
        %2563 = vmatprep.subr.mxu0 0.0
        %2564 = vmatpush1.msra.mxu0 0.0
        %2565 = vmatprep.subr.mxu0 0.0
        %2566 = vmatpush1.msra.mxu0 0.0
        %2567 = vmatprep.subr.mxu0 0.0
        %2568 = vmatpush1.msra.mxu0 0.0
        %2569 = vmatprep.mubr.f32.mxu0 0.0
        %2570 = vmatmul.mubr.f32.gmra.mrb[0].mxu0 %v2224
        %v2571 = vpop.f32.mrb[0].mxu0
        %v2572 = vadd.f32 0.0, %v2571
        %v2573 = vpop.f32.mrb[0].mxu0
        %v2574 = vadd.f32 0.0, %v2573
        %2575 = vmatprep.mubr.f32.mxu0 0.0
        %2576 = vmatmul.mubr.f32.gmra.mrb[0].mxu0 %v2227
        %v2577 = vpop.f32.mrb[0].mxu0
        %v2578 = vadd.f32 0.0, %v2577
        %v2579 = vpop.f32.mrb[0].mxu0
        %v2580 = vadd.f32 0.0, %v2579
        %2581 = vmatprep.mubr.f32.mxu0 0.0
        %2582 = vmatmul.mubr.f32.gmra.mrb[0].mxu0 %v2230
        %v2583 = vpop.f32.mrb[0].mxu0
        %v2584 = vadd.f32 0.0, %v2583
        %v2585 = vpop.f32.mrb[0].mxu0
        %v2586 = vadd.f32 0.0, %v2585
        %2587 = vdwg.mxu0
        %2588 = vrot.lane.b32.xlu0 %v2323, 2
        %v2589 = vpop.permute.xlu0 %2588
        %2590 = vrot.lane.b32.xlu0 %v2325, 2
        %v2591 = vpop.permute.xlu0 %2590
        %2592 = vrot.lane.b32.xlu0 %v2406, 2
        %v2593 = vpop.permute.xlu0 %2592
        %2594 = vrot.lane.b32.xlu0 %v2408, 2
        %v2595 = vpop.permute.xlu0 %2594
        %2596 = vrot.lane.b32.xlu0 %v2489, 2
        %v2597 = vpop.permute.xlu0 %2596
        %2598 = vrot.lane.b32.xlu0 %v2491, 2
        %v2599 = vpop.permute.xlu0 %2598
        %2600 = vrot.lane.b32.xlu0 %v2572, 2
        %v2601 = vpop.permute.xlu0 %2600
        %2602 = vrot.lane.b32.xlu0 %v2574, 2
        %v2603 = vpop.permute.xlu0 %2602
        %v2604 = vsel %vm2100, %v2601, %v2603
        %v2605 = vsel %vm2100, %v2599, %v2601
        %v2606 = vsel %vm2100, %v2597, %v2599
        %v2607 = vsel %vm2100, %v2595, %v2597
        %v2608 = vsel %vm2100, %v2593, %v2595
        %v2609 = vsel %vm2100, %v2591, %v2593
        %v2610 = vsel %vm2100, %v2589, %v2591
        %v2611 = vsel %vm2100, %v2603, %v2589
        %v2612 = vsel %vm2117, %v2611, 0.0
        %v2613 = vsel %vm2118, %v2610, 0.0
        %v2614 = vsel %vm2119, %v2609, 0.0
        %v2615 = vsel %vm2120, %v2608, 0.0
        %v2616 = vsel %vm2121, %v2607, 0.0
        %v2617 = vsel %vm2122, %v2606, 0.0
        %v2618 = vsel %vm2123, %v2605, 0.0
        %v2619 = vsel %vm2124, %v2604, 0.0
        %v2620 = vadd.f32 %v2612, %v2329
        %v2621 = vadd.f32 %v2613, %v2331
        %v2622 = vadd.f32 %v2614, %v2412
        %v2623 = vadd.f32 %v2615, %v2414
        %v2624 = vadd.f32 %v2616, %v2495
        %v2625 = vadd.f32 %v2617, %v2497
        %v2626 = vadd.f32 %v2618, %v2578
        %v2627 = vadd.f32 %v2619, %v2580
        %2628 = vrot.lane.b32.xlu0 %v2335, 126
        %v2629 = vpop.permute.xlu0 %2628
        %2630 = vrot.lane.b32.xlu0 %v2337, 126
        %v2631 = vpop.permute.xlu0 %2630
        %2632 = vrot.lane.b32.xlu0 %v2418, 126
        %v2633 = vpop.permute.xlu0 %2632
        %2634 = vrot.lane.b32.xlu0 %v2420, 126
        %v2635 = vpop.permute.xlu0 %2634
        %2636 = vrot.lane.b32.xlu0 %v2501, 126
        %v2637 = vpop.permute.xlu0 %2636
        %2638 = vrot.lane.b32.xlu0 %v2503, 126
        %v2639 = vpop.permute.xlu0 %2638
        %2640 = vrot.lane.b32.xlu0 %v2584, 126
        %v2641 = vpop.permute.xlu0 %2640
        %2642 = vrot.lane.b32.xlu0 %v2586, 126
        %v2643 = vpop.permute.xlu0 %2642
        %v2644 = vsel %vm2157, %v2641, %v2643
        %v2645 = vsel %vm2157, %v2639, %v2641
        %v2646 = vsel %vm2157, %v2637, %v2639
        %v2647 = vsel %vm2157, %v2635, %v2637
        %v2648 = vsel %vm2157, %v2633, %v2635
        %v2649 = vsel %vm2157, %v2631, %v2633
        %v2650 = vsel %vm2157, %v2629, %v2631
        %v2651 = vsel %vm2157, %v2643, %v2629
        %v2652 = vsel %vm2174, %v2650, 0.0
        %v2653 = vsel %vm2175, %v2649, 0.0
        %v2654 = vsel %vm2176, %v2648, 0.0
        %v2655 = vsel %vm2177, %v2647, 0.0
        %v2656 = vsel %vm2178, %v2646, 0.0
        %v2657 = vsel %vm2179, %v2645, 0.0
        %v2658 = vsel %vm2180, %v2644, 0.0
        %v2659 = vsel %vm2181, %v2651, 0.0
        %v2660 = vadd.f32 %v2620, %v2652
        %v2661 = vadd.f32 %v2621, %v2653
        %v2662 = vadd.f32 %v2622, %v2654
        %v2663 = vadd.f32 %v2623, %v2655
        %v2664 = vadd.f32 %v2624, %v2656
        %v2665 = vadd.f32 %v2625, %v2657
        %v2666 = vadd.f32 %v2626, %v2658
        %v2667 = vadd.f32 %v2627, %v2659
        %2669 = vset.pattern.permute.xlu0 0
        %2670 = vperm.xlu0 %2669, %v517
        %v2671 = vpop.permute.xlu0 %2670
        %v2673 = vadd.f32 %v2660, %v2671
        %v2674 = vadd.f32 %v2661, %v2671
        %v2675 = vadd.f32 %v2662, %v2671
        %v2676 = vadd.f32 %v2663, %v2671
        %v2677 = vadd.f32 %v2664, %v2671
        %v2678 = vadd.f32 %v2665, %v2671
        %v2679 = vadd.f32 %v2666, %v2671
        %v2680 = vadd.f32 %v2667, %v2671
        %v2681 = vlaneseq
        %v2682 = vshrl.u32 %v2681, 7
        %v2683 = vsub.s32 0, %v2682
        %v2684 = vrot.slane %v2673, %v2683
        %v2685 = vlaneseq
        %v2686 = vshrl.u32 %v2685, 7
        %v2687 = vsub.s32 0, %v2686
        %v2688 = vrot.slane %v2674, %v2687
        %v2689 = vlaneseq
        %v2690 = vshrl.u32 %v2689, 7
        %v2691 = vsub.s32 0, %v2690
        %v2692 = vrot.slane %v2675, %v2691
        %v2693 = vlaneseq
        %v2694 = vshrl.u32 %v2693, 7
        %v2695 = vsub.s32 0, %v2694
        %v2696 = vrot.slane %v2676, %v2695
        %v2697 = vlaneseq
        %v2698 = vshrl.u32 %v2697, 7
        %v2699 = vsub.s32 0, %v2698
        %v2700 = vrot.slane %v2677, %v2699
        %v2701 = vlaneseq
        %v2702 = vshrl.u32 %v2701, 7
        %v2703 = vsub.s32 0, %v2702
        %v2704 = vrot.slane %v2678, %v2703
        %v2705 = vlaneseq
        %v2706 = vshrl.u32 %v2705, 7
        %v2707 = vsub.s32 0, %v2706
        %v2708 = vrot.slane %v2679, %v2707
        %v2709 = vlaneseq
        %v2710 = vshrl.u32 %v2709, 7
        %v2711 = vsub.s32 0, %v2710
        %v2712 = vrot.slane %v2680, %v2711
        %v2713 = vadd.f32 %v2684, %v1708
        %v2714 = vadd.f32 %v2688, %v1709
        %v2715 = vadd.f32 %v2692, %v1710
        %v2716 = vadd.f32 %v2696, %v1711
        %v2717 = vadd.f32 %v2700, %v1712
        %v2718 = vadd.f32 %v2704, %v1713
        %v2719 = vadd.f32 %v2708, %v1714
        %v2720 = vadd.f32 %v2712, %v1715
        %v2721 = vmax.f32 %v2713, 0.0
        %v2722 = vmax.f32 %v2714, 0.0
        %v2723 = vmax.f32 %v2715, 0.0
        %v2724 = vmax.f32 %v2716, 0.0
        %v2725 = vmax.f32 %v2717, 0.0
        %v2726 = vmax.f32 %v2718, 0.0
        %v2727 = vmax.f32 %v2719, 0.0
        %v2728 = vmax.f32 %v2720, 0.0
        %s2729 = scalar_lea.vmem %s2, 24
        %v2730 = vld [vmem:[%s2729] sm:$0xff]
        %v2731 = vld [vmem:[%s2729 + $0x8] sm:$0xff]
        %v2732 = vld [vmem:[%s2729 + $0x10] sm:$0xff]
        %v2734 = vsel %vm1208, %v2730, 0
        %v2737 = vsel %vm1208, %v2731, 0
        %v2740 = vsel %vm1208, %v2732, 0
        %v2743 = vsel %vm1218, %v2721, 0
        %v2746 = vsel %vm1218, %v2722, 0
        %v2749 = vsel %vm1218, %v2723, 0
        %v2752 = vsel %vm1218, %v2724, 0
        %v2755 = vsel %vm1218, %v2725, 0
        %v2758 = vsel %vm1218, %v2726, 0
        %v2761 = vsel %vm1218, %v2727, 0
        %v2764 = vsel %vm1218, %v2728, 0
        %2766 = vmatprep.subr.mxu0 %v2746
        %2767 = vmatpush1.msra.mxu0 %v2743
        %2768 = vmatprep.subr.mxu0 0.0
        %2769 = vmatpush1.msra.mxu0 0.0
        %2770 = vmatprep.subr.mxu0 0.0
        %2771 = vmatpush1.msra.mxu0 0.0
        %2772 = vmatprep.subr.mxu0 0.0
        %2773 = vmatpush1.msra.mxu0 0.0
        %2774 = vmatprep.subr.mxu0 0.0
        %2775 = vmatpush1.msra.mxu0 0.0
        %2776 = vmatprep.subr.mxu0 0.0
        %2777 = vmatpush1.msra.mxu0 0.0
        %2778 = vmatprep.subr.mxu0 0.0
        %2779 = vmatpush1.msra.mxu0 0.0
        %2780 = vmatprep.subr.mxu0 0.0
        %2781 = vmatpush1.msra.mxu0 0.0
        %2782 = vmatprep.subr.mxu0 0.0
        %2783 = vmatpush1.msra.mxu0 0.0
        %2784 = vmatprep.subr.mxu0 0.0
        %2785 = vmatpush1.msra.mxu0 0.0
        %2786 = vmatprep.subr.mxu0 0.0
        %2787 = vmatpush1.msra.mxu0 0.0
        %2788 = vmatprep.subr.mxu0 0.0
        %2789 = vmatpush1.msra.mxu0 0.0
        %2790 = vmatprep.subr.mxu0 0.0
        %2791 = vmatpush1.msra.mxu0 0.0
        %2792 = vmatprep.subr.mxu0 0.0
        %2793 = vmatpush1.msra.mxu0 0.0
        %2794 = vmatprep.subr.mxu0 0.0
        %2795 = vmatpush1.msra.mxu0 0.0
        %2796 = vmatprep.subr.mxu0 0.0
        %2797 = vmatpush1.msra.mxu0 0.0
        %2798 = vmatprep.subr.mxu0 0.0
        %2799 = vmatpush1.msra.mxu0 0.0
        %2800 = vmatprep.subr.mxu0 0.0
        %2801 = vmatpush1.msra.mxu0 0.0
        %2802 = vmatprep.subr.mxu0 0.0
        %2803 = vmatpush1.msra.mxu0 0.0
        %2804 = vmatprep.subr.mxu0 0.0
        %2805 = vmatpush1.msra.mxu0 0.0
        %2806 = vmatprep.subr.mxu0 0.0
        %2807 = vmatpush1.msra.mxu0 0.0
        %2808 = vmatprep.subr.mxu0 0.0
        %2809 = vmatpush1.msra.mxu0 0.0
        %2810 = vmatprep.subr.mxu0 0.0
        %2811 = vmatpush1.msra.mxu0 0.0
        %2812 = vmatprep.subr.mxu0 0.0
        %2813 = vmatpush1.msra.mxu0 0.0
        %2814 = vmatprep.subr.mxu0 0.0
        %2815 = vmatpush1.msra.mxu0 0.0
        %2816 = vmatprep.subr.mxu0 0.0
        %2817 = vmatpush1.msra.mxu0 0.0
        %2818 = vmatprep.subr.mxu0 0.0
        %2819 = vmatpush1.msra.mxu0 0.0
        %2820 = vmatprep.subr.mxu0 0.0
        %2821 = vmatpush1.msra.mxu0 0.0
        %2822 = vmatprep.subr.mxu0 0.0
        %2823 = vmatpush1.msra.mxu0 0.0
        %2824 = vmatprep.subr.mxu0 0.0
        %2825 = vmatpush1.msra.mxu0 0.0
        %2826 = vmatprep.subr.mxu0 0.0
        %2827 = vmatpush1.msra.mxu0 0.0
        %2828 = vmatprep.subr.mxu0 0.0
        %2829 = vmatpush1.msra.mxu0 0.0
        %2830 = vmatprep.mubr.f32.mxu0 0.0
        %2831 = vmatmul.mubr.f32.gmra.mrb[0].mxu0 %v2734
        %v2832 = vpop.f32.mrb[0].mxu0
        %v2833 = vadd.f32 0.0, %v2832
        %v2834 = vpop.f32.mrb[0].mxu0
        %v2835 = vadd.f32 0.0, %v2834
        %2836 = vmatprep.mubr.f32.mxu0 0.0
        %2837 = vmatmul.mubr.f32.gmra.mrb[0].mxu0 %v2737
        %v2838 = vpop.f32.mrb[0].mxu0
        %v2839 = vadd.f32 0.0, %v2838
        %v2840 = vpop.f32.mrb[0].mxu0
        %v2841 = vadd.f32 0.0, %v2840
        %2842 = vmatprep.mubr.f32.mxu0 0.0
        %2843 = vmatmul.mubr.f32.gmra.mrb[0].mxu0 %v2740
        %v2844 = vpop.f32.mrb[0].mxu0
        %v2845 = vadd.f32 0.0, %v2844
        %v2846 = vpop.f32.mrb[0].mxu0
        %v2847 = vadd.f32 0.0, %v2846
        %2848 = vdwg.mxu0
        %2849 = vmatprep.subr.mxu0 %v2752
        %2850 = vmatpush1.msra.mxu0 %v2749
        %2851 = vmatprep.subr.mxu0 0.0
        %2852 = vmatpush1.msra.mxu0 0.0
        %2853 = vmatprep.subr.mxu0 0.0
        %2854 = vmatpush1.msra.mxu0 0.0
        %2855 = vmatprep.subr.mxu0 0.0
        %2856 = vmatpush1.msra.mxu0 0.0
        %2857 = vmatprep.subr.mxu0 0.0
        %2858 = vmatpush1.msra.mxu0 0.0
        %2859 = vmatprep.subr.mxu0 0.0
        %2860 = vmatpush1.msra.mxu0 0.0
        %2861 = vmatprep.subr.mxu0 0.0
        %2862 = vmatpush1.msra.mxu0 0.0
        %2863 = vmatprep.subr.mxu0 0.0
        %2864 = vmatpush1.msra.mxu0 0.0
        %2865 = vmatprep.subr.mxu0 0.0
        %2866 = vmatpush1.msra.mxu0 0.0
        %2867 = vmatprep.subr.mxu0 0.0
        %2868 = vmatpush1.msra.mxu0 0.0
        %2869 = vmatprep.subr.mxu0 0.0
        %2870 = vmatpush1.msra.mxu0 0.0
        %2871 = vmatprep.subr.mxu0 0.0
        %2872 = vmatpush1.msra.mxu0 0.0
        %2873 = vmatprep.subr.mxu0 0.0
        %2874 = vmatpush1.msra.mxu0 0.0
        %2875 = vmatprep.subr.mxu0 0.0
        %2876 = vmatpush1.msra.mxu0 0.0
        %2877 = vmatprep.subr.mxu0 0.0
        %2878 = vmatpush1.msra.mxu0 0.0
        %2879 = vmatprep.subr.mxu0 0.0
        %2880 = vmatpush1.msra.mxu0 0.0
        %2881 = vmatprep.subr.mxu0 0.0
        %2882 = vmatpush1.msra.mxu0 0.0
        %2883 = vmatprep.subr.mxu0 0.0
        %2884 = vmatpush1.msra.mxu0 0.0
        %2885 = vmatprep.subr.mxu0 0.0
        %2886 = vmatpush1.msra.mxu0 0.0
        %2887 = vmatprep.subr.mxu0 0.0
        %2888 = vmatpush1.msra.mxu0 0.0
        %2889 = vmatprep.subr.mxu0 0.0
        %2890 = vmatpush1.msra.mxu0 0.0
        %2891 = vmatprep.subr.mxu0 0.0
        %2892 = vmatpush1.msra.mxu0 0.0
        %2893 = vmatprep.subr.mxu0 0.0
        %2894 = vmatpush1.msra.mxu0 0.0
        %2895 = vmatprep.subr.mxu0 0.0
        %2896 = vmatpush1.msra.mxu0 0.0
        %2897 = vmatprep.subr.mxu0 0.0
        %2898 = vmatpush1.msra.mxu0 0.0
        %2899 = vmatprep.subr.mxu0 0.0
        %2900 = vmatpush1.msra.mxu0 0.0
        %2901 = vmatprep.subr.mxu0 0.0
        %2902 = vmatpush1.msra.mxu0 0.0
        %2903 = vmatprep.subr.mxu0 0.0
        %2904 = vmatpush1.msra.mxu0 0.0
        %2905 = vmatprep.subr.mxu0 0.0
        %2906 = vmatpush1.msra.mxu0 0.0
        %2907 = vmatprep.subr.mxu0 0.0
        %2908 = vmatpush1.msra.mxu0 0.0
        %2909 = vmatprep.subr.mxu0 0.0
        %2910 = vmatpush1.msra.mxu0 0.0
        %2911 = vmatprep.subr.mxu0 0.0
        %2912 = vmatpush1.msra.mxu0 0.0
        %2913 = vmatprep.mubr.f32.mxu0 0.0
        %2914 = vmatmul.mubr.f32.gmra.mrb[0].mxu0 %v2734
        %v2915 = vpop.f32.mrb[0].mxu0
        %v2916 = vadd.f32 0.0, %v2915
        %v2917 = vpop.f32.mrb[0].mxu0
        %v2918 = vadd.f32 0.0, %v2917
        %2919 = vmatprep.mubr.f32.mxu0 0.0
        %2920 = vmatmul.mubr.f32.gmra.mrb[0].mxu0 %v2737
        %v2921 = vpop.f32.mrb[0].mxu0
        %v2922 = vadd.f32 0.0, %v2921
        %v2923 = vpop.f32.mrb[0].mxu0
        %v2924 = vadd.f32 0.0, %v2923
        %2925 = vmatprep.mubr.f32.mxu0 0.0
        %2926 = vmatmul.mubr.f32.gmra.mrb[0].mxu0 %v2740
        %v2927 = vpop.f32.mrb[0].mxu0
        %v2928 = vadd.f32 0.0, %v2927
        %v2929 = vpop.f32.mrb[0].mxu0
        %v2930 = vadd.f32 0.0, %v2929
        %2931 = vdwg.mxu0
        %2932 = vmatprep.subr.mxu0 %v2758
        %2933 = vmatpush1.msra.mxu0 %v2755
        %2934 = vmatprep.subr.mxu0 0.0
        %2935 = vmatpush1.msra.mxu0 0.0
        %2936 = vmatprep.subr.mxu0 0.0
        %2937 = vmatpush1.msra.mxu0 0.0
        %2938 = vmatprep.subr.mxu0 0.0
        %2939 = vmatpush1.msra.mxu0 0.0
        %2940 = vmatprep.subr.mxu0 0.0
        %2941 = vmatpush1.msra.mxu0 0.0
        %2942 = vmatprep.subr.mxu0 0.0
        %2943 = vmatpush1.msra.mxu0 0.0
        %2944 = vmatprep.subr.mxu0 0.0
        %2945 = vmatpush1.msra.mxu0 0.0
        %2946 = vmatprep.subr.mxu0 0.0
        %2947 = vmatpush1.msra.mxu0 0.0
        %2948 = vmatprep.subr.mxu0 0.0
        %2949 = vmatpush1.msra.mxu0 0.0
        %2950 = vmatprep.subr.mxu0 0.0
        %2951 = vmatpush1.msra.mxu0 0.0
        %2952 = vmatprep.subr.mxu0 0.0
        %2953 = vmatpush1.msra.mxu0 0.0
        %2954 = vmatprep.subr.mxu0 0.0
        %2955 = vmatpush1.msra.mxu0 0.0
        %2956 = vmatprep.subr.mxu0 0.0
        %2957 = vmatpush1.msra.mxu0 0.0
        %2958 = vmatprep.subr.mxu0 0.0
        %2959 = vmatpush1.msra.mxu0 0.0
        %2960 = vmatprep.subr.mxu0 0.0
        %2961 = vmatpush1.msra.mxu0 0.0
        %2962 = vmatprep.subr.mxu0 0.0
        %2963 = vmatpush1.msra.mxu0 0.0
        %2964 = vmatprep.subr.mxu0 0.0
        %2965 = vmatpush1.msra.mxu0 0.0
        %2966 = vmatprep.subr.mxu0 0.0
        %2967 = vmatpush1.msra.mxu0 0.0
        %2968 = vmatprep.subr.mxu0 0.0
        %2969 = vmatpush1.msra.mxu0 0.0
        %2970 = vmatprep.subr.mxu0 0.0
        %2971 = vmatpush1.msra.mxu0 0.0
        %2972 = vmatprep.subr.mxu0 0.0
        %2973 = vmatpush1.msra.mxu0 0.0
        %2974 = vmatprep.subr.mxu0 0.0
        %2975 = vmatpush1.msra.mxu0 0.0
        %2976 = vmatprep.subr.mxu0 0.0
        %2977 = vmatpush1.msra.mxu0 0.0
        %2978 = vmatprep.subr.mxu0 0.0
        %2979 = vmatpush1.msra.mxu0 0.0
        %2980 = vmatprep.subr.mxu0 0.0
        %2981 = vmatpush1.msra.mxu0 0.0
        %2982 = vmatprep.subr.mxu0 0.0
        %2983 = vmatpush1.msra.mxu0 0.0
        %2984 = vmatprep.subr.mxu0 0.0
        %2985 = vmatpush1.msra.mxu0 0.0
        %2986 = vmatprep.subr.mxu0 0.0
        %2987 = vmatpush1.msra.mxu0 0.0
        %2988 = vmatprep.subr.mxu0 0.0
        %2989 = vmatpush1.msra.mxu0 0.0
        %2990 = vmatprep.subr.mxu0 0.0
        %2991 = vmatpush1.msra.mxu0 0.0
        %2992 = vmatprep.subr.mxu0 0.0
        %2993 = vmatpush1.msra.mxu0 0.0
        %2994 = vmatprep.subr.mxu0 0.0
        %2995 = vmatpush1.msra.mxu0 0.0
        %2996 = vmatprep.mubr.f32.mxu0 0.0
        %2997 = vmatmul.mubr.f32.gmra.mrb[0].mxu0 %v2734
        %v2998 = vpop.f32.mrb[0].mxu0
        %v2999 = vadd.f32 0.0, %v2998
        %v3000 = vpop.f32.mrb[0].mxu0
        %v3001 = vadd.f32 0.0, %v3000
        %3002 = vmatprep.mubr.f32.mxu0 0.0
        %3003 = vmatmul.mubr.f32.gmra.mrb[0].mxu0 %v2737
        %v3004 = vpop.f32.mrb[0].mxu0
        %v3005 = vadd.f32 0.0, %v3004
        %v3006 = vpop.f32.mrb[0].mxu0
        %v3007 = vadd.f32 0.0, %v3006
        %3008 = vmatprep.mubr.f32.mxu0 0.0
        %3009 = vmatmul.mubr.f32.gmra.mrb[0].mxu0 %v2740
        %v3010 = vpop.f32.mrb[0].mxu0
        %v3011 = vadd.f32 0.0, %v3010
        %v3012 = vpop.f32.mrb[0].mxu0
        %v3013 = vadd.f32 0.0, %v3012
        %3014 = vdwg.mxu0
        %3015 = vmatprep.subr.mxu0 %v2764
        %3016 = vmatpush1.msra.mxu0 %v2761
        %3017 = vmatprep.subr.mxu0 0.0
        %3018 = vmatpush1.msra.mxu0 0.0
        %3019 = vmatprep.subr.mxu0 0.0
        %3020 = vmatpush1.msra.mxu0 0.0
        %3021 = vmatprep.subr.mxu0 0.0
        %3022 = vmatpush1.msra.mxu0 0.0
        %3023 = vmatprep.subr.mxu0 0.0
        %3024 = vmatpush1.msra.mxu0 0.0
        %3025 = vmatprep.subr.mxu0 0.0
        %3026 = vmatpush1.msra.mxu0 0.0
        %3027 = vmatprep.subr.mxu0 0.0
        %3028 = vmatpush1.msra.mxu0 0.0
        %3029 = vmatprep.subr.mxu0 0.0
        %3030 = vmatpush1.msra.mxu0 0.0
        %3031 = vmatprep.subr.mxu0 0.0
        %3032 = vmatpush1.msra.mxu0 0.0
        %3033 = vmatprep.subr.mxu0 0.0
        %3034 = vmatpush1.msra.mxu0 0.0
        %3035 = vmatprep.subr.mxu0 0.0
        %3036 = vmatpush1.msra.mxu0 0.0
        %3037 = vmatprep.subr.mxu0 0.0
        %3038 = vmatpush1.msra.mxu0 0.0
        %3039 = vmatprep.subr.mxu0 0.0
        %3040 = vmatpush1.msra.mxu0 0.0
        %3041 = vmatprep.subr.mxu0 0.0
        %3042 = vmatpush1.msra.mxu0 0.0
        %3043 = vmatprep.subr.mxu0 0.0
        %3044 = vmatpush1.msra.mxu0 0.0
        %3045 = vmatprep.subr.mxu0 0.0
        %3046 = vmatpush1.msra.mxu0 0.0
        %3047 = vmatprep.subr.mxu0 0.0
        %3048 = vmatpush1.msra.mxu0 0.0
        %3049 = vmatprep.subr.mxu0 0.0
        %3050 = vmatpush1.msra.mxu0 0.0
        %3051 = vmatprep.subr.mxu0 0.0
        %3052 = vmatpush1.msra.mxu0 0.0
        %3053 = vmatprep.subr.mxu0 0.0
        %3054 = vmatpush1.msra.mxu0 0.0
        %3055 = vmatprep.subr.mxu0 0.0
        %3056 = vmatpush1.msra.mxu0 0.0
        %3057 = vmatprep.subr.mxu0 0.0
        %3058 = vmatpush1.msra.mxu0 0.0
        %3059 = vmatprep.subr.mxu0 0.0
        %3060 = vmatpush1.msra.mxu0 0.0
        %3061 = vmatprep.subr.mxu0 0.0
        %3062 = vmatpush1.msra.mxu0 0.0
        %3063 = vmatprep.subr.mxu0 0.0
        %3064 = vmatpush1.msra.mxu0 0.0
        %3065 = vmatprep.subr.mxu0 0.0
        %3066 = vmatpush1.msra.mxu0 0.0
        %3067 = vmatprep.subr.mxu0 0.0
        %3068 = vmatpush1.msra.mxu0 0.0
        %3069 = vmatprep.subr.mxu0 0.0
        %3070 = vmatpush1.msra.mxu0 0.0
        %3071 = vmatprep.subr.mxu0 0.0
        %3072 = vmatpush1.msra.mxu0 0.0
        %3073 = vmatprep.subr.mxu0 0.0
        %3074 = vmatpush1.msra.mxu0 0.0
        %3075 = vmatprep.subr.mxu0 0.0
        %3076 = vmatpush1.msra.mxu0 0.0
        %3077 = vmatprep.subr.mxu0 0.0
        %3078 = vmatpush1.msra.mxu0 0.0
        %3079 = vmatprep.mubr.f32.mxu0 0.0
        %3080 = vmatmul.mubr.f32.gmra.mrb[0].mxu0 %v2734
        %v3081 = vpop.f32.mrb[0].mxu0
        %v3082 = vadd.f32 0.0, %v3081
        %v3083 = vpop.f32.mrb[0].mxu0
        %v3084 = vadd.f32 0.0, %v3083
        %3085 = vmatprep.mubr.f32.mxu0 0.0
        %3086 = vmatmul.mubr.f32.gmra.mrb[0].mxu0 %v2737
        %v3087 = vpop.f32.mrb[0].mxu0
        %v3088 = vadd.f32 0.0, %v3087
        %v3089 = vpop.f32.mrb[0].mxu0
        %v3090 = vadd.f32 0.0, %v3089
        %3091 = vmatprep.mubr.f32.mxu0 0.0
        %3092 = vmatmul.mubr.f32.gmra.mrb[0].mxu0 %v2740
        %v3093 = vpop.f32.mrb[0].mxu0
        %v3094 = vadd.f32 0.0, %v3093
        %v3095 = vpop.f32.mrb[0].mxu0
        %v3096 = vadd.f32 0.0, %v3095
        %3097 = vdwg.mxu0
        %3098 = vrot.lane.b32.xlu0 %v2833, 4
        %v3099 = vpop.permute.xlu0 %3098
        %3100 = vrot.lane.b32.xlu0 %v2835, 4
        %v3101 = vpop.permute.xlu0 %3100
        %3102 = vrot.lane.b32.xlu0 %v2916, 4
        %v3103 = vpop.permute.xlu0 %3102
        %3104 = vrot.lane.b32.xlu0 %v2918, 4
        %v3105 = vpop.permute.xlu0 %3104
        %3106 = vrot.lane.b32.xlu0 %v2999, 4
        %v3107 = vpop.permute.xlu0 %3106
        %3108 = vrot.lane.b32.xlu0 %v3001, 4
        %v3109 = vpop.permute.xlu0 %3108
        %3110 = vrot.lane.b32.xlu0 %v3082, 4
        %v3111 = vpop.permute.xlu0 %3110
        %3112 = vrot.lane.b32.xlu0 %v3084, 4
        %v3113 = vpop.permute.xlu0 %3112
        %vm3114 = vcmp.lt.s32.totalorder %v345, 4
        %v3115 = vsel %vm3114, %v3111, %v3113
        %v3116 = vsel %vm3114, %v3109, %v3111
        %v3117 = vsel %vm3114, %v3107, %v3109
        %v3118 = vsel %vm3114, %v3105, %v3107
        %v3119 = vsel %vm3114, %v3103, %v3105
        %v3120 = vsel %vm3114, %v3101, %v3103
        %v3121 = vsel %vm3114, %v3099, %v3101
        %v3122 = vsel %vm3114, %v3113, %v3099
        %v3123 = vsel %vm489, 1, 0
        %v3124 = vsel %vm490, 1, 0
        %v3125 = vsel %vm491, 1, 0
        %v3126 = vsel %vm492, 1, 0
        %v3127 = vsel %vm493, 1, 0
        %v3128 = vsel %vm494, 1, 0
        %v3129 = vsel %vm495, 1, 0
        %v3130 = vsel %vm496, 1, 0
        %vm3131 = vcmp.eq.s32.totalorder %v3123, 1
        %vm3132 = vcmp.eq.s32.totalorder %v3124, 1
        %vm3133 = vcmp.eq.s32.totalorder %v3125, 1
        %vm3134 = vcmp.eq.s32.totalorder %v3126, 1
        %vm3135 = vcmp.eq.s32.totalorder %v3127, 1
        %vm3136 = vcmp.eq.s32.totalorder %v3128, 1
        %vm3137 = vcmp.eq.s32.totalorder %v3129, 1
        %vm3138 = vcmp.eq.s32.totalorder %v3130, 1
        %v3139 = vsel %vm3131, %v3122, 0.0
        %v3140 = vsel %vm3132, %v3121, 0.0
        %v3141 = vsel %vm3133, %v3120, 0.0
        %v3142 = vsel %vm3134, %v3119, 0.0
        %v3143 = vsel %vm3135, %v3118, 0.0
        %v3144 = vsel %vm3136, %v3117, 0.0
        %v3145 = vsel %vm3137, %v3116, 0.0
        %v3146 = vsel %vm3138, %v3115, 0.0
        %v3147 = vadd.f32 %v3139, %v2839
        %v3148 = vadd.f32 %v3140, %v2841
        %v3149 = vadd.f32 %v3141, %v2922
        %v3150 = vadd.f32 %v3142, %v2924
        %v3151 = vadd.f32 %v3143, %v3005
        %v3152 = vadd.f32 %v3144, %v3007
        %v3153 = vadd.f32 %v3145, %v3088
        %v3154 = vadd.f32 %v3146, %v3090
        %3155 = vrot.lane.b32.xlu0 %v2845, 124
        %v3156 = vpop.permute.xlu0 %3155
        %3157 = vrot.lane.b32.xlu0 %v2847, 124
        %v3158 = vpop.permute.xlu0 %3157
        %3159 = vrot.lane.b32.xlu0 %v2928, 124
        %v3160 = vpop.permute.xlu0 %3159
        %3161 = vrot.lane.b32.xlu0 %v2930, 124
        %v3162 = vpop.permute.xlu0 %3161
        %3163 = vrot.lane.b32.xlu0 %v3011, 124
        %v3164 = vpop.permute.xlu0 %3163
        %3165 = vrot.lane.b32.xlu0 %v3013, 124
        %v3166 = vpop.permute.xlu0 %3165
        %3167 = vrot.lane.b32.xlu0 %v3094, 124
        %v3168 = vpop.permute.xlu0 %3167
        %3169 = vrot.lane.b32.xlu0 %v3096, 124
        %v3170 = vpop.permute.xlu0 %3169
        %vm3171 = vcmp.lt.s32.totalorder %v345, 124
        %v3172 = vsel %vm3171, %v3168, %v3170
        %v3173 = vsel %vm3171, %v3166, %v3168
        %v3174 = vsel %vm3171, %v3164, %v3166
        %v3175 = vsel %vm3171, %v3162, %v3164
        %v3176 = vsel %vm3171, %v3160, %v3162
        %v3177 = vsel %vm3171, %v3158, %v3160
        %v3178 = vsel %vm3171, %v3156, %v3158
        %v3179 = vsel %vm3171, %v3170, %v3156
        %v3180 = vsel %vm481, 1, 0
        %v3181 = vsel %vm482, 1, 0
        %v3182 = vsel %vm483, 1, 0
        %v3183 = vsel %vm484, 1, 0
        %v3184 = vsel %vm485, 1, 0
        %v3185 = vsel %vm486, 1, 0
        %v3186 = vsel %vm487, 1, 0
        %v3187 = vsel %vm488, 1, 0
        %vm3188 = vcmp.eq.s32.totalorder %v3180, 1
        %vm3189 = vcmp.eq.s32.totalorder %v3181, 1
        %vm3190 = vcmp.eq.s32.totalorder %v3182, 1
        %vm3191 = vcmp.eq.s32.totalorder %v3183, 1
        %vm3192 = vcmp.eq.s32.totalorder %v3184, 1
        %vm3193 = vcmp.eq.s32.totalorder %v3185, 1
        %vm3194 = vcmp.eq.s32.totalorder %v3186, 1
        %vm3195 = vcmp.eq.s32.totalorder %v3187, 1
        %v3196 = vsel %vm3188, %v3178, 0.0
        %v3197 = vsel %vm3189, %v3177, 0.0
        %v3198 = vsel %vm3190, %v3176, 0.0
        %v3199 = vsel %vm3191, %v3175, 0.0
        %v3200 = vsel %vm3192, %v3174, 0.0
        %v3201 = vsel %vm3193, %v3173, 0.0
        %v3202 = vsel %vm3194, %v3172, 0.0
        %v3203 = vsel %vm3195, %v3179, 0.0
        %v3204 = vadd.f32 %v3147, %v3196
        %v3205 = vadd.f32 %v3148, %v3197
        %v3206 = vadd.f32 %v3149, %v3198
        %v3207 = vadd.f32 %v3150, %v3199
        %v3208 = vadd.f32 %v3151, %v3200
        %v3209 = vadd.f32 %v3152, %v3201
        %v3210 = vadd.f32 %v3153, %v3202
        %v3211 = vadd.f32 %v3154, %v3203
        %3213 = vset.pattern.permute.xlu0 0
        %3214 = vperm.xlu0 %3213, %v518
        %v3215 = vpop.permute.xlu0 %3214
        %v3217 = vadd.f32 %v3204, %v3215
        %v3218 = vadd.f32 %v3205, %v3215
        %v3219 = vadd.f32 %v3206, %v3215
        %v3220 = vadd.f32 %v3207, %v3215
        %v3221 = vadd.f32 %v3208, %v3215
        %v3222 = vadd.f32 %v3209, %v3215
        %v3223 = vadd.f32 %v3210, %v3215
        %v3224 = vadd.f32 %v3211, %v3215
        %v3225 = vmax.f32 %v3217, 0.0
        %v3226 = vmax.f32 %v3218, 0.0
        %v3227 = vmax.f32 %v3219, 0.0
        %v3228 = vmax.f32 %v3220, 0.0
        %v3229 = vmax.f32 %v3221, 0.0
        %v3230 = vmax.f32 %v3222, 0.0
        %v3231 = vmax.f32 %v3223, 0.0
        %v3232 = vmax.f32 %v3224, 0.0
        %s3233 = scalar_lea.vmem %s3, 48
        %v3234 = vld [vmem:[%s3233] sm:$0xff]
        %v3235 = vld [vmem:[%s3233 + $0x8] sm:$0xff]
        %v3236 = vld [vmem:[%s3233 + $0x10] sm:$0xff]
        %v3238 = vsel %vm1208, %v3234, 0
        %v3241 = vsel %vm1208, %v3235, 0
        %v3244 = vsel %vm1208, %v3236, 0
        %v3247 = vsel %vm1218, %v3225, 0
        %v3250 = vsel %vm1218, %v3226, 0
        %v3253 = vsel %vm1218, %v3227, 0
        %v3256 = vsel %vm1218, %v3228, 0
        %v3259 = vsel %vm1218, %v3229, 0
        %v3262 = vsel %vm1218, %v3230, 0
        %v3265 = vsel %vm1218, %v3231, 0
        %v3268 = vsel %vm1218, %v3232, 0
        %3270 = vmatprep.subr.mxu0 %v3250
        %3271 = vmatpush1.msra.mxu0 %v3247
        %3272 = vmatprep.subr.mxu0 0.0
        %3273 = vmatpush1.msra.mxu0 0.0
        %3274 = vmatprep.subr.mxu0 0.0
        %3275 = vmatpush1.msra.mxu0 0.0
        %3276 = vmatprep.subr.mxu0 0.0
        %3277 = vmatpush1.msra.mxu0 0.0
        %3278 = vmatprep.subr.mxu0 0.0
        %3279 = vmatpush1.msra.mxu0 0.0
        %3280 = vmatprep.subr.mxu0 0.0
        %3281 = vmatpush1.msra.mxu0 0.0
        %3282 = vmatprep.subr.mxu0 0.0
        %3283 = vmatpush1.msra.mxu0 0.0
        %3284 = vmatprep.subr.mxu0 0.0
        %3285 = vmatpush1.msra.mxu0 0.0
        %3286 = vmatprep.subr.mxu0 0.0
        %3287 = vmatpush1.msra.mxu0 0.0
        %3288 = vmatprep.subr.mxu0 0.0
        %3289 = vmatpush1.msra.mxu0 0.0
        %3290 = vmatprep.subr.mxu0 0.0
        %3291 = vmatpush1.msra.mxu0 0.0
        %3292 = vmatprep.subr.mxu0 0.0
        %3293 = vmatpush1.msra.mxu0 0.0
        %3294 = vmatprep.subr.mxu0 0.0
        %3295 = vmatpush1.msra.mxu0 0.0
        %3296 = vmatprep.subr.mxu0 0.0
        %3297 = vmatpush1.msra.mxu0 0.0
        %3298 = vmatprep.subr.mxu0 0.0
        %3299 = vmatpush1.msra.mxu0 0.0
        %3300 = vmatprep.subr.mxu0 0.0
        %3301 = vmatpush1.msra.mxu0 0.0
        %3302 = vmatprep.subr.mxu0 0.0
        %3303 = vmatpush1.msra.mxu0 0.0
        %3304 = vmatprep.subr.mxu0 0.0
        %3305 = vmatpush1.msra.mxu0 0.0
        %3306 = vmatprep.subr.mxu0 0.0
        %3307 = vmatpush1.msra.mxu0 0.0
        %3308 = vmatprep.subr.mxu0 0.0
        %3309 = vmatpush1.msra.mxu0 0.0
        %3310 = vmatprep.subr.mxu0 0.0
        %3311 = vmatpush1.msra.mxu0 0.0
        %3312 = vmatprep.subr.mxu0 0.0
        %3313 = vmatpush1.msra.mxu0 0.0
        %3314 = vmatprep.subr.mxu0 0.0
        %3315 = vmatpush1.msra.mxu0 0.0
        %3316 = vmatprep.subr.mxu0 0.0
        %3317 = vmatpush1.msra.mxu0 0.0
        %3318 = vmatprep.subr.mxu0 0.0
        %3319 = vmatpush1.msra.mxu0 0.0
        %3320 = vmatprep.subr.mxu0 0.0
        %3321 = vmatpush1.msra.mxu0 0.0
        %3322 = vmatprep.subr.mxu0 0.0
        %3323 = vmatpush1.msra.mxu0 0.0
        %3324 = vmatprep.subr.mxu0 0.0
        %3325 = vmatpush1.msra.mxu0 0.0
        %3326 = vmatprep.subr.mxu0 0.0
        %3327 = vmatpush1.msra.mxu0 0.0
        %3328 = vmatprep.subr.mxu0 0.0
        %3329 = vmatpush1.msra.mxu0 0.0
        %3330 = vmatprep.subr.mxu0 0.0
        %3331 = vmatpush1.msra.mxu0 0.0
        %3332 = vmatprep.subr.mxu0 0.0
        %3333 = vmatpush1.msra.mxu0 0.0
        %3334 = vmatprep.mubr.f32.mxu0 0.0
        %3335 = vmatmul.mubr.f32.gmra.mrb[0].mxu0 %v3238
        %v3336 = vpop.f32.mrb[0].mxu0
        %v3337 = vadd.f32 0.0, %v3336
        %v3338 = vpop.f32.mrb[0].mxu0
        %v3339 = vadd.f32 0.0, %v3338
        %3340 = vmatprep.mubr.f32.mxu0 0.0
        %3341 = vmatmul.mubr.f32.gmra.mrb[0].mxu0 %v3241
        %v3342 = vpop.f32.mrb[0].mxu0
        %v3343 = vadd.f32 0.0, %v3342
        %v3344 = vpop.f32.mrb[0].mxu0
        %v3345 = vadd.f32 0.0, %v3344
        %3346 = vmatprep.mubr.f32.mxu0 0.0
        %3347 = vmatmul.mubr.f32.gmra.mrb[0].mxu0 %v3244
        %v3348 = vpop.f32.mrb[0].mxu0
        %v3349 = vadd.f32 0.0, %v3348
        %v3350 = vpop.f32.mrb[0].mxu0
        %v3351 = vadd.f32 0.0, %v3350
        %3352 = vdwg.mxu0
        %3353 = vmatprep.subr.mxu0 %v3256
        %3354 = vmatpush1.msra.mxu0 %v3253
        %3355 = vmatprep.subr.mxu0 0.0
        %3356 = vmatpush1.msra.mxu0 0.0
        %3357 = vmatprep.subr.mxu0 0.0
        %3358 = vmatpush1.msra.mxu0 0.0
        %3359 = vmatprep.subr.mxu0 0.0
        %3360 = vmatpush1.msra.mxu0 0.0
        %3361 = vmatprep.subr.mxu0 0.0
        %3362 = vmatpush1.msra.mxu0 0.0
        %3363 = vmatprep.subr.mxu0 0.0
        %3364 = vmatpush1.msra.mxu0 0.0
        %3365 = vmatprep.subr.mxu0 0.0
        %3366 = vmatpush1.msra.mxu0 0.0
        %3367 = vmatprep.subr.mxu0 0.0
        %3368 = vmatpush1.msra.mxu0 0.0
        %3369 = vmatprep.subr.mxu0 0.0
        %3370 = vmatpush1.msra.mxu0 0.0
        %3371 = vmatprep.subr.mxu0 0.0
        %3372 = vmatpush1.msra.mxu0 0.0
        %3373 = vmatprep.subr.mxu0 0.0
        %3374 = vmatpush1.msra.mxu0 0.0
        %3375 = vmatprep.subr.mxu0 0.0
        %3376 = vmatpush1.msra.mxu0 0.0
        %3377 = vmatprep.subr.mxu0 0.0
        %3378 = vmatpush1.msra.mxu0 0.0
        %3379 = vmatprep.subr.mxu0 0.0
        %3380 = vmatpush1.msra.mxu0 0.0
        %3381 = vmatprep.subr.mxu0 0.0
        %3382 = vmatpush1.msra.mxu0 0.0
        %3383 = vmatprep.subr.mxu0 0.0
        %3384 = vmatpush1.msra.mxu0 0.0
        %3385 = vmatprep.subr.mxu0 0.0
        %3386 = vmatpush1.msra.mxu0 0.0
        %3387 = vmatprep.subr.mxu0 0.0
        %3388 = vmatpush1.msra.mxu0 0.0
        %3389 = vmatprep.subr.mxu0 0.0
        %3390 = vmatpush1.msra.mxu0 0.0
        %3391 = vmatprep.subr.mxu0 0.0
        %3392 = vmatpush1.msra.mxu0 0.0
        %3393 = vmatprep.subr.mxu0 0.0
        %3394 = vmatpush1.msra.mxu0 0.0
        %3395 = vmatprep.subr.mxu0 0.0
        %3396 = vmatpush1.msra.mxu0 0.0
        %3397 = vmatprep.subr.mxu0 0.0
        %3398 = vmatpush1.msra.mxu0 0.0
        %3399 = vmatprep.subr.mxu0 0.0
        %3400 = vmatpush1.msra.mxu0 0.0
        %3401 = vmatprep.subr.mxu0 0.0
        %3402 = vmatpush1.msra.mxu0 0.0
        %3403 = vmatprep.subr.mxu0 0.0
        %3404 = vmatpush1.msra.mxu0 0.0
        %3405 = vmatprep.subr.mxu0 0.0
        %3406 = vmatpush1.msra.mxu0 0.0
        %3407 = vmatprep.subr.mxu0 0.0
        %3408 = vmatpush1.msra.mxu0 0.0
        %3409 = vmatprep.subr.mxu0 0.0
        %3410 = vmatpush1.msra.mxu0 0.0
        %3411 = vmatprep.subr.mxu0 0.0
        %3412 = vmatpush1.msra.mxu0 0.0
        %3413 = vmatprep.subr.mxu0 0.0
        %3414 = vmatpush1.msra.mxu0 0.0
        %3415 = vmatprep.subr.mxu0 0.0
        %3416 = vmatpush1.msra.mxu0 0.0
        %3417 = vmatprep.mubr.f32.mxu0 0.0
        %3418 = vmatmul.mubr.f32.gmra.mrb[0].mxu0 %v3238
        %v3419 = vpop.f32.mrb[0].mxu0
        %v3420 = vadd.f32 0.0, %v3419
        %v3421 = vpop.f32.mrb[0].mxu0
        %v3422 = vadd.f32 0.0, %v3421
        %3423 = vmatprep.mubr.f32.mxu0 0.0
        %3424 = vmatmul.mubr.f32.gmra.mrb[0].mxu0 %v3241
        %v3425 = vpop.f32.mrb[0].mxu0
        %v3426 = vadd.f32 0.0, %v3425
        %v3427 = vpop.f32.mrb[0].mxu0
        %v3428 = vadd.f32 0.0, %v3427
        %3429 = vmatprep.mubr.f32.mxu0 0.0
        %3430 = vmatmul.mubr.f32.gmra.mrb[0].mxu0 %v3244
        %v3431 = vpop.f32.mrb[0].mxu0
        %v3432 = vadd.f32 0.0, %v3431
        %v3433 = vpop.f32.mrb[0].mxu0
        %v3434 = vadd.f32 0.0, %v3433
        %3435 = vdwg.mxu0
        %3436 = vmatprep.subr.mxu0 %v3262
        %3437 = vmatpush1.msra.mxu0 %v3259
        %3438 = vmatprep.subr.mxu0 0.0
        %3439 = vmatpush1.msra.mxu0 0.0
        %3440 = vmatprep.subr.mxu0 0.0
        %3441 = vmatpush1.msra.mxu0 0.0
        %3442 = vmatprep.subr.mxu0 0.0
        %3443 = vmatpush1.msra.mxu0 0.0
        %3444 = vmatprep.subr.mxu0 0.0
        %3445 = vmatpush1.msra.mxu0 0.0
        %3446 = vmatprep.subr.mxu0 0.0
        %3447 = vmatpush1.msra.mxu0 0.0
        %3448 = vmatprep.subr.mxu0 0.0
        %3449 = vmatpush1.msra.mxu0 0.0
        %3450 = vmatprep.subr.mxu0 0.0
        %3451 = vmatpush1.msra.mxu0 0.0
        %3452 = vmatprep.subr.mxu0 0.0
        %3453 = vmatpush1.msra.mxu0 0.0
        %3454 = vmatprep.subr.mxu0 0.0
        %3455 = vmatpush1.msra.mxu0 0.0
        %3456 = vmatprep.subr.mxu0 0.0
        %3457 = vmatpush1.msra.mxu0 0.0
        %3458 = vmatprep.subr.mxu0 0.0
        %3459 = vmatpush1.msra.mxu0 0.0
        %3460 = vmatprep.subr.mxu0 0.0
        %3461 = vmatpush1.msra.mxu0 0.0
        %3462 = vmatprep.subr.mxu0 0.0
        %3463 = vmatpush1.msra.mxu0 0.0
        %3464 = vmatprep.subr.mxu0 0.0
        %3465 = vmatpush1.msra.mxu0 0.0
        %3466 = vmatprep.subr.mxu0 0.0
        %3467 = vmatpush1.msra.mxu0 0.0
        %3468 = vmatprep.subr.mxu0 0.0
        %3469 = vmatpush1.msra.mxu0 0.0
        %3470 = vmatprep.subr.mxu0 0.0
        %3471 = vmatpush1.msra.mxu0 0.0
        %3472 = vmatprep.subr.mxu0 0.0
        %3473 = vmatpush1.msra.mxu0 0.0
        %3474 = vmatprep.subr.mxu0 0.0
        %3475 = vmatpush1.msra.mxu0 0.0
        %3476 = vmatprep.subr.mxu0 0.0
        %3477 = vmatpush1.msra.mxu0 0.0
        %3478 = vmatprep.subr.mxu0 0.0
        %3479 = vmatpush1.msra.mxu0 0.0
        %3480 = vmatprep.subr.mxu0 0.0
        %3481 = vmatpush1.msra.mxu0 0.0
        %3482 = vmatprep.subr.mxu0 0.0
        %3483 = vmatpush1.msra.mxu0 0.0
        %3484 = vmatprep.subr.mxu0 0.0
        %3485 = vmatpush1.msra.mxu0 0.0
        %3486 = vmatprep.subr.mxu0 0.0
        %3487 = vmatpush1.msra.mxu0 0.0
        %3488 = vmatprep.subr.mxu0 0.0
        %3489 = vmatpush1.msra.mxu0 0.0
        %3490 = vmatprep.subr.mxu0 0.0
        %3491 = vmatpush1.msra.mxu0 0.0
        %3492 = vmatprep.subr.mxu0 0.0
        %3493 = vmatpush1.msra.mxu0 0.0
        %3494 = vmatprep.subr.mxu0 0.0
        %3495 = vmatpush1.msra.mxu0 0.0
        %3496 = vmatprep.subr.mxu0 0.0
        %3497 = vmatpush1.msra.mxu0 0.0
        %3498 = vmatprep.subr.mxu0 0.0
        %3499 = vmatpush1.msra.mxu0 0.0
        %3500 = vmatprep.mubr.f32.mxu0 0.0
        %3501 = vmatmul.mubr.f32.gmra.mrb[0].mxu0 %v3238
        %v3502 = vpop.f32.mrb[0].mxu0
        %v3503 = vadd.f32 0.0, %v3502
        %v3504 = vpop.f32.mrb[0].mxu0
        %v3505 = vadd.f32 0.0, %v3504
        %3506 = vmatprep.mubr.f32.mxu0 0.0
        %3507 = vmatmul.mubr.f32.gmra.mrb[0].mxu0 %v3241
        %v3508 = vpop.f32.mrb[0].mxu0
        %v3509 = vadd.f32 0.0, %v3508
        %v3510 = vpop.f32.mrb[0].mxu0
        %v3511 = vadd.f32 0.0, %v3510
        %3512 = vmatprep.mubr.f32.mxu0 0.0
        %3513 = vmatmul.mubr.f32.gmra.mrb[0].mxu0 %v3244
        %v3514 = vpop.f32.mrb[0].mxu0
        %v3515 = vadd.f32 0.0, %v3514
        %v3516 = vpop.f32.mrb[0].mxu0
        %v3517 = vadd.f32 0.0, %v3516
        %3518 = vdwg.mxu0
        %3519 = vmatprep.subr.mxu0 %v3268
        %3520 = vmatpush1.msra.mxu0 %v3265
        %3521 = vmatprep.subr.mxu0 0.0
        %3522 = vmatpush1.msra.mxu0 0.0
        %3523 = vmatprep.subr.mxu0 0.0
        %3524 = vmatpush1.msra.mxu0 0.0
        %3525 = vmatprep.subr.mxu0 0.0
        %3526 = vmatpush1.msra.mxu0 0.0
        %3527 = vmatprep.subr.mxu0 0.0
        %3528 = vmatpush1.msra.mxu0 0.0
        %3529 = vmatprep.subr.mxu0 0.0
        %3530 = vmatpush1.msra.mxu0 0.0
        %3531 = vmatprep.subr.mxu0 0.0
        %3532 = vmatpush1.msra.mxu0 0.0
        %3533 = vmatprep.subr.mxu0 0.0
        %3534 = vmatpush1.msra.mxu0 0.0
        %3535 = vmatprep.subr.mxu0 0.0
        %3536 = vmatpush1.msra.mxu0 0.0
        %3537 = vmatprep.subr.mxu0 0.0
        %3538 = vmatpush1.msra.mxu0 0.0
        %3539 = vmatprep.subr.mxu0 0.0
        %3540 = vmatpush1.msra.mxu0 0.0
        %3541 = vmatprep.subr.mxu0 0.0
        %3542 = vmatpush1.msra.mxu0 0.0
        %3543 = vmatprep.subr.mxu0 0.0
        %3544 = vmatpush1.msra.mxu0 0.0
        %3545 = vmatprep.subr.mxu0 0.0
        %3546 = vmatpush1.msra.mxu0 0.0
        %3547 = vmatprep.subr.mxu0 0.0
        %3548 = vmatpush1.msra.mxu0 0.0
        %3549 = vmatprep.subr.mxu0 0.0
        %3550 = vmatpush1.msra.mxu0 0.0
        %3551 = vmatprep.subr.mxu0 0.0
        %3552 = vmatpush1.msra.mxu0 0.0
        %3553 = vmatprep.subr.mxu0 0.0
        %3554 = vmatpush1.msra.mxu0 0.0
        %3555 = vmatprep.subr.mxu0 0.0
        %3556 = vmatpush1.msra.mxu0 0.0
        %3557 = vmatprep.subr.mxu0 0.0
        %3558 = vmatpush1.msra.mxu0 0.0
        %3559 = vmatprep.subr.mxu0 0.0
        %3560 = vmatpush1.msra.mxu0 0.0
        %3561 = vmatprep.subr.mxu0 0.0
        %3562 = vmatpush1.msra.mxu0 0.0
        %3563 = vmatprep.subr.mxu0 0.0
        %3564 = vmatpush1.msra.mxu0 0.0
        %3565 = vmatprep.subr.mxu0 0.0
        %3566 = vmatpush1.msra.mxu0 0.0
        %3567 = vmatprep.subr.mxu0 0.0
        %3568 = vmatpush1.msra.mxu0 0.0
        %3569 = vmatprep.subr.mxu0 0.0
        %3570 = vmatpush1.msra.mxu0 0.0
        %3571 = vmatprep.subr.mxu0 0.0
        %3572 = vmatpush1.msra.mxu0 0.0
        %3573 = vmatprep.subr.mxu0 0.0
        %3574 = vmatpush1.msra.mxu0 0.0
        %3575 = vmatprep.subr.mxu0 0.0
        %3576 = vmatpush1.msra.mxu0 0.0
        %3577 = vmatprep.subr.mxu0 0.0
        %3578 = vmatpush1.msra.mxu0 0.0
        %3579 = vmatprep.subr.mxu0 0.0
        %3580 = vmatpush1.msra.mxu0 0.0
        %3581 = vmatprep.subr.mxu0 0.0
        %3582 = vmatpush1.msra.mxu0 0.0
        %3583 = vmatprep.mubr.f32.mxu0 0.0
        %3584 = vmatmul.mubr.f32.gmra.mrb[0].mxu0 %v3238
        %v3585 = vpop.f32.mrb[0].mxu0
        %v3586 = vadd.f32 0.0, %v3585
        %v3587 = vpop.f32.mrb[0].mxu0
        %v3588 = vadd.f32 0.0, %v3587
        %3589 = vmatprep.mubr.f32.mxu0 0.0
        %3590 = vmatmul.mubr.f32.gmra.mrb[0].mxu0 %v3241
        %v3591 = vpop.f32.mrb[0].mxu0
        %v3592 = vadd.f32 0.0, %v3591
        %v3593 = vpop.f32.mrb[0].mxu0
        %v3594 = vadd.f32 0.0, %v3593
        %3595 = vmatprep.mubr.f32.mxu0 0.0
        %3596 = vmatmul.mubr.f32.gmra.mrb[0].mxu0 %v3244
        %v3597 = vpop.f32.mrb[0].mxu0
        %v3598 = vadd.f32 0.0, %v3597
        %v3599 = vpop.f32.mrb[0].mxu0
        %v3600 = vadd.f32 0.0, %v3599
        %3601 = vdwg.mxu0
        %3602 = vrot.lane.b32.xlu0 %v3337, 4
        %v3603 = vpop.permute.xlu0 %3602
        %3604 = vrot.lane.b32.xlu0 %v3339, 4
        %v3605 = vpop.permute.xlu0 %3604
        %3606 = vrot.lane.b32.xlu0 %v3420, 4
        %v3607 = vpop.permute.xlu0 %3606
        %3608 = vrot.lane.b32.xlu0 %v3422, 4
        %v3609 = vpop.permute.xlu0 %3608
        %3610 = vrot.lane.b32.xlu0 %v3503, 4
        %v3611 = vpop.permute.xlu0 %3610
        %3612 = vrot.lane.b32.xlu0 %v3505, 4
        %v3613 = vpop.permute.xlu0 %3612
        %3614 = vrot.lane.b32.xlu0 %v3586, 4
        %v3615 = vpop.permute.xlu0 %3614
        %3616 = vrot.lane.b32.xlu0 %v3588, 4
        %v3617 = vpop.permute.xlu0 %3616
        %v3618 = vsel %vm3114, %v3615, %v3617
        %v3619 = vsel %vm3114, %v3613, %v3615
        %v3620 = vsel %vm3114, %v3611, %v3613
        %v3621 = vsel %vm3114, %v3609, %v3611
        %v3622 = vsel %vm3114, %v3607, %v3609
        %v3623 = vsel %vm3114, %v3605, %v3607
        %v3624 = vsel %vm3114, %v3603, %v3605
        %v3625 = vsel %vm3114, %v3617, %v3603
        %v3626 = vsel %vm3131, %v3625, 0.0
        %v3627 = vsel %vm3132, %v3624, 0.0
        %v3628 = vsel %vm3133, %v3623, 0.0
        %v3629 = vsel %vm3134, %v3622, 0.0
        %v3630 = vsel %vm3135, %v3621, 0.0
        %v3631 = vsel %vm3136, %v3620, 0.0
        %v3632 = vsel %vm3137, %v3619, 0.0
        %v3633 = vsel %vm3138, %v3618, 0.0
        %v3634 = vadd.f32 %v3626, %v3343
        %v3635 = vadd.f32 %v3627, %v3345
        %v3636 = vadd.f32 %v3628, %v3426
        %v3637 = vadd.f32 %v3629, %v3428
        %v3638 = vadd.f32 %v3630, %v3509
        %v3639 = vadd.f32 %v3631, %v3511
        %v3640 = vadd.f32 %v3632, %v3592
        %v3641 = vadd.f32 %v3633, %v3594
        %3642 = vrot.lane.b32.xlu0 %v3349, 124
        %v3643 = vpop.permute.xlu0 %3642
        %3644 = vrot.lane.b32.xlu0 %v3351, 124
        %v3645 = vpop.permute.xlu0 %3644
        %3646 = vrot.lane.b32.xlu0 %v3432, 124
        %v3647 = vpop.permute.xlu0 %3646
        %3648 = vrot.lane.b32.xlu0 %v3434, 124
        %v3649 = vpop.permute.xlu0 %3648
        %3650 = vrot.lane.b32.xlu0 %v3515, 124
        %v3651 = vpop.permute.xlu0 %3650
        %3652 = vrot.lane.b32.xlu0 %v3517, 124
        %v3653 = vpop.permute.xlu0 %3652
        %3654 = vrot.lane.b32.xlu0 %v3598, 124
        %v3655 = vpop.permute.xlu0 %3654
        %3656 = vrot.lane.b32.xlu0 %v3600, 124
        %v3657 = vpop.permute.xlu0 %3656
        %v3658 = vsel %vm3171, %v3655, %v3657
        %v3659 = vsel %vm3171, %v3653, %v3655
        %v3660 = vsel %vm3171, %v3651, %v3653
        %v3661 = vsel %vm3171, %v3649, %v3651
        %v3662 = vsel %vm3171, %v3647, %v3649
        %v3663 = vsel %vm3171, %v3645, %v3647
        %v3664 = vsel %vm3171, %v3643, %v3645
        %v3665 = vsel %vm3171, %v3657, %v3643
        %v3666 = vsel %vm3188, %v3664, 0.0
        %v3667 = vsel %vm3189, %v3663, 0.0
        %v3668 = vsel %vm3190, %v3662, 0.0
        %v3669 = vsel %vm3191, %v3661, 0.0
        %v3670 = vsel %vm3192, %v3660, 0.0
        %v3671 = vsel %vm3193, %v3659, 0.0
        %v3672 = vsel %vm3194, %v3658, 0.0
        %v3673 = vsel %vm3195, %v3665, 0.0
        %v3674 = vadd.f32 %v3634, %v3666
        %v3675 = vadd.f32 %v3635, %v3667
        %v3676 = vadd.f32 %v3636, %v3668
        %v3677 = vadd.f32 %v3637, %v3669
        %v3678 = vadd.f32 %v3638, %v3670
        %v3679 = vadd.f32 %v3639, %v3671
        %v3680 = vadd.f32 %v3640, %v3672
        %v3681 = vadd.f32 %v3641, %v3673
        %3683 = vset.pattern.permute.xlu0 0
        %3684 = vperm.xlu0 %3683, %v519
        %v3685 = vpop.permute.xlu0 %3684
        %v3687 = vadd.f32 %v3674, %v3685
        %v3688 = vadd.f32 %v3675, %v3685
        %v3689 = vadd.f32 %v3676, %v3685
        %v3690 = vadd.f32 %v3677, %v3685
        %v3691 = vadd.f32 %v3678, %v3685
        %v3692 = vadd.f32 %v3679, %v3685
        %v3693 = vadd.f32 %v3680, %v3685
        %v3694 = vadd.f32 %v3681, %v3685
        %v3695 = vlaneseq
        %v3696 = vshrl.u32 %v3695, 7
        %v3697 = vsub.s32 0, %v3696
        %v3698 = vrot.slane %v3687, %v3697
        %v3699 = vlaneseq
        %v3700 = vshrl.u32 %v3699, 7
        %v3701 = vsub.s32 0, %v3700
        %v3702 = vrot.slane %v3688, %v3701
        %v3703 = vlaneseq
        %v3704 = vshrl.u32 %v3703, 7
        %v3705 = vsub.s32 0, %v3704
        %v3706 = vrot.slane %v3689, %v3705
        %v3707 = vlaneseq
        %v3708 = vshrl.u32 %v3707, 7
        %v3709 = vsub.s32 0, %v3708
        %v3710 = vrot.slane %v3690, %v3709
        %v3711 = vlaneseq
        %v3712 = vshrl.u32 %v3711, 7
        %v3713 = vsub.s32 0, %v3712
        %v3714 = vrot.slane %v3691, %v3713
        %v3715 = vlaneseq
        %v3716 = vshrl.u32 %v3715, 7
        %v3717 = vsub.s32 0, %v3716
        %v3718 = vrot.slane %v3692, %v3717
        %v3719 = vlaneseq
        %v3720 = vshrl.u32 %v3719, 7
        %v3721 = vsub.s32 0, %v3720
        %v3722 = vrot.slane %v3693, %v3721
        %v3723 = vlaneseq
        %v3724 = vshrl.u32 %v3723, 7
        %v3725 = vsub.s32 0, %v3724
        %v3726 = vrot.slane %v3694, %v3725
        %v3727 = vadd.f32 %v3698, %v2721
        %v3728 = vadd.f32 %v3702, %v2722
        %v3729 = vadd.f32 %v3706, %v2723
        %v3730 = vadd.f32 %v3710, %v2724
        %v3731 = vadd.f32 %v3714, %v2725
        %v3732 = vadd.f32 %v3718, %v2726
        %v3733 = vadd.f32 %v3722, %v2727
        %v3734 = vadd.f32 %v3726, %v2728
        %v3735 = vmax.f32 %v3727, 0.0
        %v3736 = vmax.f32 %v3728, 0.0
        %v3737 = vmax.f32 %v3729, 0.0
        %v3738 = vmax.f32 %v3730, 0.0
        %v3739 = vmax.f32 %v3731, 0.0
        %v3740 = vmax.f32 %v3732, 0.0
        %v3741 = vmax.f32 %v3733, 0.0
        %v3742 = vmax.f32 %v3734, 0.0
        %s3743 = scalar_lea.vmem %s2, 48
        %v3744 = vld [vmem:[%s3743] sm:$0xff]
        %v3745 = vld [vmem:[%s3743 + $0x8] sm:$0xff]
        %v3746 = vld [vmem:[%s3743 + $0x10] sm:$0xff]
        %v3748 = vsel %vm1208, %v3744, 0
        %v3751 = vsel %vm1208, %v3745, 0
        %v3754 = vsel %vm1208, %v3746, 0
        %v3757 = vsel %vm1218, %v3735, 0
        %v3760 = vsel %vm1218, %v3736, 0
        %v3763 = vsel %vm1218, %v3737, 0
        %v3766 = vsel %vm1218, %v3738, 0
        %v3769 = vsel %vm1218, %v3739, 0
        %v3772 = vsel %vm1218, %v3740, 0
        %v3775 = vsel %vm1218, %v3741, 0
        %v3778 = vsel %vm1218, %v3742, 0
        %3780 = vmatprep.subr.mxu0 %v3760
        %3781 = vmatpush1.msra.mxu0 %v3757
        %3782 = vmatprep.subr.mxu0 0.0
        %3783 = vmatpush1.msra.mxu0 0.0
        %3784 = vmatprep.subr.mxu0 0.0
        %3785 = vmatpush1.msra.mxu0 0.0
        %3786 = vmatprep.subr.mxu0 0.0
        %3787 = vmatpush1.msra.mxu0 0.0
        %3788 = vmatprep.subr.mxu0 0.0
        %3789 = vmatpush1.msra.mxu0 0.0
        %3790 = vmatprep.subr.mxu0 0.0
        %3791 = vmatpush1.msra.mxu0 0.0
        %3792 = vmatprep.subr.mxu0 0.0
        %3793 = vmatpush1.msra.mxu0 0.0
        %3794 = vmatprep.subr.mxu0 0.0
        %3795 = vmatpush1.msra.mxu0 0.0
        %3796 = vmatprep.subr.mxu0 0.0
        %3797 = vmatpush1.msra.mxu0 0.0
        %3798 = vmatprep.subr.mxu0 0.0
        %3799 = vmatpush1.msra.mxu0 0.0
        %3800 = vmatprep.subr.mxu0 0.0
        %3801 = vmatpush1.msra.mxu0 0.0
        %3802 = vmatprep.subr.mxu0 0.0
        %3803 = vmatpush1.msra.mxu0 0.0
        %3804 = vmatprep.subr.mxu0 0.0
        %3805 = vmatpush1.msra.mxu0 0.0
        %3806 = vmatprep.subr.mxu0 0.0
        %3807 = vmatpush1.msra.mxu0 0.0
        %3808 = vmatprep.subr.mxu0 0.0
        %3809 = vmatpush1.msra.mxu0 0.0
        %3810 = vmatprep.subr.mxu0 0.0
        %3811 = vmatpush1.msra.mxu0 0.0
        %3812 = vmatprep.subr.mxu0 0.0
        %3813 = vmatpush1.msra.mxu0 0.0
        %3814 = vmatprep.subr.mxu0 0.0
        %3815 = vmatpush1.msra.mxu0 0.0
        %3816 = vmatprep.subr.mxu0 0.0
        %3817 = vmatpush1.msra.mxu0 0.0
        %3818 = vmatprep.subr.mxu0 0.0
        %3819 = vmatpush1.msra.mxu0 0.0
        %3820 = vmatprep.subr.mxu0 0.0
        %3821 = vmatpush1.msra.mxu0 0.0
        %3822 = vmatprep.subr.mxu0 0.0
        %3823 = vmatpush1.msra.mxu0 0.0
        %3824 = vmatprep.subr.mxu0 0.0
        %3825 = vmatpush1.msra.mxu0 0.0
        %3826 = vmatprep.subr.mxu0 0.0
        %3827 = vmatpush1.msra.mxu0 0.0
        %3828 = vmatprep.subr.mxu0 0.0
        %3829 = vmatpush1.msra.mxu0 0.0
        %3830 = vmatprep.subr.mxu0 0.0
        %3831 = vmatpush1.msra.mxu0 0.0
        %3832 = vmatprep.subr.mxu0 0.0
        %3833 = vmatpush1.msra.mxu0 0.0
        %3834 = vmatprep.subr.mxu0 0.0
        %3835 = vmatpush1.msra.mxu0 0.0
        %3836 = vmatprep.subr.mxu0 0.0
        %3837 = vmatpush1.msra.mxu0 0.0
        %3838 = vmatprep.subr.mxu0 0.0
        %3839 = vmatpush1.msra.mxu0 0.0
        %3840 = vmatprep.subr.mxu0 0.0
        %3841 = vmatpush1.msra.mxu0 0.0
        %3842 = vmatprep.subr.mxu0 0.0
        %3843 = vmatpush1.msra.mxu0 0.0
        %3844 = vmatprep.mubr.f32.mxu0 0.0
        %3845 = vmatmul.mubr.f32.gmra.mrb[0].mxu0 %v3748
        %v3846 = vpop.f32.mrb[0].mxu0
        %v3847 = vadd.f32 0.0, %v3846
        %v3848 = vpop.f32.mrb[0].mxu0
        %v3849 = vadd.f32 0.0, %v3848
        %3850 = vmatprep.mubr.f32.mxu0 0.0
        %3851 = vmatmul.mubr.f32.gmra.mrb[0].mxu0 %v3751
        %v3852 = vpop.f32.mrb[0].mxu0
        %v3853 = vadd.f32 0.0, %v3852
        %v3854 = vpop.f32.mrb[0].mxu0
        %v3855 = vadd.f32 0.0, %v3854
        %3856 = vmatprep.mubr.f32.mxu0 0.0
        %3857 = vmatmul.mubr.f32.gmra.mrb[0].mxu0 %v3754
        %v3858 = vpop.f32.mrb[0].mxu0
        %v3859 = vadd.f32 0.0, %v3858
        %v3860 = vpop.f32.mrb[0].mxu0
        %v3861 = vadd.f32 0.0, %v3860
        %3862 = vdwg.mxu0
        %3863 = vmatprep.subr.mxu0 %v3766
        %3864 = vmatpush1.msra.mxu0 %v3763
        %3865 = vmatprep.subr.mxu0 0.0
        %3866 = vmatpush1.msra.mxu0 0.0
        %3867 = vmatprep.subr.mxu0 0.0
        %3868 = vmatpush1.msra.mxu0 0.0
        %3869 = vmatprep.subr.mxu0 0.0
        %3870 = vmatpush1.msra.mxu0 0.0
        %3871 = vmatprep.subr.mxu0 0.0
        %3872 = vmatpush1.msra.mxu0 0.0
        %3873 = vmatprep.subr.mxu0 0.0
        %3874 = vmatpush1.msra.mxu0 0.0
        %3875 = vmatprep.subr.mxu0 0.0
        %3876 = vmatpush1.msra.mxu0 0.0
        %3877 = vmatprep.subr.mxu0 0.0
        %3878 = vmatpush1.msra.mxu0 0.0
        %3879 = vmatprep.subr.mxu0 0.0
        %3880 = vmatpush1.msra.mxu0 0.0
        %3881 = vmatprep.subr.mxu0 0.0
        %3882 = vmatpush1.msra.mxu0 0.0
        %3883 = vmatprep.subr.mxu0 0.0
        %3884 = vmatpush1.msra.mxu0 0.0
        %3885 = vmatprep.subr.mxu0 0.0
        %3886 = vmatpush1.msra.mxu0 0.0
        %3887 = vmatprep.subr.mxu0 0.0
        %3888 = vmatpush1.msra.mxu0 0.0
        %3889 = vmatprep.subr.mxu0 0.0
        %3890 = vmatpush1.msra.mxu0 0.0
        %3891 = vmatprep.subr.mxu0 0.0
        %3892 = vmatpush1.msra.mxu0 0.0
        %3893 = vmatprep.subr.mxu0 0.0
        %3894 = vmatpush1.msra.mxu0 0.0
        %3895 = vmatprep.subr.mxu0 0.0
        %3896 = vmatpush1.msra.mxu0 0.0
        %3897 = vmatprep.subr.mxu0 0.0
        %3898 = vmatpush1.msra.mxu0 0.0
        %3899 = vmatprep.subr.mxu0 0.0
        %3900 = vmatpush1.msra.mxu0 0.0
        %3901 = vmatprep.subr.mxu0 0.0
        %3902 = vmatpush1.msra.mxu0 0.0
        %3903 = vmatprep.subr.mxu0 0.0
        %3904 = vmatpush1.msra.mxu0 0.0
        %3905 = vmatprep.subr.mxu0 0.0
        %3906 = vmatpush1.msra.mxu0 0.0
        %3907 = vmatprep.subr.mxu0 0.0
        %3908 = vmatpush1.msra.mxu0 0.0
        %3909 = vmatprep.subr.mxu0 0.0
        %3910 = vmatpush1.msra.mxu0 0.0
        %3911 = vmatprep.subr.mxu0 0.0
        %3912 = vmatpush1.msra.mxu0 0.0
        %3913 = vmatprep.subr.mxu0 0.0
        %3914 = vmatpush1.msra.mxu0 0.0
        %3915 = vmatprep.subr.mxu0 0.0
        %3916 = vmatpush1.msra.mxu0 0.0
        %3917 = vmatprep.subr.mxu0 0.0
        %3918 = vmatpush1.msra.mxu0 0.0
        %3919 = vmatprep.subr.mxu0 0.0
        %3920 = vmatpush1.msra.mxu0 0.0
        %3921 = vmatprep.subr.mxu0 0.0
        %3922 = vmatpush1.msra.mxu0 0.0
        %3923 = vmatprep.subr.mxu0 0.0
        %3924 = vmatpush1.msra.mxu0 0.0
        %3925 = vmatprep.subr.mxu0 0.0
        %3926 = vmatpush1.msra.mxu0 0.0
        %3927 = vmatprep.mubr.f32.mxu0 0.0
        %3928 = vmatmul.mubr.f32.gmra.mrb[0].mxu0 %v3748
        %v3929 = vpop.f32.mrb[0].mxu0
        %v3930 = vadd.f32 0.0, %v3929
        %v3931 = vpop.f32.mrb[0].mxu0
        %v3932 = vadd.f32 0.0, %v3931
        %3933 = vmatprep.mubr.f32.mxu0 0.0
        %3934 = vmatmul.mubr.f32.gmra.mrb[0].mxu0 %v3751
        %v3935 = vpop.f32.mrb[0].mxu0
        %v3936 = vadd.f32 0.0, %v3935
        %v3937 = vpop.f32.mrb[0].mxu0
        %v3938 = vadd.f32 0.0, %v3937
        %3939 = vmatprep.mubr.f32.mxu0 0.0
        %3940 = vmatmul.mubr.f32.gmra.mrb[0].mxu0 %v3754
        %v3941 = vpop.f32.mrb[0].mxu0
        %v3942 = vadd.f32 0.0, %v3941
        %v3943 = vpop.f32.mrb[0].mxu0
        %v3944 = vadd.f32 0.0, %v3943
        %3945 = vdwg.mxu0
        %3946 = vmatprep.subr.mxu0 %v3772
        %3947 = vmatpush1.msra.mxu0 %v3769
        %3948 = vmatprep.subr.mxu0 0.0
        %3949 = vmatpush1.msra.mxu0 0.0
        %3950 = vmatprep.subr.mxu0 0.0
        %3951 = vmatpush1.msra.mxu0 0.0
        %3952 = vmatprep.subr.mxu0 0.0
        %3953 = vmatpush1.msra.mxu0 0.0
        %3954 = vmatprep.subr.mxu0 0.0
        %3955 = vmatpush1.msra.mxu0 0.0
        %3956 = vmatprep.subr.mxu0 0.0
        %3957 = vmatpush1.msra.mxu0 0.0
        %3958 = vmatprep.subr.mxu0 0.0
        %3959 = vmatpush1.msra.mxu0 0.0
        %3960 = vmatprep.subr.mxu0 0.0
        %3961 = vmatpush1.msra.mxu0 0.0
        %3962 = vmatprep.subr.mxu0 0.0
        %3963 = vmatpush1.msra.mxu0 0.0
        %3964 = vmatprep.subr.mxu0 0.0
        %3965 = vmatpush1.msra.mxu0 0.0
        %3966 = vmatprep.subr.mxu0 0.0
        %3967 = vmatpush1.msra.mxu0 0.0
        %3968 = vmatprep.subr.mxu0 0.0
        %3969 = vmatpush1.msra.mxu0 0.0
        %3970 = vmatprep.subr.mxu0 0.0
        %3971 = vmatpush1.msra.mxu0 0.0
        %3972 = vmatprep.subr.mxu0 0.0
        %3973 = vmatpush1.msra.mxu0 0.0
        %3974 = vmatprep.subr.mxu0 0.0
        %3975 = vmatpush1.msra.mxu0 0.0
        %3976 = vmatprep.subr.mxu0 0.0
        %3977 = vmatpush1.msra.mxu0 0.0
        %3978 = vmatprep.subr.mxu0 0.0
        %3979 = vmatpush1.msra.mxu0 0.0
        %3980 = vmatprep.subr.mxu0 0.0
        %3981 = vmatpush1.msra.mxu0 0.0
        %3982 = vmatprep.subr.mxu0 0.0
        %3983 = vmatpush1.msra.mxu0 0.0
        %3984 = vmatprep.subr.mxu0 0.0
        %3985 = vmatpush1.msra.mxu0 0.0
        %3986 = vmatprep.subr.mxu0 0.0
        %3987 = vmatpush1.msra.mxu0 0.0
        %3988 = vmatprep.subr.mxu0 0.0
        %3989 = vmatpush1.msra.mxu0 0.0
        %3990 = vmatprep.subr.mxu0 0.0
        %3991 = vmatpush1.msra.mxu0 0.0
        %3992 = vmatprep.subr.mxu0 0.0
        %3993 = vmatpush1.msra.mxu0 0.0
        %3994 = vmatprep.subr.mxu0 0.0
        %3995 = vmatpush1.msra.mxu0 0.0
        %3996 = vmatprep.subr.mxu0 0.0
        %3997 = vmatpush1.msra.mxu0 0.0
        %3998 = vmatprep.subr.mxu0 0.0
        %3999 = vmatpush1.msra.mxu0 0.0
        %4000 = vmatprep.subr.mxu0 0.0
        %4001 = vmatpush1.msra.mxu0 0.0
        %4002 = vmatprep.subr.mxu0 0.0
        %4003 = vmatpush1.msra.mxu0 0.0
        %4004 = vmatprep.subr.mxu0 0.0
        %4005 = vmatpush1.msra.mxu0 0.0
        %4006 = vmatprep.subr.mxu0 0.0
        %4007 = vmatpush1.msra.mxu0 0.0
        %4008 = vmatprep.subr.mxu0 0.0
        %4009 = vmatpush1.msra.mxu0 0.0
        %4010 = vmatprep.mubr.f32.mxu0 0.0
        %4011 = vmatmul.mubr.f32.gmra.mrb[0].mxu0 %v3748
        %v4012 = vpop.f32.mrb[0].mxu0
        %v4013 = vadd.f32 0.0, %v4012
        %v4014 = vpop.f32.mrb[0].mxu0
        %v4015 = vadd.f32 0.0, %v4014
        %4016 = vmatprep.mubr.f32.mxu0 0.0
        %4017 = vmatmul.mubr.f32.gmra.mrb[0].mxu0 %v3751
        %v4018 = vpop.f32.mrb[0].mxu0
        %v4019 = vadd.f32 0.0, %v4018
        %v4020 = vpop.f32.mrb[0].mxu0
        %v4021 = vadd.f32 0.0, %v4020
        %4022 = vmatprep.mubr.f32.mxu0 0.0
        %4023 = vmatmul.mubr.f32.gmra.mrb[0].mxu0 %v3754
        %v4024 = vpop.f32.mrb[0].mxu0
        %v4025 = vadd.f32 0.0, %v4024
        %v4026 = vpop.f32.mrb[0].mxu0
        %v4027 = vadd.f32 0.0, %v4026
        %4028 = vdwg.mxu0
        %4029 = vmatprep.subr.mxu0 %v3778
        %4030 = vmatpush1.msra.mxu0 %v3775
        %4031 = vmatprep.subr.mxu0 0.0
        %4032 = vmatpush1.msra.mxu0 0.0
        %4033 = vmatprep.subr.mxu0 0.0
        %4034 = vmatpush1.msra.mxu0 0.0
        %4035 = vmatprep.subr.mxu0 0.0
        %4036 = vmatpush1.msra.mxu0 0.0
        %4037 = vmatprep.subr.mxu0 0.0
        %4038 = vmatpush1.msra.mxu0 0.0
        %4039 = vmatprep.subr.mxu0 0.0
        %4040 = vmatpush1.msra.mxu0 0.0
        %4041 = vmatprep.subr.mxu0 0.0
        %4042 = vmatpush1.msra.mxu0 0.0
        %4043 = vmatprep.subr.mxu0 0.0
        %4044 = vmatpush1.msra.mxu0 0.0
        %4045 = vmatprep.subr.mxu0 0.0
        %4046 = vmatpush1.msra.mxu0 0.0
        %4047 = vmatprep.subr.mxu0 0.0
        %4048 = vmatpush1.msra.mxu0 0.0
        %4049 = vmatprep.subr.mxu0 0.0
        %4050 = vmatpush1.msra.mxu0 0.0
        %4051 = vmatprep.subr.mxu0 0.0
        %4052 = vmatpush1.msra.mxu0 0.0
        %4053 = vmatprep.subr.mxu0 0.0
        %4054 = vmatpush1.msra.mxu0 0.0
        %4055 = vmatprep.subr.mxu0 0.0
        %4056 = vmatpush1.msra.mxu0 0.0
        %4057 = vmatprep.subr.mxu0 0.0
        %4058 = vmatpush1.msra.mxu0 0.0
        %4059 = vmatprep.subr.mxu0 0.0
        %4060 = vmatpush1.msra.mxu0 0.0
        %4061 = vmatprep.subr.mxu0 0.0
        %4062 = vmatpush1.msra.mxu0 0.0
        %4063 = vmatprep.subr.mxu0 0.0
        %4064 = vmatpush1.msra.mxu0 0.0
        %4065 = vmatprep.subr.mxu0 0.0
        %4066 = vmatpush1.msra.mxu0 0.0
        %4067 = vmatprep.subr.mxu0 0.0
        %4068 = vmatpush1.msra.mxu0 0.0
        %4069 = vmatprep.subr.mxu0 0.0
        %4070 = vmatpush1.msra.mxu0 0.0
        %4071 = vmatprep.subr.mxu0 0.0
        %4072 = vmatpush1.msra.mxu0 0.0
        %4073 = vmatprep.subr.mxu0 0.0
        %4074 = vmatpush1.msra.mxu0 0.0
        %4075 = vmatprep.subr.mxu0 0.0
        %4076 = vmatpush1.msra.mxu0 0.0
        %4077 = vmatprep.subr.mxu0 0.0
        %4078 = vmatpush1.msra.mxu0 0.0
        %4079 = vmatprep.subr.mxu0 0.0
        %4080 = vmatpush1.msra.mxu0 0.0
        %4081 = vmatprep.subr.mxu0 0.0
        %4082 = vmatpush1.msra.mxu0 0.0
        %4083 = vmatprep.subr.mxu0 0.0
        %4084 = vmatpush1.msra.mxu0 0.0
        %4085 = vmatprep.subr.mxu0 0.0
        %4086 = vmatpush1.msra.mxu0 0.0
        %4087 = vmatprep.subr.mxu0 0.0
        %4088 = vmatpush1.msra.mxu0 0.0
        %4089 = vmatprep.subr.mxu0 0.0
        %4090 = vmatpush1.msra.mxu0 0.0
        %4091 = vmatprep.subr.mxu0 0.0
        %4092 = vmatpush1.msra.mxu0 0.0
        %4093 = vmatprep.mubr.f32.mxu0 0.0
        %4094 = vmatmul.mubr.f32.gmra.mrb[0].mxu0 %v3748
        %v4095 = vpop.f32.mrb[0].mxu0
        %v4096 = vadd.f32 0.0, %v4095
        %v4097 = vpop.f32.mrb[0].mxu0
        %v4098 = vadd.f32 0.0, %v4097
        %4099 = vmatprep.mubr.f32.mxu0 0.0
        %4100 = vmatmul.mubr.f32.gmra.mrb[0].mxu0 %v3751
        %v4101 = vpop.f32.mrb[0].mxu0
        %v4102 = vadd.f32 0.0, %v4101
        %v4103 = vpop.f32.mrb[0].mxu0
        %v4104 = vadd.f32 0.0, %v4103
        %4105 = vmatprep.mubr.f32.mxu0 0.0
        %4106 = vmatmul.mubr.f32.gmra.mrb[0].mxu0 %v3754
        %v4107 = vpop.f32.mrb[0].mxu0
        %v4108 = vadd.f32 0.0, %v4107
        %v4109 = vpop.f32.mrb[0].mxu0
        %v4110 = vadd.f32 0.0, %v4109
        %4111 = vdwg.mxu0
        %4112 = vrot.lane.b32.xlu0 %v3847, 8
        %v4113 = vpop.permute.xlu0 %4112
        %4114 = vrot.lane.b32.xlu0 %v3849, 8
        %v4115 = vpop.permute.xlu0 %4114
        %4116 = vrot.lane.b32.xlu0 %v3930, 8
        %v4117 = vpop.permute.xlu0 %4116
        %4118 = vrot.lane.b32.xlu0 %v3932, 8
        %v4119 = vpop.permute.xlu0 %4118
        %4120 = vrot.lane.b32.xlu0 %v4013, 8
        %v4121 = vpop.permute.xlu0 %4120
        %4122 = vrot.lane.b32.xlu0 %v4015, 8
        %v4123 = vpop.permute.xlu0 %4122
        %4124 = vrot.lane.b32.xlu0 %v4096, 8
        %v4125 = vpop.permute.xlu0 %4124
        %4126 = vrot.lane.b32.xlu0 %v4098, 8
        %v4127 = vpop.permute.xlu0 %4126
        %vm4128 = vcmp.lt.s32.totalorder %v345, 8
        %v4129 = vsel %vm4128, %v4125, %v4127
        %v4130 = vsel %vm4128, %v4123, %v4125
        %v4131 = vsel %vm4128, %v4121, %v4123
        %v4132 = vsel %vm4128, %v4119, %v4121
        %v4133 = vsel %vm4128, %v4117, %v4119
        %v4134 = vsel %vm4128, %v4115, %v4117
        %v4135 = vsel %vm4128, %v4113, %v4115
        %v4136 = vsel %vm4128, %v4127, %v4113
        %v4137 = vsel %vm505, 1, 0
        %v4138 = vsel %vm506, 1, 0
        %v4139 = vsel %vm507, 1, 0
        %v4140 = vsel %vm508, 1, 0
        %v4141 = vsel %vm509, 1, 0
        %v4142 = vsel %vm510, 1, 0
        %v4143 = vsel %vm511, 1, 0
        %v4144 = vsel %vm512, 1, 0
        %vm4145 = vcmp.eq.s32.totalorder %v4137, 1
        %vm4146 = vcmp.eq.s32.totalorder %v4138, 1
        %vm4147 = vcmp.eq.s32.totalorder %v4139, 1
        %vm4148 = vcmp.eq.s32.totalorder %v4140, 1
        %vm4149 = vcmp.eq.s32.totalorder %v4141, 1
        %vm4150 = vcmp.eq.s32.totalorder %v4142, 1
        %vm4151 = vcmp.eq.s32.totalorder %v4143, 1
        %vm4152 = vcmp.eq.s32.totalorder %v4144, 1
        %v4153 = vsel %vm4145, %v4136, 0.0
        %v4154 = vsel %vm4146, %v4135, 0.0
        %v4155 = vsel %vm4147, %v4134, 0.0
        %v4156 = vsel %vm4148, %v4133, 0.0
        %v4157 = vsel %vm4149, %v4132, 0.0
        %v4158 = vsel %vm4150, %v4131, 0.0
        %v4159 = vsel %vm4151, %v4130, 0.0
        %v4160 = vsel %vm4152, %v4129, 0.0
        %v4161 = vadd.f32 %v4153, %v3853
        %v4162 = vadd.f32 %v4154, %v3855
        %v4163 = vadd.f32 %v4155, %v3936
        %v4164 = vadd.f32 %v4156, %v3938
        %v4165 = vadd.f32 %v4157, %v4019
        %v4166 = vadd.f32 %v4158, %v4021
        %v4167 = vadd.f32 %v4159, %v4102
        %v4168 = vadd.f32 %v4160, %v4104
        %4169 = vrot.lane.b32.xlu0 %v3859, 120
        %v4170 = vpop.permute.xlu0 %4169
        %4171 = vrot.lane.b32.xlu0 %v3861, 120
        %v4172 = vpop.permute.xlu0 %4171
        %4173 = vrot.lane.b32.xlu0 %v3942, 120
        %v4174 = vpop.permute.xlu0 %4173
        %4175 = vrot.lane.b32.xlu0 %v3944, 120
        %v4176 = vpop.permute.xlu0 %4175
        %4177 = vrot.lane.b32.xlu0 %v4025, 120
        %v4178 = vpop.permute.xlu0 %4177
        %4179 = vrot.lane.b32.xlu0 %v4027, 120
        %v4180 = vpop.permute.xlu0 %4179
        %4181 = vrot.lane.b32.xlu0 %v4108, 120
        %v4182 = vpop.permute.xlu0 %4181
        %4183 = vrot.lane.b32.xlu0 %v4110, 120
        %v4184 = vpop.permute.xlu0 %4183
        %vm4185 = vcmp.lt.s32.totalorder %v345, 120
        %v4186 = vsel %vm4185, %v4182, %v4184
        %v4187 = vsel %vm4185, %v4180, %v4182
        %v4188 = vsel %vm4185, %v4178, %v4180
        %v4189 = vsel %vm4185, %v4176, %v4178
        %v4190 = vsel %vm4185, %v4174, %v4176
        %v4191 = vsel %vm4185, %v4172, %v4174
        %v4192 = vsel %vm4185, %v4170, %v4172
        %v4193 = vsel %vm4185, %v4184, %v4170
        %v4194 = vsel %vm497, 1, 0
        %v4195 = vsel %vm498, 1, 0
        %v4196 = vsel %vm499, 1, 0
        %v4197 = vsel %vm500, 1, 0
        %v4198 = vsel %vm501, 1, 0
        %v4199 = vsel %vm502, 1, 0
        %v4200 = vsel %vm503, 1, 0
        %v4201 = vsel %vm504, 1, 0
        %vm4202 = vcmp.eq.s32.totalorder %v4194, 1
        %vm4203 = vcmp.eq.s32.totalorder %v4195, 1
        %vm4204 = vcmp.eq.s32.totalorder %v4196, 1
        %vm4205 = vcmp.eq.s32.totalorder %v4197, 1
        %vm4206 = vcmp.eq.s32.totalorder %v4198, 1
        %vm4207 = vcmp.eq.s32.totalorder %v4199, 1
        %vm4208 = vcmp.eq.s32.totalorder %v4200, 1
        %vm4209 = vcmp.eq.s32.totalorder %v4201, 1
        %v4210 = vsel %vm4202, %v4192, 0.0
        %v4211 = vsel %vm4203, %v4191, 0.0
        %v4212 = vsel %vm4204, %v4190, 0.0
        %v4213 = vsel %vm4205, %v4189, 0.0
        %v4214 = vsel %vm4206, %v4188, 0.0
        %v4215 = vsel %vm4207, %v4187, 0.0
        %v4216 = vsel %vm4208, %v4186, 0.0
        %v4217 = vsel %vm4209, %v4193, 0.0
        %v4218 = vadd.f32 %v4161, %v4210
        %v4219 = vadd.f32 %v4162, %v4211
        %v4220 = vadd.f32 %v4163, %v4212
        %v4221 = vadd.f32 %v4164, %v4213
        %v4222 = vadd.f32 %v4165, %v4214
        %v4223 = vadd.f32 %v4166, %v4215
        %v4224 = vadd.f32 %v4167, %v4216
        %v4225 = vadd.f32 %v4168, %v4217
        %4227 = vset.pattern.permute.xlu0 0
        %4228 = vperm.xlu0 %4227, %v520
        %v4229 = vpop.permute.xlu0 %4228
        %v4231 = vadd.f32 %v4218, %v4229
        %v4232 = vadd.f32 %v4219, %v4229
        %v4233 = vadd.f32 %v4220, %v4229
        %v4234 = vadd.f32 %v4221, %v4229
        %v4235 = vadd.f32 %v4222, %v4229
        %v4236 = vadd.f32 %v4223, %v4229
        %v4237 = vadd.f32 %v4224, %v4229
        %v4238 = vadd.f32 %v4225, %v4229
        %v4239 = vmax.f32 %v4231, 0.0
        %v4240 = vmax.f32 %v4232, 0.0
        %v4241 = vmax.f32 %v4233, 0.0
        %v4242 = vmax.f32 %v4234, 0.0
        %v4243 = vmax.f32 %v4235, 0.0
        %v4244 = vmax.f32 %v4236, 0.0
        %v4245 = vmax.f32 %v4237, 0.0
        %v4246 = vmax.f32 %v4238, 0.0
        %s4247 = scalar_lea.vmem %s3, 72
        %v4248 = vld [vmem:[%s4247] sm:$0xff]
        %v4249 = vld [vmem:[%s4247 + $0x8] sm:$0xff]
        %v4250 = vld [vmem:[%s4247 + $0x10] sm:$0xff]
        %v4252 = vsel %vm1208, %v4248, 0
        %v4255 = vsel %vm1208, %v4249, 0
        %v4258 = vsel %vm1208, %v4250, 0
        %v4261 = vsel %vm1218, %v4239, 0
        %v4264 = vsel %vm1218, %v4240, 0
        %v4267 = vsel %vm1218, %v4241, 0
        %v4270 = vsel %vm1218, %v4242, 0
        %v4273 = vsel %vm1218, %v4243, 0
        %v4276 = vsel %vm1218, %v4244, 0
        %v4279 = vsel %vm1218, %v4245, 0
        %v4282 = vsel %vm1218, %v4246, 0
        %4284 = vmatprep.subr.mxu0 %v4264
        %4285 = vmatpush1.msra.mxu0 %v4261
        %4286 = vmatprep.subr.mxu0 0.0
        %4287 = vmatpush1.msra.mxu0 0.0
        %4288 = vmatprep.subr.mxu0 0.0
        %4289 = vmatpush1.msra.mxu0 0.0
        %4290 = vmatprep.subr.mxu0 0.0
        %4291 = vmatpush1.msra.mxu0 0.0
        %4292 = vmatprep.subr.mxu0 0.0
        %4293 = vmatpush1.msra.mxu0 0.0
        %4294 = vmatprep.subr.mxu0 0.0
        %4295 = vmatpush1.msra.mxu0 0.0
        %4296 = vmatprep.subr.mxu0 0.0
        %4297 = vmatpush1.msra.mxu0 0.0
        %4298 = vmatprep.subr.mxu0 0.0
        %4299 = vmatpush1.msra.mxu0 0.0
        %4300 = vmatprep.subr.mxu0 0.0
        %4301 = vmatpush1.msra.mxu0 0.0
        %4302 = vmatprep.subr.mxu0 0.0
        %4303 = vmatpush1.msra.mxu0 0.0
        %4304 = vmatprep.subr.mxu0 0.0
        %4305 = vmatpush1.msra.mxu0 0.0
        %4306 = vmatprep.subr.mxu0 0.0
        %4307 = vmatpush1.msra.mxu0 0.0
        %4308 = vmatprep.subr.mxu0 0.0
        %4309 = vmatpush1.msra.mxu0 0.0
        %4310 = vmatprep.subr.mxu0 0.0
        %4311 = vmatpush1.msra.mxu0 0.0
        %4312 = vmatprep.subr.mxu0 0.0
        %4313 = vmatpush1.msra.mxu0 0.0
        %4314 = vmatprep.subr.mxu0 0.0
        %4315 = vmatpush1.msra.mxu0 0.0
        %4316 = vmatprep.subr.mxu0 0.0
        %4317 = vmatpush1.msra.mxu0 0.0
        %4318 = vmatprep.subr.mxu0 0.0
        %4319 = vmatpush1.msra.mxu0 0.0
        %4320 = vmatprep.subr.mxu0 0.0
        %4321 = vmatpush1.msra.mxu0 0.0
        %4322 = vmatprep.subr.mxu0 0.0
        %4323 = vmatpush1.msra.mxu0 0.0
        %4324 = vmatprep.subr.mxu0 0.0
        %4325 = vmatpush1.msra.mxu0 0.0
        %4326 = vmatprep.subr.mxu0 0.0
        %4327 = vmatpush1.msra.mxu0 0.0
        %4328 = vmatprep.subr.mxu0 0.0
        %4329 = vmatpush1.msra.mxu0 0.0
        %4330 = vmatprep.subr.mxu0 0.0
        %4331 = vmatpush1.msra.mxu0 0.0
        %4332 = vmatprep.subr.mxu0 0.0
        %4333 = vmatpush1.msra.mxu0 0.0
        %4334 = vmatprep.subr.mxu0 0.0
        %4335 = vmatpush1.msra.mxu0 0.0
        %4336 = vmatprep.subr.mxu0 0.0
        %4337 = vmatpush1.msra.mxu0 0.0
        %4338 = vmatprep.subr.mxu0 0.0
        %4339 = vmatpush1.msra.mxu0 0.0
        %4340 = vmatprep.subr.mxu0 0.0
        %4341 = vmatpush1.msra.mxu0 0.0
        %4342 = vmatprep.subr.mxu0 0.0
        %4343 = vmatpush1.msra.mxu0 0.0
        %4344 = vmatprep.subr.mxu0 0.0
        %4345 = vmatpush1.msra.mxu0 0.0
        %4346 = vmatprep.subr.mxu0 0.0
        %4347 = vmatpush1.msra.mxu0 0.0
        %4348 = vmatprep.mubr.f32.mxu0 0.0
        %4349 = vmatmul.mubr.f32.gmra.mrb[0].mxu0 %v4252
        %v4350 = vpop.f32.mrb[0].mxu0
        %v4351 = vadd.f32 0.0, %v4350
        %v4352 = vpop.f32.mrb[0].mxu0
        %v4353 = vadd.f32 0.0, %v4352
        %4354 = vmatprep.mubr.f32.mxu0 0.0
        %4355 = vmatmul.mubr.f32.gmra.mrb[0].mxu0 %v4255
        %v4356 = vpop.f32.mrb[0].mxu0
        %v4357 = vadd.f32 0.0, %v4356
        %v4358 = vpop.f32.mrb[0].mxu0
        %v4359 = vadd.f32 0.0, %v4358
        %4360 = vmatprep.mubr.f32.mxu0 0.0
        %4361 = vmatmul.mubr.f32.gmra.mrb[0].mxu0 %v4258
        %v4362 = vpop.f32.mrb[0].mxu0
        %v4363 = vadd.f32 0.0, %v4362
        %v4364 = vpop.f32.mrb[0].mxu0
        %v4365 = vadd.f32 0.0, %v4364
        %4366 = vdwg.mxu0
        %4367 = vmatprep.subr.mxu0 %v4270
        %4368 = vmatpush1.msra.mxu0 %v4267
        %4369 = vmatprep.subr.mxu0 0.0
        %4370 = vmatpush1.msra.mxu0 0.0
        %4371 = vmatprep.subr.mxu0 0.0
        %4372 = vmatpush1.msra.mxu0 0.0
        %4373 = vmatprep.subr.mxu0 0.0
        %4374 = vmatpush1.msra.mxu0 0.0
        %4375 = vmatprep.subr.mxu0 0.0
        %4376 = vmatpush1.msra.mxu0 0.0
        %4377 = vmatprep.subr.mxu0 0.0
        %4378 = vmatpush1.msra.mxu0 0.0
        %4379 = vmatprep.subr.mxu0 0.0
        %4380 = vmatpush1.msra.mxu0 0.0
        %4381 = vmatprep.subr.mxu0 0.0
        %4382 = vmatpush1.msra.mxu0 0.0
        %4383 = vmatprep.subr.mxu0 0.0
        %4384 = vmatpush1.msra.mxu0 0.0
        %4385 = vmatprep.subr.mxu0 0.0
        %4386 = vmatpush1.msra.mxu0 0.0
        %4387 = vmatprep.subr.mxu0 0.0
        %4388 = vmatpush1.msra.mxu0 0.0
        %4389 = vmatprep.subr.mxu0 0.0
        %4390 = vmatpush1.msra.mxu0 0.0
        %4391 = vmatprep.subr.mxu0 0.0
        %4392 = vmatpush1.msra.mxu0 0.0
        %4393 = vmatprep.subr.mxu0 0.0
        %4394 = vmatpush1.msra.mxu0 0.0
        %4395 = vmatprep.subr.mxu0 0.0
        %4396 = vmatpush1.msra.mxu0 0.0
        %4397 = vmatprep.subr.mxu0 0.0
        %4398 = vmatpush1.msra.mxu0 0.0
        %4399 = vmatprep.subr.mxu0 0.0
        %4400 = vmatpush1.msra.mxu0 0.0
        %4401 = vmatprep.subr.mxu0 0.0
        %4402 = vmatpush1.msra.mxu0 0.0
        %4403 = vmatprep.subr.mxu0 0.0
        %4404 = vmatpush1.msra.mxu0 0.0
        %4405 = vmatprep.subr.mxu0 0.0
        %4406 = vmatpush1.msra.mxu0 0.0
        %4407 = vmatprep.subr.mxu0 0.0
        %4408 = vmatpush1.msra.mxu0 0.0
        %4409 = vmatprep.subr.mxu0 0.0
        %4410 = vmatpush1.msra.mxu0 0.0
        %4411 = vmatprep.subr.mxu0 0.0
        %4412 = vmatpush1.msra.mxu0 0.0
        %4413 = vmatprep.subr.mxu0 0.0
        %4414 = vmatpush1.msra.mxu0 0.0
        %4415 = vmatprep.subr.mxu0 0.0
        %4416 = vmatpush1.msra.mxu0 0.0
        %4417 = vmatprep.subr.mxu0 0.0
        %4418 = vmatpush1.msra.mxu0 0.0
        %4419 = vmatprep.subr.mxu0 0.0
        %4420 = vmatpush1.msra.mxu0 0.0
        %4421 = vmatprep.subr.mxu0 0.0
        %4422 = vmatpush1.msra.mxu0 0.0
        %4423 = vmatprep.subr.mxu0 0.0
        %4424 = vmatpush1.msra.mxu0 0.0
        %4425 = vmatprep.subr.mxu0 0.0
        %4426 = vmatpush1.msra.mxu0 0.0
        %4427 = vmatprep.subr.mxu0 0.0
        %4428 = vmatpush1.msra.mxu0 0.0
        %4429 = vmatprep.subr.mxu0 0.0
        %4430 = vmatpush1.msra.mxu0 0.0
        %4431 = vmatprep.mubr.f32.mxu0 0.0
        %4432 = vmatmul.mubr.f32.gmra.mrb[0].mxu0 %v4252
        %v4433 = vpop.f32.mrb[0].mxu0
        %v4434 = vadd.f32 0.0, %v4433
        %v4435 = vpop.f32.mrb[0].mxu0
        %v4436 = vadd.f32 0.0, %v4435
        %4437 = vmatprep.mubr.f32.mxu0 0.0
        %4438 = vmatmul.mubr.f32.gmra.mrb[0].mxu0 %v4255
        %v4439 = vpop.f32.mrb[0].mxu0
        %v4440 = vadd.f32 0.0, %v4439
        %v4441 = vpop.f32.mrb[0].mxu0
        %v4442 = vadd.f32 0.0, %v4441
        %4443 = vmatprep.mubr.f32.mxu0 0.0
        %4444 = vmatmul.mubr.f32.gmra.mrb[0].mxu0 %v4258
        %v4445 = vpop.f32.mrb[0].mxu0
        %v4446 = vadd.f32 0.0, %v4445
        %v4447 = vpop.f32.mrb[0].mxu0
        %v4448 = vadd.f32 0.0, %v4447
        %4449 = vdwg.mxu0
        %4450 = vmatprep.subr.mxu0 %v4276
        %4451 = vmatpush1.msra.mxu0 %v4273
        %4452 = vmatprep.subr.mxu0 0.0
        %4453 = vmatpush1.msra.mxu0 0.0
        %4454 = vmatprep.subr.mxu0 0.0
        %4455 = vmatpush1.msra.mxu0 0.0
        %4456 = vmatprep.subr.mxu0 0.0
        %4457 = vmatpush1.msra.mxu0 0.0
        %4458 = vmatprep.subr.mxu0 0.0
        %4459 = vmatpush1.msra.mxu0 0.0
        %4460 = vmatprep.subr.mxu0 0.0
        %4461 = vmatpush1.msra.mxu0 0.0
        %4462 = vmatprep.subr.mxu0 0.0
        %4463 = vmatpush1.msra.mxu0 0.0
        %4464 = vmatprep.subr.mxu0 0.0
        %4465 = vmatpush1.msra.mxu0 0.0
        %4466 = vmatprep.subr.mxu0 0.0
        %4467 = vmatpush1.msra.mxu0 0.0
        %4468 = vmatprep.subr.mxu0 0.0
        %4469 = vmatpush1.msra.mxu0 0.0
        %4470 = vmatprep.subr.mxu0 0.0
        %4471 = vmatpush1.msra.mxu0 0.0
        %4472 = vmatprep.subr.mxu0 0.0
        %4473 = vmatpush1.msra.mxu0 0.0
        %4474 = vmatprep.subr.mxu0 0.0
        %4475 = vmatpush1.msra.mxu0 0.0
        %4476 = vmatprep.subr.mxu0 0.0
        %4477 = vmatpush1.msra.mxu0 0.0
        %4478 = vmatprep.subr.mxu0 0.0
        %4479 = vmatpush1.msra.mxu0 0.0
        %4480 = vmatprep.subr.mxu0 0.0
        %4481 = vmatpush1.msra.mxu0 0.0
        %4482 = vmatprep.subr.mxu0 0.0
        %4483 = vmatpush1.msra.mxu0 0.0
        %4484 = vmatprep.subr.mxu0 0.0
        %4485 = vmatpush1.msra.mxu0 0.0
        %4486 = vmatprep.subr.mxu0 0.0
        %4487 = vmatpush1.msra.mxu0 0.0
        %4488 = vmatprep.subr.mxu0 0.0
        %4489 = vmatpush1.msra.mxu0 0.0
        %4490 = vmatprep.subr.mxu0 0.0
        %4491 = vmatpush1.msra.mxu0 0.0
        %4492 = vmatprep.subr.mxu0 0.0
        %4493 = vmatpush1.msra.mxu0 0.0
        %4494 = vmatprep.subr.mxu0 0.0
        %4495 = vmatpush1.msra.mxu0 0.0
        %4496 = vmatprep.subr.mxu0 0.0
        %4497 = vmatpush1.msra.mxu0 0.0
        %4498 = vmatprep.subr.mxu0 0.0
        %4499 = vmatpush1.msra.mxu0 0.0
        %4500 = vmatprep.subr.mxu0 0.0
        %4501 = vmatpush1.msra.mxu0 0.0
        %4502 = vmatprep.subr.mxu0 0.0
        %4503 = vmatpush1.msra.mxu0 0.0
        %4504 = vmatprep.subr.mxu0 0.0
        %4505 = vmatpush1.msra.mxu0 0.0
        %4506 = vmatprep.subr.mxu0 0.0
        %4507 = vmatpush1.msra.mxu0 0.0
        %4508 = vmatprep.subr.mxu0 0.0
        %4509 = vmatpush1.msra.mxu0 0.0
        %4510 = vmatprep.subr.mxu0 0.0
        %4511 = vmatpush1.msra.mxu0 0.0
        %4512 = vmatprep.subr.mxu0 0.0
        %4513 = vmatpush1.msra.mxu0 0.0
        %4514 = vmatprep.mubr.f32.mxu0 0.0
        %4515 = vmatmul.mubr.f32.gmra.mrb[0].mxu0 %v4252
        %v4516 = vpop.f32.mrb[0].mxu0
        %v4517 = vadd.f32 0.0, %v4516
        %v4518 = vpop.f32.mrb[0].mxu0
        %v4519 = vadd.f32 0.0, %v4518
        %4520 = vmatprep.mubr.f32.mxu0 0.0
        %4521 = vmatmul.mubr.f32.gmra.mrb[0].mxu0 %v4255
        %v4522 = vpop.f32.mrb[0].mxu0
        %v4523 = vadd.f32 0.0, %v4522
        %v4524 = vpop.f32.mrb[0].mxu0
        %v4525 = vadd.f32 0.0, %v4524
        %4526 = vmatprep.mubr.f32.mxu0 0.0
        %4527 = vmatmul.mubr.f32.gmra.mrb[0].mxu0 %v4258
        %v4528 = vpop.f32.mrb[0].mxu0
        %v4529 = vadd.f32 0.0, %v4528
        %v4530 = vpop.f32.mrb[0].mxu0
        %v4531 = vadd.f32 0.0, %v4530
        %4532 = vdwg.mxu0
        %4533 = vmatprep.subr.mxu0 %v4282
        %4534 = vmatpush1.msra.mxu0 %v4279
        %4535 = vmatprep.subr.mxu0 0.0
        %4536 = vmatpush1.msra.mxu0 0.0
        %4537 = vmatprep.subr.mxu0 0.0
        %4538 = vmatpush1.msra.mxu0 0.0
        %4539 = vmatprep.subr.mxu0 0.0
        %4540 = vmatpush1.msra.mxu0 0.0
        %4541 = vmatprep.subr.mxu0 0.0
        %4542 = vmatpush1.msra.mxu0 0.0
        %4543 = vmatprep.subr.mxu0 0.0
        %4544 = vmatpush1.msra.mxu0 0.0
        %4545 = vmatprep.subr.mxu0 0.0
        %4546 = vmatpush1.msra.mxu0 0.0
        %4547 = vmatprep.subr.mxu0 0.0
        %4548 = vmatpush1.msra.mxu0 0.0
        %4549 = vmatprep.subr.mxu0 0.0
        %4550 = vmatpush1.msra.mxu0 0.0
        %4551 = vmatprep.subr.mxu0 0.0
        %4552 = vmatpush1.msra.mxu0 0.0
        %4553 = vmatprep.subr.mxu0 0.0
        %4554 = vmatpush1.msra.mxu0 0.0
        %4555 = vmatprep.subr.mxu0 0.0
        %4556 = vmatpush1.msra.mxu0 0.0
        %4557 = vmatprep.subr.mxu0 0.0
        %4558 = vmatpush1.msra.mxu0 0.0
        %4559 = vmatprep.subr.mxu0 0.0
        %4560 = vmatpush1.msra.mxu0 0.0
        %4561 = vmatprep.subr.mxu0 0.0
        %4562 = vmatpush1.msra.mxu0 0.0
        %4563 = vmatprep.subr.mxu0 0.0
        %4564 = vmatpush1.msra.mxu0 0.0
        %4565 = vmatprep.subr.mxu0 0.0
        %4566 = vmatpush1.msra.mxu0 0.0
        %4567 = vmatprep.subr.mxu0 0.0
        %4568 = vmatpush1.msra.mxu0 0.0
        %4569 = vmatprep.subr.mxu0 0.0
        %4570 = vmatpush1.msra.mxu0 0.0
        %4571 = vmatprep.subr.mxu0 0.0
        %4572 = vmatpush1.msra.mxu0 0.0
        %4573 = vmatprep.subr.mxu0 0.0
        %4574 = vmatpush1.msra.mxu0 0.0
        %4575 = vmatprep.subr.mxu0 0.0
        %4576 = vmatpush1.msra.mxu0 0.0
        %4577 = vmatprep.subr.mxu0 0.0
        %4578 = vmatpush1.msra.mxu0 0.0
        %4579 = vmatprep.subr.mxu0 0.0
        %4580 = vmatpush1.msra.mxu0 0.0
        %4581 = vmatprep.subr.mxu0 0.0
        %4582 = vmatpush1.msra.mxu0 0.0
        %4583 = vmatprep.subr.mxu0 0.0
        %4584 = vmatpush1.msra.mxu0 0.0
        %4585 = vmatprep.subr.mxu0 0.0
        %4586 = vmatpush1.msra.mxu0 0.0
        %4587 = vmatprep.subr.mxu0 0.0
        %4588 = vmatpush1.msra.mxu0 0.0
        %4589 = vmatprep.subr.mxu0 0.0
        %4590 = vmatpush1.msra.mxu0 0.0
        %4591 = vmatprep.subr.mxu0 0.0
        %4592 = vmatpush1.msra.mxu0 0.0
        %4593 = vmatprep.subr.mxu0 0.0
        %4594 = vmatpush1.msra.mxu0 0.0
        %4595 = vmatprep.subr.mxu0 0.0
        %4596 = vmatpush1.msra.mxu0 0.0
        %4597 = vmatprep.mubr.f32.mxu0 0.0
        %4598 = vmatmul.mubr.f32.gmra.mrb[0].mxu0 %v4252
        %v4599 = vpop.f32.mrb[0].mxu0
        %v4600 = vadd.f32 0.0, %v4599
        %v4601 = vpop.f32.mrb[0].mxu0
        %v4602 = vadd.f32 0.0, %v4601
        %4603 = vmatprep.mubr.f32.mxu0 0.0
        %4604 = vmatmul.mubr.f32.gmra.mrb[0].mxu0 %v4255
        %v4605 = vpop.f32.mrb[0].mxu0
        %v4606 = vadd.f32 0.0, %v4605
        %v4607 = vpop.f32.mrb[0].mxu0
        %v4608 = vadd.f32 0.0, %v4607
        %4609 = vmatprep.mubr.f32.mxu0 0.0
        %4610 = vmatmul.mubr.f32.gmra.mrb[0].mxu0 %v4258
        %v4611 = vpop.f32.mrb[0].mxu0
        %v4612 = vadd.f32 0.0, %v4611
        %v4613 = vpop.f32.mrb[0].mxu0
        %v4614 = vadd.f32 0.0, %v4613
        %4615 = vdwg.mxu0
        %4616 = vrot.lane.b32.xlu0 %v4351, 8
        %v4617 = vpop.permute.xlu0 %4616
        %4618 = vrot.lane.b32.xlu0 %v4353, 8
        %v4619 = vpop.permute.xlu0 %4618
        %4620 = vrot.lane.b32.xlu0 %v4434, 8
        %v4621 = vpop.permute.xlu0 %4620
        %4622 = vrot.lane.b32.xlu0 %v4436, 8
        %v4623 = vpop.permute.xlu0 %4622
        %4624 = vrot.lane.b32.xlu0 %v4517, 8
        %v4625 = vpop.permute.xlu0 %4624
        %4626 = vrot.lane.b32.xlu0 %v4519, 8
        %v4627 = vpop.permute.xlu0 %4626
        %4628 = vrot.lane.b32.xlu0 %v4600, 8
        %v4629 = vpop.permute.xlu0 %4628
        %4630 = vrot.lane.b32.xlu0 %v4602, 8
        %v4631 = vpop.permute.xlu0 %4630
        %v4632 = vsel %vm4128, %v4629, %v4631
        %v4633 = vsel %vm4128, %v4627, %v4629
        %v4634 = vsel %vm4128, %v4625, %v4627
        %v4635 = vsel %vm4128, %v4623, %v4625
        %v4636 = vsel %vm4128, %v4621, %v4623
        %v4637 = vsel %vm4128, %v4619, %v4621
        %v4638 = vsel %vm4128, %v4617, %v4619
        %v4639 = vsel %vm4128, %v4631, %v4617
        %v4640 = vsel %vm4145, %v4639, 0.0
        %v4641 = vsel %vm4146, %v4638, 0.0
        %v4642 = vsel %vm4147, %v4637, 0.0
        %v4643 = vsel %vm4148, %v4636, 0.0
        %v4644 = vsel %vm4149, %v4635, 0.0
        %v4645 = vsel %vm4150, %v4634, 0.0
        %v4646 = vsel %vm4151, %v4633, 0.0
        %v4647 = vsel %vm4152, %v4632, 0.0
        %v4648 = vadd.f32 %v4640, %v4357
        %v4649 = vadd.f32 %v4641, %v4359
        %v4650 = vadd.f32 %v4642, %v4440
        %v4651 = vadd.f32 %v4643, %v4442
        %v4652 = vadd.f32 %v4644, %v4523
        %v4653 = vadd.f32 %v4645, %v4525
        %v4654 = vadd.f32 %v4646, %v4606
        %v4655 = vadd.f32 %v4647, %v4608
        %4656 = vrot.lane.b32.xlu0 %v4363, 120
        %v4657 = vpop.permute.xlu0 %4656
        %4658 = vrot.lane.b32.xlu0 %v4365, 120
        %v4659 = vpop.permute.xlu0 %4658
        %4660 = vrot.lane.b32.xlu0 %v4446, 120
        %v4661 = vpop.permute.xlu0 %4660
        %4662 = vrot.lane.b32.xlu0 %v4448, 120
        %v4663 = vpop.permute.xlu0 %4662
        %4664 = vrot.lane.b32.xlu0 %v4529, 120
        %v4665 = vpop.permute.xlu0 %4664
        %4666 = vrot.lane.b32.xlu0 %v4531, 120
        %v4667 = vpop.permute.xlu0 %4666
        %4668 = vrot.lane.b32.xlu0 %v4612, 120
        %v4669 = vpop.permute.xlu0 %4668
        %4670 = vrot.lane.b32.xlu0 %v4614, 120
        %v4671 = vpop.permute.xlu0 %4670
        %v4672 = vsel %vm4185, %v4669, %v4671
        %v4673 = vsel %vm4185, %v4667, %v4669
        %v4674 = vsel %vm4185, %v4665, %v4667
        %v4675 = vsel %vm4185, %v4663, %v4665
        %v4676 = vsel %vm4185, %v4661, %v4663
        %v4677 = vsel %vm4185, %v4659, %v4661
        %v4678 = vsel %vm4185, %v4657, %v4659
        %v4679 = vsel %vm4185, %v4671, %v4657
        %v4680 = vsel %vm4202, %v4678, 0.0
        %v4681 = vsel %vm4203, %v4677, 0.0
        %v4682 = vsel %vm4204, %v4676, 0.0
        %v4683 = vsel %vm4205, %v4675, 0.0
        %v4684 = vsel %vm4206, %v4674, 0.0
        %v4685 = vsel %vm4207, %v4673, 0.0
        %v4686 = vsel %vm4208, %v4672, 0.0
        %v4687 = vsel %vm4209, %v4679, 0.0
        %v4688 = vadd.f32 %v4648, %v4680
        %v4689 = vadd.f32 %v4649, %v4681
        %v4690 = vadd.f32 %v4650, %v4682
        %v4691 = vadd.f32 %v4651, %v4683
        %v4692 = vadd.f32 %v4652, %v4684
        %v4693 = vadd.f32 %v4653, %v4685
        %v4694 = vadd.f32 %v4654, %v4686
        %v4695 = vadd.f32 %v4655, %v4687
        %4697 = vset.pattern.permute.xlu0 0
        %4698 = vperm.xlu0 %4697, %v521
        %v4699 = vpop.permute.xlu0 %4698
        %v4701 = vadd.f32 %v4688, %v4699
        %v4702 = vadd.f32 %v4689, %v4699
        %v4703 = vadd.f32 %v4690, %v4699
        %v4704 = vadd.f32 %v4691, %v4699
        %v4705 = vadd.f32 %v4692, %v4699
        %v4706 = vadd.f32 %v4693, %v4699
        %v4707 = vadd.f32 %v4694, %v4699
        %v4708 = vadd.f32 %v4695, %v4699
        %v4709 = vlaneseq
        %v4710 = vshrl.u32 %v4709, 7
        %v4711 = vsub.s32 0, %v4710
        %v4712 = vrot.slane %v4701, %v4711
        %v4713 = vlaneseq
        %v4714 = vshrl.u32 %v4713, 7
        %v4715 = vsub.s32 0, %v4714
        %v4716 = vrot.slane %v4702, %v4715
        %v4717 = vlaneseq
        %v4718 = vshrl.u32 %v4717, 7
        %v4719 = vsub.s32 0, %v4718
        %v4720 = vrot.slane %v4703, %v4719
        %v4721 = vlaneseq
        %v4722 = vshrl.u32 %v4721, 7
        %v4723 = vsub.s32 0, %v4722
        %v4724 = vrot.slane %v4704, %v4723
        %v4725 = vlaneseq
        %v4726 = vshrl.u32 %v4725, 7
        %v4727 = vsub.s32 0, %v4726
        %v4728 = vrot.slane %v4705, %v4727
        %v4729 = vlaneseq
        %v4730 = vshrl.u32 %v4729, 7
        %v4731 = vsub.s32 0, %v4730
        %v4732 = vrot.slane %v4706, %v4731
        %v4733 = vlaneseq
        %v4734 = vshrl.u32 %v4733, 7
        %v4735 = vsub.s32 0, %v4734
        %v4736 = vrot.slane %v4707, %v4735
        %v4737 = vlaneseq
        %v4738 = vshrl.u32 %v4737, 7
        %v4739 = vsub.s32 0, %v4738
        %v4740 = vrot.slane %v4708, %v4739
        %v4741 = vadd.f32 %v4712, %v3735
        %v4742 = vadd.f32 %v4716, %v3736
        %v4743 = vadd.f32 %v4720, %v3737
        %v4744 = vadd.f32 %v4724, %v3738
        %v4745 = vadd.f32 %v4728, %v3739
        %v4746 = vadd.f32 %v4732, %v3740
        %v4747 = vadd.f32 %v4736, %v3741
        %v4748 = vadd.f32 %v4740, %v3742
        %v4749 = vmax.f32 %v4741, 0.0
        %v4750 = vmax.f32 %v4742, 0.0
        %v4751 = vmax.f32 %v4743, 0.0
        %v4752 = vmax.f32 %v4744, 0.0
        %v4753 = vmax.f32 %v4745, 0.0
        %v4754 = vmax.f32 %v4746, 0.0
        %v4755 = vmax.f32 %v4747, 0.0
        %v4756 = vmax.f32 %v4748, 0.0
        %v4757 = vld [vmem:[%s5] sm:$0x3]
        %v4759 = vsel %vm1208, %v4757, 0
        %v4762 = vsel %vm1218, %v4749, 0
        %v4765 = vsel %vm1218, %v4750, 0
        %v4768 = vsel %vm1218, %v4751, 0
        %v4771 = vsel %vm1218, %v4752, 0
        %v4774 = vsel %vm1218, %v4753, 0
        %v4777 = vsel %vm1218, %v4754, 0
        %v4780 = vsel %vm1218, %v4755, 0
        %v4783 = vsel %vm1218, %v4756, 0
        %4785 = vmatprep.subr.mxu0 %v4765
        %4786 = vmatpush1.msra.mxu0 %v4762
        %4787 = vmatprep.subr.mxu0 0.0
        %4788 = vmatpush1.msra.mxu0 0.0
        %4789 = vmatprep.subr.mxu0 0.0
        %4790 = vmatpush1.msra.mxu0 0.0
        %4791 = vmatprep.subr.mxu0 0.0
        %4792 = vmatpush1.msra.mxu0 0.0
        %4793 = vmatprep.subr.mxu0 0.0
        %4794 = vmatpush1.msra.mxu0 0.0
        %4795 = vmatprep.subr.mxu0 0.0
        %4796 = vmatpush1.msra.mxu0 0.0
        %4797 = vmatprep.subr.mxu0 0.0
        %4798 = vmatpush1.msra.mxu0 0.0
        %4799 = vmatprep.subr.mxu0 0.0
        %4800 = vmatpush1.msra.mxu0 0.0
        %4801 = vmatprep.subr.mxu0 0.0
        %4802 = vmatpush1.msra.mxu0 0.0
        %4803 = vmatprep.subr.mxu0 0.0
        %4804 = vmatpush1.msra.mxu0 0.0
        %4805 = vmatprep.subr.mxu0 0.0
        %4806 = vmatpush1.msra.mxu0 0.0
        %4807 = vmatprep.subr.mxu0 0.0
        %4808 = vmatpush1.msra.mxu0 0.0
        %4809 = vmatprep.subr.mxu0 0.0
        %4810 = vmatpush1.msra.mxu0 0.0
        %4811 = vmatprep.subr.mxu0 0.0
        %4812 = vmatpush1.msra.mxu0 0.0
        %4813 = vmatprep.subr.mxu0 0.0
        %4814 = vmatpush1.msra.mxu0 0.0
        %4815 = vmatprep.subr.mxu0 0.0
        %4816 = vmatpush1.msra.mxu0 0.0
        %4817 = vmatprep.subr.mxu0 0.0
        %4818 = vmatpush1.msra.mxu0 0.0
        %4819 = vmatprep.subr.mxu0 0.0
        %4820 = vmatpush1.msra.mxu0 0.0
        %4821 = vmatprep.subr.mxu0 0.0
        %4822 = vmatpush1.msra.mxu0 0.0
        %4823 = vmatprep.subr.mxu0 0.0
        %4824 = vmatpush1.msra.mxu0 0.0
        %4825 = vmatprep.subr.mxu0 0.0
        %4826 = vmatpush1.msra.mxu0 0.0
        %4827 = vmatprep.subr.mxu0 0.0
        %4828 = vmatpush1.msra.mxu0 0.0
        %4829 = vmatprep.subr.mxu0 0.0
        %4830 = vmatpush1.msra.mxu0 0.0
        %4831 = vmatprep.subr.mxu0 0.0
        %4832 = vmatpush1.msra.mxu0 0.0
        %4833 = vmatprep.subr.mxu0 0.0
        %4834 = vmatpush1.msra.mxu0 0.0
        %4835 = vmatprep.subr.mxu0 0.0
        %4836 = vmatpush1.msra.mxu0 0.0
        %4837 = vmatprep.subr.mxu0 0.0
        %4838 = vmatpush1.msra.mxu0 0.0
        %4839 = vmatprep.subr.mxu0 0.0
        %4840 = vmatpush1.msra.mxu0 0.0
        %4841 = vmatprep.subr.mxu0 0.0
        %4842 = vmatpush1.msra.mxu0 0.0
        %4843 = vmatprep.subr.mxu0 0.0
        %4844 = vmatpush1.msra.mxu0 0.0
        %4845 = vmatprep.subr.mxu0 0.0
        %4846 = vmatpush1.msra.mxu0 0.0
        %4847 = vmatprep.subr.mxu0 0.0
        %4848 = vmatpush1.msra.mxu0 0.0
        %4849 = vmatprep.mubr.f32.mxu0 0.0
        %4850 = vmatmul.mubr.f32.gmra.mrb[0].mxu0 %v4759
        %v4851 = vpop.f32.mrb[0].mxu0
        %v4852 = vadd.f32 0.0, %v4851
        %v4853 = vpop.f32.mrb[0].mxu0
        %v4854 = vadd.f32 0.0, %v4853
        %4855 = vdwg.mxu0
        %4856 = vmatprep.subr.mxu0 %v4771
        %4857 = vmatpush1.msra.mxu0 %v4768
        %4858 = vmatprep.subr.mxu0 0.0
        %4859 = vmatpush1.msra.mxu0 0.0
        %4860 = vmatprep.subr.mxu0 0.0
        %4861 = vmatpush1.msra.mxu0 0.0
        %4862 = vmatprep.subr.mxu0 0.0
        %4863 = vmatpush1.msra.mxu0 0.0
        %4864 = vmatprep.subr.mxu0 0.0
        %4865 = vmatpush1.msra.mxu0 0.0
        %4866 = vmatprep.subr.mxu0 0.0
        %4867 = vmatpush1.msra.mxu0 0.0
        %4868 = vmatprep.subr.mxu0 0.0
        %4869 = vmatpush1.msra.mxu0 0.0
        %4870 = vmatprep.subr.mxu0 0.0
        %4871 = vmatpush1.msra.mxu0 0.0
        %4872 = vmatprep.subr.mxu0 0.0
        %4873 = vmatpush1.msra.mxu0 0.0
        %4874 = vmatprep.subr.mxu0 0.0
        %4875 = vmatpush1.msra.mxu0 0.0
        %4876 = vmatprep.subr.mxu0 0.0
        %4877 = vmatpush1.msra.mxu0 0.0
        %4878 = vmatprep.subr.mxu0 0.0
        %4879 = vmatpush1.msra.mxu0 0.0
        %4880 = vmatprep.subr.mxu0 0.0
        %4881 = vmatpush1.msra.mxu0 0.0
        %4882 = vmatprep.subr.mxu0 0.0
        %4883 = vmatpush1.msra.mxu0 0.0
        %4884 = vmatprep.subr.mxu0 0.0
        %4885 = vmatpush1.msra.mxu0 0.0
        %4886 = vmatprep.subr.mxu0 0.0
        %4887 = vmatpush1.msra.mxu0 0.0
        %4888 = vmatprep.subr.mxu0 0.0
        %4889 = vmatpush1.msra.mxu0 0.0
        %4890 = vmatprep.subr.mxu0 0.0
        %4891 = vmatpush1.msra.mxu0 0.0
        %4892 = vmatprep.subr.mxu0 0.0
        %4893 = vmatpush1.msra.mxu0 0.0
        %4894 = vmatprep.subr.mxu0 0.0
        %4895 = vmatpush1.msra.mxu0 0.0
        %4896 = vmatprep.subr.mxu0 0.0
        %4897 = vmatpush1.msra.mxu0 0.0
        %4898 = vmatprep.subr.mxu0 0.0
        %4899 = vmatpush1.msra.mxu0 0.0
        %4900 = vmatprep.subr.mxu0 0.0
        %4901 = vmatpush1.msra.mxu0 0.0
        %4902 = vmatprep.subr.mxu0 0.0
        %4903 = vmatpush1.msra.mxu0 0.0
        %4904 = vmatprep.subr.mxu0 0.0
        %4905 = vmatpush1.msra.mxu0 0.0
        %4906 = vmatprep.subr.mxu0 0.0
        %4907 = vmatpush1.msra.mxu0 0.0
        %4908 = vmatprep.subr.mxu0 0.0
        %4909 = vmatpush1.msra.mxu0 0.0
        %4910 = vmatprep.subr.mxu0 0.0
        %4911 = vmatpush1.msra.mxu0 0.0
        %4912 = vmatprep.subr.mxu0 0.0
        %4913 = vmatpush1.msra.mxu0 0.0
        %4914 = vmatprep.subr.mxu0 0.0
        %4915 = vmatpush1.msra.mxu0 0.0
        %4916 = vmatprep.subr.mxu0 0.0
        %4917 = vmatpush1.msra.mxu0 0.0
        %4918 = vmatprep.subr.mxu0 0.0
        %4919 = vmatpush1.msra.mxu0 0.0
        %4920 = vmatprep.mubr.f32.mxu0 0.0
        %4921 = vmatmul.mubr.f32.gmra.mrb[0].mxu0 %v4759
        %v4922 = vpop.f32.mrb[0].mxu0
        %v4923 = vadd.f32 0.0, %v4922
        %v4924 = vpop.f32.mrb[0].mxu0
        %v4925 = vadd.f32 0.0, %v4924
        %4926 = vdwg.mxu0
        %4927 = vmatprep.subr.mxu0 %v4777
        %4928 = vmatpush1.msra.mxu0 %v4774
        %4929 = vmatprep.subr.mxu0 0.0
        %4930 = vmatpush1.msra.mxu0 0.0
        %4931 = vmatprep.subr.mxu0 0.0
        %4932 = vmatpush1.msra.mxu0 0.0
        %4933 = vmatprep.subr.mxu0 0.0
        %4934 = vmatpush1.msra.mxu0 0.0
        %4935 = vmatprep.subr.mxu0 0.0
        %4936 = vmatpush1.msra.mxu0 0.0
        %4937 = vmatprep.subr.mxu0 0.0
        %4938 = vmatpush1.msra.mxu0 0.0
        %4939 = vmatprep.subr.mxu0 0.0
        %4940 = vmatpush1.msra.mxu0 0.0
        %4941 = vmatprep.subr.mxu0 0.0
        %4942 = vmatpush1.msra.mxu0 0.0
        %4943 = vmatprep.subr.mxu0 0.0
        %4944 = vmatpush1.msra.mxu0 0.0
        %4945 = vmatprep.subr.mxu0 0.0
        %4946 = vmatpush1.msra.mxu0 0.0
        %4947 = vmatprep.subr.mxu0 0.0
        %4948 = vmatpush1.msra.mxu0 0.0
        %4949 = vmatprep.subr.mxu0 0.0
        %4950 = vmatpush1.msra.mxu0 0.0
        %4951 = vmatprep.subr.mxu0 0.0
        %4952 = vmatpush1.msra.mxu0 0.0
        %4953 = vmatprep.subr.mxu0 0.0
        %4954 = vmatpush1.msra.mxu0 0.0
        %4955 = vmatprep.subr.mxu0 0.0
        %4956 = vmatpush1.msra.mxu0 0.0
        %4957 = vmatprep.subr.mxu0 0.0
        %4958 = vmatpush1.msra.mxu0 0.0
        %4959 = vmatprep.subr.mxu0 0.0
        %4960 = vmatpush1.msra.mxu0 0.0
        %4961 = vmatprep.subr.mxu0 0.0
        %4962 = vmatpush1.msra.mxu0 0.0
        %4963 = vmatprep.subr.mxu0 0.0
        %4964 = vmatpush1.msra.mxu0 0.0
        %4965 = vmatprep.subr.mxu0 0.0
        %4966 = vmatpush1.msra.mxu0 0.0
        %4967 = vmatprep.subr.mxu0 0.0
        %4968 = vmatpush1.msra.mxu0 0.0
        %4969 = vmatprep.subr.mxu0 0.0
        %4970 = vmatpush1.msra.mxu0 0.0
        %4971 = vmatprep.subr.mxu0 0.0
        %4972 = vmatpush1.msra.mxu0 0.0
        %4973 = vmatprep.subr.mxu0 0.0
        %4974 = vmatpush1.msra.mxu0 0.0
        %4975 = vmatprep.subr.mxu0 0.0
        %4976 = vmatpush1.msra.mxu0 0.0
        %4977 = vmatprep.subr.mxu0 0.0
        %4978 = vmatpush1.msra.mxu0 0.0
        %4979 = vmatprep.subr.mxu0 0.0
        %4980 = vmatpush1.msra.mxu0 0.0
        %4981 = vmatprep.subr.mxu0 0.0
        %4982 = vmatpush1.msra.mxu0 0.0
        %4983 = vmatprep.subr.mxu0 0.0
        %4984 = vmatpush1.msra.mxu0 0.0
        %4985 = vmatprep.subr.mxu0 0.0
        %4986 = vmatpush1.msra.mxu0 0.0
        %4987 = vmatprep.subr.mxu0 0.0
        %4988 = vmatpush1.msra.mxu0 0.0
        %4989 = vmatprep.subr.mxu0 0.0
        %4990 = vmatpush1.msra.mxu0 0.0
        %4991 = vmatprep.mubr.f32.mxu0 0.0
        %4992 = vmatmul.mubr.f32.gmra.mrb[0].mxu0 %v4759
        %v4993 = vpop.f32.mrb[0].mxu0
        %v4994 = vadd.f32 0.0, %v4993
        %v4995 = vpop.f32.mrb[0].mxu0
        %v4996 = vadd.f32 0.0, %v4995
        %4997 = vdwg.mxu0
        %4998 = vmatprep.subr.mxu0 %v4783
        %4999 = vmatpush1.msra.mxu0 %v4780
        %5000 = vmatprep.subr.mxu0 0.0
        %5001 = vmatpush1.msra.mxu0 0.0
        %5002 = vmatprep.subr.mxu0 0.0
        %5003 = vmatpush1.msra.mxu0 0.0
        %5004 = vmatprep.subr.mxu0 0.0
        %5005 = vmatpush1.msra.mxu0 0.0
        %5006 = vmatprep.subr.mxu0 0.0
        %5007 = vmatpush1.msra.mxu0 0.0
        %5008 = vmatprep.subr.mxu0 0.0
        %5009 = vmatpush1.msra.mxu0 0.0
        %5010 = vmatprep.subr.mxu0 0.0
        %5011 = vmatpush1.msra.mxu0 0.0
        %5012 = vmatprep.subr.mxu0 0.0
        %5013 = vmatpush1.msra.mxu0 0.0
        %5014 = vmatprep.subr.mxu0 0.0
        %5015 = vmatpush1.msra.mxu0 0.0
        %5016 = vmatprep.subr.mxu0 0.0
        %5017 = vmatpush1.msra.mxu0 0.0
        %5018 = vmatprep.subr.mxu0 0.0
        %5019 = vmatpush1.msra.mxu0 0.0
        %5020 = vmatprep.subr.mxu0 0.0
        %5021 = vmatpush1.msra.mxu0 0.0
        %5022 = vmatprep.subr.mxu0 0.0
        %5023 = vmatpush1.msra.mxu0 0.0
        %5024 = vmatprep.subr.mxu0 0.0
        %5025 = vmatpush1.msra.mxu0 0.0
        %5026 = vmatprep.subr.mxu0 0.0
        %5027 = vmatpush1.msra.mxu0 0.0
        %5028 = vmatprep.subr.mxu0 0.0
        %5029 = vmatpush1.msra.mxu0 0.0
        %5030 = vmatprep.subr.mxu0 0.0
        %5031 = vmatpush1.msra.mxu0 0.0
        %5032 = vmatprep.subr.mxu0 0.0
        %5033 = vmatpush1.msra.mxu0 0.0
        %5034 = vmatprep.subr.mxu0 0.0
        %5035 = vmatpush1.msra.mxu0 0.0
        %5036 = vmatprep.subr.mxu0 0.0
        %5037 = vmatpush1.msra.mxu0 0.0
        %5038 = vmatprep.subr.mxu0 0.0
        %5039 = vmatpush1.msra.mxu0 0.0
        %5040 = vmatprep.subr.mxu0 0.0
        %5041 = vmatpush1.msra.mxu0 0.0
        %5042 = vmatprep.subr.mxu0 0.0
        %5043 = vmatpush1.msra.mxu0 0.0
        %5044 = vmatprep.subr.mxu0 0.0
        %5045 = vmatpush1.msra.mxu0 0.0
        %5046 = vmatprep.subr.mxu0 0.0
        %5047 = vmatpush1.msra.mxu0 0.0
        %5048 = vmatprep.subr.mxu0 0.0
        %5049 = vmatpush1.msra.mxu0 0.0
        %5050 = vmatprep.subr.mxu0 0.0
        %5051 = vmatpush1.msra.mxu0 0.0
        %5052 = vmatprep.subr.mxu0 0.0
        %5053 = vmatpush1.msra.mxu0 0.0
        %5054 = vmatprep.subr.mxu0 0.0
        %5055 = vmatpush1.msra.mxu0 0.0
        %5056 = vmatprep.subr.mxu0 0.0
        %5057 = vmatpush1.msra.mxu0 0.0
        %5058 = vmatprep.subr.mxu0 0.0
        %5059 = vmatpush1.msra.mxu0 0.0
        %5060 = vmatprep.subr.mxu0 0.0
        %5061 = vmatpush1.msra.mxu0 0.0
        %5062 = vmatprep.mubr.f32.mxu0 0.0
        %5063 = vmatmul.mubr.f32.gmra.mrb[0].mxu0 %v4759
        %v5064 = vpop.f32.mrb[0].mxu0
        %v5065 = vadd.f32 0.0, %v5064
        %v5066 = vpop.f32.mrb[0].mxu0
        %v5067 = vadd.f32 0.0, %v5066
        %5068 = vdwg.mxu0
        %5069 = vrot.lane.b32.xlu0 %v4852, 127
        %v5070 = vpop.permute.xlu0 %5069
        %5071 = vrot.lane.b32.xlu0 %v4854, 127
        %v5072 = vpop.permute.xlu0 %5071
        %5073 = vrot.lane.b32.xlu0 %v4923, 127
        %v5074 = vpop.permute.xlu0 %5073
        %5075 = vrot.lane.b32.xlu0 %v4925, 127
        %v5076 = vpop.permute.xlu0 %5075
        %5077 = vrot.lane.b32.xlu0 %v4994, 127
        %v5078 = vpop.permute.xlu0 %5077
        %5079 = vrot.lane.b32.xlu0 %v4996, 127
        %v5080 = vpop.permute.xlu0 %5079
        %5081 = vrot.lane.b32.xlu0 %v5065, 127
        %v5082 = vpop.permute.xlu0 %5081
        %5083 = vrot.lane.b32.xlu0 %v5067, 127
        %v5084 = vpop.permute.xlu0 %5083
        %v5085 = vsel %vm1106, %v5082, %v5084
        %v5086 = vsel %vm1106, %v5080, %v5082
        %v5087 = vsel %vm1106, %v5078, %v5080
        %v5088 = vsel %vm1106, %v5076, %v5078
        %v5089 = vsel %vm1106, %v5074, %v5076
        %v5090 = vsel %vm1106, %v5072, %v5074
        %v5091 = vsel %vm1106, %v5070, %v5072
        %v5092 = vsel %vm1106, %v5084, %v5070
        %v5093 = vadd.f32 %v4852, %v5091
        %v5094 = vadd.f32 %v4854, %v5090
        %v5095 = vadd.f32 %v4923, %v5089
        %v5096 = vadd.f32 %v4925, %v5088
        %v5097 = vadd.f32 %v4994, %v5087
        %v5098 = vadd.f32 %v4996, %v5086
        %v5099 = vadd.f32 %v5065, %v5085
        %v5100 = vadd.f32 %v5067, %v5092
        %5101 = vrot.lane.b32.xlu0 %v5093, 126
        %v5102 = vpop.permute.xlu0 %5101
        %5103 = vrot.lane.b32.xlu0 %v5094, 126
        %v5104 = vpop.permute.xlu0 %5103
        %5105 = vrot.lane.b32.xlu0 %v5095, 126
        %v5106 = vpop.permute.xlu0 %5105
        %5107 = vrot.lane.b32.xlu0 %v5096, 126
        %v5108 = vpop.permute.xlu0 %5107
        %5109 = vrot.lane.b32.xlu0 %v5097, 126
        %v5110 = vpop.permute.xlu0 %5109
        %5111 = vrot.lane.b32.xlu0 %v5098, 126
        %v5112 = vpop.permute.xlu0 %5111
        %5113 = vrot.lane.b32.xlu0 %v5099, 126
        %v5114 = vpop.permute.xlu0 %5113
        %5115 = vrot.lane.b32.xlu0 %v5100, 126
        %v5116 = vpop.permute.xlu0 %5115
        %v5117 = vsel %vm2157, %v5114, %v5116
        %v5118 = vsel %vm2157, %v5112, %v5114
        %v5119 = vsel %vm2157, %v5110, %v5112
        %v5120 = vsel %vm2157, %v5108, %v5110
        %v5121 = vsel %vm2157, %v5106, %v5108
        %v5122 = vsel %vm2157, %v5104, %v5106
        %v5123 = vsel %vm2157, %v5102, %v5104
        %v5124 = vsel %vm2157, %v5116, %v5102
        %v5125 = vadd.f32 %v5093, %v5123
        %v5126 = vadd.f32 %v5094, %v5122
        %v5127 = vadd.f32 %v5095, %v5121
        %v5128 = vadd.f32 %v5096, %v5120
        %v5129 = vadd.f32 %v5097, %v5119
        %v5130 = vadd.f32 %v5098, %v5118
        %v5131 = vadd.f32 %v5099, %v5117
        %v5132 = vadd.f32 %v5100, %v5124
        %5133 = vrot.lane.b32.xlu0 %v5125, 124
        %v5134 = vpop.permute.xlu0 %5133
        %5135 = vrot.lane.b32.xlu0 %v5126, 124
        %v5136 = vpop.permute.xlu0 %5135
        %5137 = vrot.lane.b32.xlu0 %v5127, 124
        %v5138 = vpop.permute.xlu0 %5137
        %5139 = vrot.lane.b32.xlu0 %v5128, 124
        %v5140 = vpop.permute.xlu0 %5139
        %5141 = vrot.lane.b32.xlu0 %v5129, 124
        %v5142 = vpop.permute.xlu0 %5141
        %5143 = vrot.lane.b32.xlu0 %v5130, 124
        %v5144 = vpop.permute.xlu0 %5143
        %5145 = vrot.lane.b32.xlu0 %v5131, 124
        %v5146 = vpop.permute.xlu0 %5145
        %5147 = vrot.lane.b32.xlu0 %v5132, 124
        %v5148 = vpop.permute.xlu0 %5147
        %v5149 = vsel %vm3171, %v5146, %v5148
        %v5150 = vsel %vm3171, %v5144, %v5146
        %v5151 = vsel %vm3171, %v5142, %v5144
        %v5152 = vsel %vm3171, %v5140, %v5142
        %v5153 = vsel %vm3171, %v5138, %v5140
        %v5154 = vsel %vm3171, %v5136, %v5138
        %v5155 = vsel %vm3171, %v5134, %v5136
        %v5156 = vsel %vm3171, %v5148, %v5134
        %v5157 = vadd.f32 %v5125, %v5155
        %v5158 = vadd.f32 %v5126, %v5154
        %v5159 = vadd.f32 %v5127, %v5153
        %v5160 = vadd.f32 %v5128, %v5152
        %v5161 = vadd.f32 %v5129, %v5151
        %v5162 = vadd.f32 %v5130, %v5150
        %v5163 = vadd.f32 %v5131, %v5149
        %v5164 = vadd.f32 %v5132, %v5156
        %5165 = vrot.lane.b32.xlu0 %v5157, 120
        %v5166 = vpop.permute.xlu0 %5165
        %5167 = vrot.lane.b32.xlu0 %v5158, 120
        %v5168 = vpop.permute.xlu0 %5167
        %5169 = vrot.lane.b32.xlu0 %v5159, 120
        %v5170 = vpop.permute.xlu0 %5169
        %5171 = vrot.lane.b32.xlu0 %v5160, 120
        %v5172 = vpop.permute.xlu0 %5171
        %5173 = vrot.lane.b32.xlu0 %v5161, 120
        %v5174 = vpop.permute.xlu0 %5173
        %5175 = vrot.lane.b32.xlu0 %v5162, 120
        %v5176 = vpop.permute.xlu0 %5175
        %5177 = vrot.lane.b32.xlu0 %v5163, 120
        %v5178 = vpop.permute.xlu0 %5177
        %5179 = vrot.lane.b32.xlu0 %v5164, 120
        %v5180 = vpop.permute.xlu0 %5179
        %v5181 = vsel %vm4185, %v5178, %v5180
        %v5182 = vsel %vm4185, %v5176, %v5178
        %v5183 = vsel %vm4185, %v5174, %v5176
        %v5184 = vsel %vm4185, %v5172, %v5174
        %v5185 = vsel %vm4185, %v5170, %v5172
        %v5186 = vsel %vm4185, %v5168, %v5170
        %v5187 = vsel %vm4185, %v5166, %v5168
        %v5188 = vsel %vm4185, %v5180, %v5166
        %v5189 = vadd.f32 %v5157, %v5187
        %v5190 = vadd.f32 %v5158, %v5186
        %v5191 = vadd.f32 %v5159, %v5185
        %v5192 = vadd.f32 %v5160, %v5184
        %v5193 = vadd.f32 %v5161, %v5183
        %v5194 = vadd.f32 %v5162, %v5182
        %v5195 = vadd.f32 %v5163, %v5181
        %v5196 = vadd.f32 %v5164, %v5188
        %v5197 = vmul.f32 %v5189, 0.0625
        %v5198 = vmul.f32 %v5190, 0.0625
        %v5199 = vmul.f32 %v5191, 0.0625
        %v5200 = vmul.f32 %v5192, 0.0625
        %v5201 = vmul.f32 %v5193, 0.0625
        %v5202 = vmul.f32 %v5194, 0.0625
        %v5203 = vmul.f32 %v5195, 0.0625
        %v5204 = vmul.f32 %v5196, 0.0625
        %5206 = vset.pattern.permute.xlu0 0
        %5207 = vperm.xlu0 %5206, %v522
        %v5208 = vpop.permute.xlu0 %5207
        %v5210 = vadd.f32 %v5197, %v5208
        %v5211 = vadd.f32 %v5198, %v5208
        %v5212 = vadd.f32 %v5199, %v5208
        %v5213 = vadd.f32 %v5200, %v5208
        %v5214 = vadd.f32 %v5201, %v5208
        %v5215 = vadd.f32 %v5202, %v5208
        %v5216 = vadd.f32 %v5203, %v5208
        %v5217 = vadd.f32 %v5204, %v5208
        %v5226 = vcombine.low %v5210, %v5211
        %v5227 = vcombine.low %v5212, %v5213
        %v5229 = vunpack.c.l.s4 1983009808
        %v5230 = vunpack.c.0.s8 %v5229
        %v5231 = vlaneseq
        %v5232 = vshrl.u32 %v5231, 7
        %v5233 = vsub.s32 %v5230, %v5232
        %v5234 = vrot.slane %v5226, %v5233
        %v5236 = vunpack.c.l.s4 1983009808
        %v5237 = vunpack.c.0.s8 %v5236
        %v5238 = vlaneseq
        %v5239 = vshrl.u32 %v5238, 7
        %v5240 = vsub.s32 %v5237, %v5239
        %v5241 = vrot.slane %v5227, %v5240
        %v5242 = vcombine.low %v5234, %v5241
        %v5243 = vcombine.low %v5214, %v5215
        %v5244 = vcombine.low %v5216, %v5217
        %v5246 = vunpack.c.l.s4 1983009808
        %v5247 = vunpack.c.0.s8 %v5246
        %v5248 = vlaneseq
        %v5249 = vshrl.u32 %v5248, 7
        %v5250 = vsub.s32 %v5247, %v5249
        %v5251 = vrot.slane %v5243, %v5250
        %v5253 = vunpack.c.l.s4 1983009808
        %v5254 = vunpack.c.0.s8 %v5253
        %v5255 = vlaneseq
        %v5256 = vshrl.u32 %v5255, 7
        %v5257 = vsub.s32 %v5254, %v5256
        %v5258 = vrot.slane %v5244, %v5257
        %v5259 = vcombine.low %v5251, %v5258
        %5262 = vst [vmem:[%s318] sm:$0xff] %v5242
        %5263 = vst [vmem:[%s318 + $0x8] sm:$0xff] %v5259
        %s5264 = smul.u32 8, %s17
        %p5265 = scmp.lt.s32.totalorder %s5264, 31
        %s5266 = scalar_select %p5265, %s5264, 31
        %s5267 = smul.addr %s5266, 2
        %s5268 = scalar_lea.vmem %s6, %s5267
        // Predicated region
        $region68: #{tcn_forward.1} parent=62 // pred_check
          %p5269 = pneg %p166
        $region69: #{tcn_forward.1} parent=62 // pred_check_branch
          %5271 = sbr.rel (%p5269) target = $region71
        $region70: #{tcn_forward.1} parent=62 // pred_region
          %s5272 = smul.u32 8, %s17
        $region71: #{tcn_forward.1} parent=62 // pred_fallthru
          _
      $region63: #{tcn_forward.1} parent=5 // pred_fallthru
        _
      %p5273 = scmp.le.s32.totalorder 2, %s12
      // Predicated region
      $region72: #{tcn_forward.1} parent=5 // pred_check
        %p5274 = pneg %p5273
      $region73: #{tcn_forward.1} parent=5 // pred_check_branch
        %5276 = sbr.rel (%p5274) target = $region75
      $region74: #{tcn_forward.1} parent=5 // pred_region
        %s5277 = ssub.s32 %s12, 2
        // Predicated region
        $region76: #{tcn_forward.1} parent=74 // pred_check
          %p5278 = pneg %p172
        $region77: #{tcn_forward.1} parent=74 // pred_check_branch
          %5280 = sbr.rel (%p5278) target = $region79
        $region78: #{tcn_forward.1} parent=74 // pred_region
          %s5281 = smul.u32 8, %s18
          %p5282 = scmp.lt.s32.totalorder %s5281, 31
          %s5283 = scalar_select %p5282, %s5281, 31
          %s5284 = smul.addr %s5283, 2
          %s5285 = scalar_lea.vmem %s6, %s5284
        $region79: #{tcn_forward.1} parent=74 // pred_fallthru
          _
      $region75: #{tcn_forward.1} parent=5 // pred_fallthru
        _
    $region6: #{tcn_forward.1} parent=1 // loop_footer
      %s16 = sadd.s32 1, %s12
    $region7: #{tcn_forward.1} parent=1 // loop_footer_branch
      %11 = sbr.rel target = $region3
    $region8: #{tcn_forward.1} parent=1 // loop_exit
      _

</llo_original>
